<compile_context>
chip_gen: v7x
topology: tpu7x:2x2x1
jax: 0.10.0
libtpu: 0.0.40
codegen_flags: <defaults>
</compile_context>

<pallas_src>
import jax
import jax.numpy as jnp
from jax.experimental import pallas as pl
from jax.experimental.pallas import tpu as pltpu

KS = 3      # kernel size (3x3, stride 1, padding 1)
LANE = 128  # TPU lane width


def _round_up(x, m):
    return ((x + m - 1) // m) * m


def _conv_bn_relu_kernel(x_mid_ref, x_top_ref, x_bot_ref, w_ref, b_ref, o_ref):
    """One (image, Cout-tile, row-band) grid step.

    x_mid_ref : (1, TH, W, Cin)   bf16 row band (no spatial padding in HBM)
    x_top_ref : (1, 1, W, Cin)    bf16 row above the band (clamped at the edge)
    x_bot_ref : (1, 1, W, Cin)    bf16 row below the band (clamped at the edge)
    w_ref     : (3, 3*Cin, TC)    bf16 BN-folded weights, [ky, kx*Cin + ci, co]
    b_ref     : (1, TC)           f32 folded bias
    o_ref     : (1, TH, W, TC)    bf16 output band
    """
    TH, W, TC = o_ref.shape[1], o_ref.shape[2], o_ref.shape[3]
    Cin = x_mid_ref.shape[3]
    HW = TH * W

    i = pl.program_id(2)             # row-band id (innermost grid axis)
    nh = pl.num_programs(2)

    mid = x_mid_ref[0]                                   # (TH, W, Cin)
    top = x_top_ref[0, 0]                                # (W, Cin)
    bot = x_bot_ref[0, 0]                                # (W, Cin)
    # padding=1 semantics: zero the halo rows at the image boundary.
    top = jnp.where(i == 0, jnp.zeros_like(top), top)
    bot = jnp.where(i == nh - 1, jnp.zeros_like(bot), bot)
    rows = jnp.concatenate([top[None], mid, bot[None]], axis=0)   # (TH+2, W, Cin)

    # Fold the 3 kx shifts into the contraction dim: ((TH+2)*W, 3*Cin) slab,
    # zeroed at the left/right image edges.  Consumed directly by the MXU;
    # the ky shift is a (sublane-aligned when W%8==0) row offset of ky*W.
    zcol = jnp.zeros((TH + 2, 1, Cin), rows.dtype)
    left = jnp.concatenate([zcol, rows[:, :W - 1, :]], axis=1)    # kx = 0
    right = jnp.concatenate([rows[:, 1:, :], zcol], axis=1)       # kx = 2
    slab = jnp.concatenate([left, rows, right], axis=-1)          # (TH+2, W, 3*Cin)
    slab = slab.reshape((TH + 2) * W, KS * Cin)

    # 3 MXU matmuls (one per ky), K = 3*Cin, N = TC; accumulate in f32 and
    # fuse bias + ReLU into the single lane-dense store (no acc scratch).
    acc = jnp.dot(slab[0:HW], w_ref[0], preferred_element_type=jnp.float32)
    acc = acc + jnp.dot(slab[W:W + HW], w_ref[1],
                        preferred_element_type=jnp.float32)
    acc = acc + jnp.dot(slab[2 * W:2 * W + HW], w_ref[2],
                        preferred_element_type=jnp.float32)

    y = jnp.maximum(acc + b_ref[...], 0.0)
    o_ref[0] = y.reshape(TH, W, TC).astype(o_ref.dtype)


def _step_vmem_bytes(TH, W, Cin, TC):
    """Rough per-grid-step VMEM footprint (double-buffered blocks + slab + acc)."""
    band = TH * W * Cin * 2
    halo = 2 * W * Cin * 2
    wgt = KS * KS * Cin * TC * 2
    out = TH * W * TC * 2
    slab = (TH + 2) * W * KS * Cin * 2
    acc = TH * W * TC * 4
    return 2 * (band + halo + wgt + out) + slab + acc


def _default_vmem_limit():
    # Half of physical VMEM: 64 MiB scoped on v5e/v6e (128 MiB chips),
    # 32 MiB on v7x (64 MiB chips).
    try:
        cap = pltpu.get_tpu_info().vmem_capacity_bytes
    except Exception:
        cap = 64 * 1024 * 1024
    return max(32 * 1024 * 1024, cap // 2)


def conv_bn_relu(x_nhwc, wk, bias, *, max_tile_h=64, vmem_limit_bytes=None):
    """x_nhwc: (N, H, W, Cin) bf16.  wk: (3, 3*Cin, Cout_pad) bf16 BN-folded.
    bias: (1, Cout_pad) f32 folded bias.  Returns (N, H, W, Cout_pad) bf16."""
    x_nhwc = x_nhwc.astype(jnp.bfloat16)
    N, H, W, Cin = x_nhwc.shape
    K3, cout_p = wk.shape[1], wk.shape[2]
    assert K3 == KS * Cin and cout_p % LANE == 0

    if vmem_limit_bytes is None:
        vmem_limit_bytes = _default_vmem_limit()
    budget = int(0.75 * vmem_limit_bytes)

    # Cout tiling: untiled when small (weights fully resident, one DMA per
    # layer); 256-wide tiles for deep layers (matches 2x256^2 MXU); else 128.
    if cout_p <= 256:
        TC = cout_p
    elif cout_p % 256 == 0:
        TC = 256
    else:
        TC = LANE

    # Row-band height: biggest divisor of H (<= max_tile_h) fitting the VMEM
    # budget.  TODO(synk): a prime H degrades to TH=1 (correct, just small tiles).
    TH = 1
    for th in range(1, min(H, max_tile_h) + 1):
        if H % th == 0 and _step_vmem_bytes(th, W, Cin, TC) <= budget:
            TH = th

    nc, nh = cout_p // TC, H // TH

    return pl.pallas_call(
        _conv_bn_relu_kernel,
        out_shape=jax.ShapeDtypeStruct((N, H, W, cout_p), jnp.bfloat16),
        grid_spec=pltpu.PrefetchScalarGridSpec(
            num_scalar_prefetch=0,
            # Band axis innermost: the weight block index is constant along
            # it, so revisit-skip keeps the weight tile resident across bands.
            grid=(N, nc, nh),
            in_specs=[
                # main row band
                pl.BlockSpec((1, TH, W, Cin), lambda n, c, i: (n, i, 0, 0)),
                # 1-row halo above / below the band (clamped; zeroed in-kernel
                # at the image boundary)
                pl.BlockSpec((1, 1, W, Cin),
                             lambda n, c, i: (n, jnp.maximum(i * TH - 1, 0), 0, 0)),
                pl.BlockSpec((1, 1, W, Cin),
                             lambda n, c, i: (n, jnp.minimum(i * TH + TH, H - 1), 0, 0)),
                # BN-folded weights, tiled over Cout, resident across bands
                pl.BlockSpec((KS, K3, TC), lambda n, c, i: (0, 0, c)),
                # folded bias
                pl.BlockSpec((1, TC), lambda n, c, i: (0, c)),
            ],
            out_specs=pl.BlockSpec((1, TH, W, TC), lambda n, c, i: (n, i, 0, c)),
        ),
        compiler_params=pltpu.CompilerParams(
            dimension_semantics=("parallel", "parallel", "parallel"),
            vmem_limit_bytes=int(vmem_limit_bytes)),
    )(x_nhwc, x_nhwc, x_nhwc, wk, bias)


def init_unet_conv2_params(key, in_size, out_size, n=3, eps=1e-5):
    """Deterministic params for n (conv3x3 + BN + ReLU) layers.  BN scale is
    folded into the conv weights; weights are packed (ky, kx*Cin + ci, co)
    with only the output-channel dim padded to a LANE multiple."""
    params = []
    cin = in_size
    for _ in range(n):
        key, k_w, k_b, k_g, k_beta, k_m, k_v = jax.random.split(key, 7)
        w = 0.1 * jax.random.normal(k_w, (out_size, cin, KS, KS), jnp.float32)
        conv_b = 0.1 * jax.random.normal(k_b, (out_size,), jnp.float32)
        gamma = 1.0 + 0.1 * jax.random.normal(k_g, (out_size,), jnp.float32)
        beta = 0.1 * jax.random.normal(k_beta, (out_size,), jnp.float32)
        mean = 0.1 * jax.random.normal(k_m, (out_size,), jnp.float32)
        var = 1.0 + 0.1 * jax.random.uniform(k_v, (out_size,), jnp.float32)

        scale = gamma / jnp.sqrt(var + eps)
        w_fold = w * scale[:, None, None, None]          # BN scale folded into W
        bias = (conv_b - mean) * scale + beta            # folded bias

        cout_p = _round_up(out_size, LANE)
        wk = jnp.transpose(w_fold, (2, 3, 1, 0))         # (ky, kx, cin, cout)
        wk = jnp.pad(wk, ((0, 0), (0, 0), (0, 0), (0, cout_p - out_size)))
        wk = wk.reshape(KS, KS * cin, cout_p).astype(jnp.bfloat16)
        bias_p = jnp.pad(bias, (0, cout_p - out_size)).reshape(1, cout_p)

        params.append(dict(
            wk=wk, bias=bias_p, cout=out_size,
            # originals for the pure-JAX reference
            w_pt=w, b_pt=conv_b, gamma=gamma, beta=beta, mean=mean, var=var))
        cin = out_size
    return params


def unet_conv2_forward(x_nchw, params):
    """PyTorch-equivalent forward.  NCHW f32 in/out; internally NHWC bf16 with
    lane-dense (padded) conv outputs, stripped between layers."""
    x = jnp.transpose(x_nchw, (0, 2, 3, 1)).astype(jnp.bfloat16)   # NCHW -> NHWC
    for p in params:
        y = conv_bn_relu(x, p["wk"], p["bias"])          # (N, H, W, Cout_pad)
        x = y[..., :p["cout"]]                           # strip Cout padding
    return jnp.transpose(x.astype(jnp.float32), (0, 3, 1, 2))      # NHWC -> NCHW


def _reference_forward(x_nchw, params, eps=1e-5):
    """Pure-JAX f32 reference (lax conv, NCHW, unfolded BN) for correctness."""
    x = x_nchw
    for p in params:
        y = jax.lax.conv_general_dilated(
            x, p["w_pt"], window_strides=(1, 1), padding=((1, 1), (1, 1)),
            dimension_numbers=("NCHW", "OIHW", "NCHW"))
        y = y + p["b_pt"][None, :, None, None]
        scale = p["gamma"] / jnp.sqrt(p["var"] + eps)
        y = (y - p["mean"][None, :, None, None]) * scale[None, :, None, None] \
            + p["beta"][None, :, None, None]
        x = jnp.maximum(y, 0.0)
    return x


if __name__ == "__main__":
    key = jax.random.PRNGKey(0)
    k_x, k_p = jax.random.split(key)

    batch, in_size, out_size, H, W = 2, 4, 8, 16, 16
    x = jax.random.normal(k_x, (batch, in_size, H, W), jnp.float32)

    params = init_unet_conv2_params(k_p, in_size, out_size, n=3)

    fwd = jax.jit(lambda xx: unet_conv2_forward(xx, params))
    out = fwd(x)
    jax.block_until_ready(out)

    ref = _reference_forward(x, params)
    assert out.shape == (batch, out_size, H, W), out.shape
    # bf16 MXU operands with f32 accumulation -> loosened tolerance vs f32 ref.
    assert jnp.allclose(out, ref, atol=5e-2, rtol=5e-2), \
        float(jnp.max(jnp.abs(out - ref)))

    print("KERNEL_OK")
</pallas_src>

<mosaic_0001>
module attributes {stable_mosaic.version = 11 : i64} {
  func.func @_conv_bn_relu_kernel(%arg0: i32, %arg1: i32, %arg2: i32, %arg3: memref<1x16x16x4xbf16, #tpu.memory_space<vmem>>, %arg4: memref<1x1x16x4xbf16, #tpu.memory_space<vmem>>, %arg5: memref<1x1x16x4xbf16, #tpu.memory_space<vmem>>, %arg6: memref<3x12x128xbf16, #tpu.memory_space<vmem>>, %arg7: memref<1x128xf32, #tpu.memory_space<vmem>>, %arg8: memref<1x16x16x128xbf16, #tpu.memory_space<vmem>>) attributes {dimension_semantics = [#tpu.dimension_semantics<parallel>, #tpu.dimension_semantics<parallel>, #tpu.dimension_semantics<parallel>], iteration_bounds = array<i64: 2, 1, 1>, scalar_prefetch = 0 : i64, scratch_operands = 0 : i64, tpu.core_type = #tpu.core_type<tc>, window_params = [{transform_indices = @transform_0, window_bounds = array<i64: 1, 16, 16, 4>}, {transform_indices = @transform_1, window_bounds = array<i64: 1, 1, 16, 4>}, {transform_indices = @transform_2, window_bounds = array<i64: 1, 1, 16, 4>}, {transform_indices = @transform_3, window_bounds = array<i64: 3, 12, 128>}, {transform_indices = @transform_4, window_bounds = array<i64: 1, 128>}, {transform_indices = @transform_5, window_bounds = array<i64: 1, 16, 16, 128>}]} {
    %c0 = arith.constant 0 : index
    %c0_0 = arith.constant 0 : index
    %c0_1 = arith.constant 0 : index
    %c0_2 = arith.constant 0 : index
    %0 = vector.load %arg3[%c0, %c0_0, %c0_1, %c0_2] : memref<1x16x16x4xbf16, #tpu.memory_space<vmem>>, vector<1x16x16x4xbf16>
    %1 = vector.shape_cast %0 : vector<1x16x16x4xbf16> to vector<16x16x4xbf16>
    %c0_3 = arith.constant 0 : index
    %c0_4 = arith.constant 0 : index
    %c0_5 = arith.constant 0 : index
    %c0_6 = arith.constant 0 : index
    %2 = vector.load %arg4[%c0_3, %c0_4, %c0_5, %c0_6] : memref<1x1x16x4xbf16, #tpu.memory_space<vmem>>, vector<1x1x16x4xbf16>
    %3 = vector.shape_cast %2 : vector<1x1x16x4xbf16> to vector<16x4xbf16>
    %c0_7 = arith.constant 0 : index
    %c0_8 = arith.constant 0 : index
    %c0_9 = arith.constant 0 : index
    %c0_10 = arith.constant 0 : index
    %4 = vector.load %arg5[%c0_7, %c0_8, %c0_9, %c0_10] : memref<1x1x16x4xbf16, #tpu.memory_space<vmem>>, vector<1x1x16x4xbf16>
    %5 = vector.shape_cast %4 : vector<1x1x16x4xbf16> to vector<16x4xbf16>
    %c0_i32 = arith.constant 0 : i32
    %6 = arith.cmpi eq, %arg2, %c0_i32 : i32
    %cst = arith.constant 0.000000e+00 : bf16
    %7 = vector.broadcast %cst : bf16 to vector<16x4xbf16>
    %8 = arith.select %6, %7, %3 : vector<16x4xbf16>
    %c0_i32_11 = arith.constant 0 : i32
    %9 = arith.cmpi eq, %arg2, %c0_i32_11 : i32
    %cst_12 = arith.constant 0.000000e+00 : bf16
    %10 = vector.broadcast %cst_12 : bf16 to vector<16x4xbf16>
    %11 = arith.select %9, %10, %5 : vector<16x4xbf16>
    %12 = vector.shape_cast %8 : vector<16x4xbf16> to vector<1x16x4xbf16>
    %13 = vector.shape_cast %11 : vector<16x4xbf16> to vector<1x16x4xbf16>
    %14 = tpu.concatenate %12, %1, %13 in 0 : vector<1x16x4xbf16>, vector<16x16x4xbf16>, vector<1x16x4xbf16> -> vector<18x16x4xbf16>
    %cst_13 = arith.constant 0.000000e+00 : bf16
    %15 = vector.broadcast %cst_13 : bf16 to vector<18x1x4xbf16>
    %16 = vector.extract_strided_slice %14 {offsets = [0, 0, 0], sizes = [18, 15, 4], strides = [1, 1, 1]} : vector<18x16x4xbf16> to vector<18x15x4xbf16>
    %17 = tpu.concatenate %15, %16 in 1 : vector<18x1x4xbf16>, vector<18x15x4xbf16> -> vector<18x16x4xbf16>
    %18 = vector.extract_strided_slice %14 {offsets = [0, 1, 0], sizes = [18, 15, 4], strides = [1, 1, 1]} : vector<18x16x4xbf16> to vector<18x15x4xbf16>
    %19 = tpu.concatenate %18, %15 in 1 : vector<18x15x4xbf16>, vector<18x1x4xbf16> -> vector<18x16x4xbf16>
    %20 = tpu.concatenate %17, %14, %19 in 2 : vector<18x16x4xbf16>, vector<18x16x4xbf16>, vector<18x16x4xbf16> -> vector<18x16x12xbf16>
    %21 = vector.shape_cast %20 : vector<18x16x12xbf16> to vector<288x12xbf16>
    %22 = vector.extract_strided_slice %21 {offsets = [0, 0], sizes = [256, 12], strides = [1, 1]} : vector<288x12xbf16> to vector<256x12xbf16>
    %c0_14 = arith.constant 0 : index
    %c0_15 = arith.constant 0 : index
    %c0_16 = arith.constant 0 : index
    %23 = vector.load %arg6[%c0_14, %c0_15, %c0_16] : memref<3x12x128xbf16, #tpu.memory_space<vmem>>, vector<1x12x128xbf16>
    %24 = vector.shape_cast %23 : vector<1x12x128xbf16> to vector<12x128xbf16>
    %cst_17 = arith.constant dense<0.000000e+00> : vector<256x128xf32>
    %25 = tpu.matmul %22, %24, %cst_17 {dimension_numbers = #tpu.dot_dimension_numbers<[1], [0], [0], [1], [0, 0, 1, 1], [], []>} : vector<256x12xbf16>, vector<12x128xbf16>, vector<256x128xf32> -> vector<256x128xf32>
    %26 = vector.extract_strided_slice %21 {offsets = [16, 0], sizes = [256, 12], strides = [1, 1]} : vector<288x12xbf16> to vector<256x12xbf16>
    %c1 = arith.constant 1 : index
    %c0_18 = arith.constant 0 : index
    %c0_19 = arith.constant 0 : index
    %27 = vector.load %arg6[%c1, %c0_18, %c0_19] : memref<3x12x128xbf16, #tpu.memory_space<vmem>>, vector<1x12x128xbf16>
    %28 = vector.shape_cast %27 : vector<1x12x128xbf16> to vector<12x128xbf16>
    %cst_20 = arith.constant dense<0.000000e+00> : vector<256x128xf32>
    %29 = tpu.matmul %26, %28, %cst_20 {dimension_numbers = #tpu.dot_dimension_numbers<[1], [0], [0], [1], [0, 0, 1, 1], [], []>} : vector<256x12xbf16>, vector<12x128xbf16>, vector<256x128xf32> -> vector<256x128xf32>
    %30 = arith.addf %25, %29 : vector<256x128xf32>
    %31 = vector.extract_strided_slice %21 {offsets = [32, 0], sizes = [256, 12], strides = [1, 1]} : vector<288x12xbf16> to vector<256x12xbf16>
    %c2 = arith.constant 2 : index
    %c0_21 = arith.constant 0 : index
    %c0_22 = arith.constant 0 : index
    %32 = vector.load %arg6[%c2, %c0_21, %c0_22] : memref<3x12x128xbf16, #tpu.memory_space<vmem>>, vector<1x12x128xbf16>
    %33 = vector.shape_cast %32 : vector<1x12x128xbf16> to vector<12x128xbf16>
    %cst_23 = arith.constant dense<0.000000e+00> : vector<256x128xf32>
    %34 = tpu.matmul %31, %33, %cst_23 {dimension_numbers = #tpu.dot_dimension_numbers<[1], [0], [0], [1], [0, 0, 1, 1], [], []>} : vector<256x12xbf16>, vector<12x128xbf16>, vector<256x128xf32> -> vector<256x128xf32>
    %35 = arith.addf %30, %34 : vector<256x128xf32>
    %c0_24 = arith.constant 0 : index
    %c0_25 = arith.constant 0 : index
    %36 = vector.load %arg7[%c0_24, %c0_25] : memref<1x128xf32, #tpu.memory_space<vmem>>, vector<1x128xf32>
    %37 = vector.broadcast %36 : vector<1x128xf32> to vector<256x128xf32>
    %38 = arith.addf %35, %37 : vector<256x128xf32>
    %cst_26 = arith.constant 0.000000e+00 : f32
    %39 = vector.broadcast %cst_26 : f32 to vector<256x128xf32>
    %40 = arith.maximumf %38, %39 : vector<256x128xf32>
    %41 = vector.shape_cast %40 : vector<256x128xf32> to vector<16x16x128xf32>
    %42 = arith.truncf %41 : vector<16x16x128xf32> to vector<16x16x128xbf16>
    %c0_27 = arith.constant 0 : index
    %c0_28 = arith.constant 0 : index
    %c0_29 = arith.constant 0 : index
    %c0_30 = arith.constant 0 : index
    %43 = vector.load %arg8[%c0_27, %c0_28, %c0_29, %c0_30] : memref<1x16x16x128xbf16, #tpu.memory_space<vmem>>, vector<1x16x16x128xbf16>
    %44 = vector.shape_cast %43 : vector<1x16x16x128xbf16> to vector<16x16x128xbf16>
    %45 = vector.shape_cast %42 : vector<16x16x128xbf16> to vector<1x16x16x128xbf16>
    tpu.vector_store %arg8[%c0_27, %c0_28, %c0_29, %c0_30], %45 {strides = array<i32>} : memref<1x16x16x128xbf16, #tpu.memory_space<vmem>>, vector<1x16x16x128xbf16>,
    return
  }
  func.func @transform_0(%arg0: i32, %arg1: i32, %arg2: i32) -> (i32, i32, i32, i32) {
    %c0_i32 = arith.constant 0 : i32
    %c0_i32_0 = arith.constant 0 : i32
    %c0_i32_1 = arith.constant 0 : i32
    return %arg0, %arg2, %c0_i32, %c0_i32_0 : i32, i32, i32, i32
  }
  func.func @transform_1(%arg0: i32, %arg1: i32, %arg2: i32) -> (i32, i32, i32, i32) {
    %c16_i32 = arith.constant 16 : i32
    %0 = arith.muli %arg2, %c16_i32 : i32
    %c1_i32 = arith.constant 1 : i32
    %1 = arith.subi %0, %c1_i32 : i32
    %c0_i32 = arith.constant 0 : i32
    %2 = arith.maxsi %1, %c0_i32 : i32
    %c0_i32_0 = arith.constant 0 : i32
    %c0_i32_1 = arith.constant 0 : i32
    %c0_i32_2 = arith.constant 0 : i32
    return %arg0, %2, %c0_i32_0, %c0_i32_1 : i32, i32, i32, i32
  }
  func.func @transform_2(%arg0: i32, %arg1: i32, %arg2: i32) -> (i32, i32, i32, i32) {
    %c16_i32 = arith.constant 16 : i32
    %0 = arith.muli %arg2, %c16_i32 : i32
    %c16_i32_0 = arith.constant 16 : i32
    %1 = arith.addi %0, %c16_i32_0 : i32
    %c15_i32 = arith.constant 15 : i32
    %2 = arith.minsi %1, %c15_i32 : i32
    %c0_i32 = arith.constant 0 : i32
    %c0_i32_1 = arith.constant 0 : i32
    %c0_i32_2 = arith.constant 0 : i32
    return %arg0, %2, %c0_i32, %c0_i32_1 : i32, i32, i32, i32
  }
  func.func @transform_3(%arg0: i32, %arg1: i32, %arg2: i32) -> (i32, i32, i32) {
    %c0_i32 = arith.constant 0 : i32
    %c0_i32_0 = arith.constant 0 : i32
    %c0_i32_1 = arith.constant 0 : i32
    return %c0_i32, %c0_i32_0, %arg1 : i32, i32, i32
  }
  func.func @transform_4(%arg0: i32, %arg1: i32, %arg2: i32) -> (i32, i32) {
    %c0_i32 = arith.constant 0 : i32
    %c0_i32_0 = arith.constant 0 : i32
    return %c0_i32, %arg1 : i32, i32
  }
  func.func @transform_5(%arg0: i32, %arg1: i32, %arg2: i32) -> (i32, i32, i32, i32) {
    %c0_i32 = arith.constant 0 : i32
    %c0_i32_0 = arith.constant 0 : i32
    return %arg0, %arg2, %c0_i32, %arg1 : i32, i32, i32, i32
  }
}

module attributes {stable_mosaic.version = 11 : i64} {
  func.func @_conv_bn_relu_kernel(%arg0: i32, %arg1: i32, %arg2: i32, %arg3: memref<1x16x16x8xbf16, #tpu.memory_space<vmem>>, %arg4: memref<1x1x16x8xbf16, #tpu.memory_space<vmem>>, %arg5: memref<1x1x16x8xbf16, #tpu.memory_space<vmem>>, %arg6: memref<3x24x128xbf16, #tpu.memory_space<vmem>>, %arg7: memref<1x128xf32, #tpu.memory_space<vmem>>, %arg8: memref<1x16x16x128xbf16, #tpu.memory_space<vmem>>) attributes {dimension_semantics = [#tpu.dimension_semantics<parallel>, #tpu.dimension_semantics<parallel>, #tpu.dimension_semantics<parallel>], iteration_bounds = array<i64: 2, 1, 1>, scalar_prefetch = 0 : i64, scratch_operands = 0 : i64, tpu.core_type = #tpu.core_type<tc>, window_params = [{transform_indices = @transform_0, window_bounds = array<i64: 1, 16, 16, 8>}, {transform_indices = @transform_1, window_bounds = array<i64: 1, 1, 16, 8>}, {transform_indices = @transform_2, window_bounds = array<i64: 1, 1, 16, 8>}, {transform_indices = @transform_3, window_bounds = array<i64: 3, 24, 128>}, {transform_indices = @transform_4, window_bounds = array<i64: 1, 128>}, {transform_indices = @transform_5, window_bounds = array<i64: 1, 16, 16, 128>}]} {
    %c0 = arith.constant 0 : index
    %c0_0 = arith.constant 0 : index
    %c0_1 = arith.constant 0 : index
    %c0_2 = arith.constant 0 : index
    %0 = vector.load %arg3[%c0, %c0_0, %c0_1, %c0_2] : memref<1x16x16x8xbf16, #tpu.memory_space<vmem>>, vector<1x16x16x8xbf16>
    %1 = vector.shape_cast %0 : vector<1x16x16x8xbf16> to vector<16x16x8xbf16>
    %c0_3 = arith.constant 0 : index
    %c0_4 = arith.constant 0 : index
    %c0_5 = arith.constant 0 : index
    %c0_6 = arith.constant 0 : index
    %2 = vector.load %arg4[%c0_3, %c0_4, %c0_5, %c0_6] : memref<1x1x16x8xbf16, #tpu.memory_space<vmem>>, vector<1x1x16x8xbf16>
    %3 = vector.shape_cast %2 : vector<1x1x16x8xbf16> to vector<16x8xbf16>
    %c0_7 = arith.constant 0 : index
    %c0_8 = arith.constant 0 : index
    %c0_9 = arith.constant 0 : index
    %c0_10 = arith.constant 0 : index
    %4 = vector.load %arg5[%c0_7, %c0_8, %c0_9, %c0_10] : memref<1x1x16x8xbf16, #tpu.memory_space<vmem>>, vector<1x1x16x8xbf16>
    %5 = vector.shape_cast %4 : vector<1x1x16x8xbf16> to vector<16x8xbf16>
    %c0_i32 = arith.constant 0 : i32
    %6 = arith.cmpi eq, %arg2, %c0_i32 : i32
    %cst = arith.constant 0.000000e+00 : bf16
    %7 = vector.broadcast %cst : bf16 to vector<16x8xbf16>
    %8 = arith.select %6, %7, %3 : vector<16x8xbf16>
    %c0_i32_11 = arith.constant 0 : i32
    %9 = arith.cmpi eq, %arg2, %c0_i32_11 : i32
    %cst_12 = arith.constant 0.000000e+00 : bf16
    %10 = vector.broadcast %cst_12 : bf16 to vector<16x8xbf16>
    %11 = arith.select %9, %10, %5 : vector<16x8xbf16>
    %12 = vector.shape_cast %8 : vector<16x8xbf16> to vector<1x16x8xbf16>
    %13 = vector.shape_cast %11 : vector<16x8xbf16> to vector<1x16x8xbf16>
    %14 = tpu.concatenate %12, %1, %13 in 0 : vector<1x16x8xbf16>, vector<16x16x8xbf16>, vector<1x16x8xbf16> -> vector<18x16x8xbf16>
    %cst_13 = arith.constant 0.000000e+00 : bf16
    %15 = vector.broadcast %cst_13 : bf16 to vector<18x1x8xbf16>
    %16 = vector.extract_strided_slice %14 {offsets = [0, 0, 0], sizes = [18, 15, 8], strides = [1, 1, 1]} : vector<18x16x8xbf16> to vector<18x15x8xbf16>
    %17 = tpu.concatenate %15, %16 in 1 : vector<18x1x8xbf16>, vector<18x15x8xbf16> -> vector<18x16x8xbf16>
    %18 = vector.extract_strided_slice %14 {offsets = [0, 1, 0], sizes = [18, 15, 8], strides = [1, 1, 1]} : vector<18x16x8xbf16> to vector<18x15x8xbf16>
    %19 = tpu.concatenate %18, %15 in 1 : vector<18x15x8xbf16>, vector<18x1x8xbf16> -> vector<18x16x8xbf16>
    %20 = tpu.concatenate %17, %14, %19 in 2 : vector<18x16x8xbf16>, vector<18x16x8xbf16>, vector<18x16x8xbf16> -> vector<18x16x24xbf16>
    %21 = vector.shape_cast %20 : vector<18x16x24xbf16> to vector<288x24xbf16>
    %22 = vector.extract_strided_slice %21 {offsets = [0, 0], sizes = [256, 24], strides = [1, 1]} : vector<288x24xbf16> to vector<256x24xbf16>
    %c0_14 = arith.constant 0 : index
    %c0_15 = arith.constant 0 : index
    %c0_16 = arith.constant 0 : index
    %23 = vector.load %arg6[%c0_14, %c0_15, %c0_16] : memref<3x24x128xbf16, #tpu.memory_space<vmem>>, vector<1x24x128xbf16>
    %24 = vector.shape_cast %23 : vector<1x24x128xbf16> to vector<24x128xbf16>
    %cst_17 = arith.constant dense<0.000000e+00> : vector<256x128xf32>
    %25 = tpu.matmul %22, %24, %cst_17 {dimension_numbers = #tpu.dot_dimension_numbers<[1], [0], [0], [1], [0, 0, 1, 1], [], []>} : vector<256x24xbf16>, vector<24x128xbf16>, vector<256x128xf32> -> vector<256x128xf32>
    %26 = vector.extract_strided_slice %21 {offsets = [16, 0], sizes = [256, 24], strides = [1, 1]} : vector<288x24xbf16> to vector<256x24xbf16>
    %c1 = arith.constant 1 : index
    %c0_18 = arith.constant 0 : index
    %c0_19 = arith.constant 0 : index
    %27 = vector.load %arg6[%c1, %c0_18, %c0_19] : memref<3x24x128xbf16, #tpu.memory_space<vmem>>, vector<1x24x128xbf16>
    %28 = vector.shape_cast %27 : vector<1x24x128xbf16> to vector<24x128xbf16>
    %cst_20 = arith.constant dense<0.000000e+00> : vector<256x128xf32>
    %29 = tpu.matmul %26, %28, %cst_20 {dimension_numbers = #tpu.dot_dimension_numbers<[1], [0], [0], [1], [0, 0, 1, 1], [], []>} : vector<256x24xbf16>, vector<24x128xbf16>, vector<256x128xf32> -> vector<256x128xf32>
    %30 = arith.addf %25, %29 : vector<256x128xf32>
    %31 = vector.extract_strided_slice %21 {offsets = [32, 0], sizes = [256, 24], strides = [1, 1]} : vector<288x24xbf16> to vector<256x24xbf16>
    %c2 = arith.constant 2 : index
    %c0_21 = arith.constant 0 : index
    %c0_22 = arith.constant 0 : index
    %32 = vector.load %arg6[%c2, %c0_21, %c0_22] : memref<3x24x128xbf16, #tpu.memory_space<vmem>>, vector<1x24x128xbf16>
    %33 = vector.shape_cast %32 : vector<1x24x128xbf16> to vector<24x128xbf16>
    %cst_23 = arith.constant dense<0.000000e+00> : vector<256x128xf32>
    %34 = tpu.matmul %31, %33, %cst_23 {dimension_numbers = #tpu.dot_dimension_numbers<[1], [0], [0], [1], [0, 0, 1, 1], [], []>} : vector<256x24xbf16>, vector<24x128xbf16>, vector<256x128xf32> -> vector<256x128xf32>
    %35 = arith.addf %30, %34 : vector<256x128xf32>
    %c0_24 = arith.constant 0 : index
    %c0_25 = arith.constant 0 : index
    %36 = vector.load %arg7[%c0_24, %c0_25] : memref<1x128xf32, #tpu.memory_space<vmem>>, vector<1x128xf32>
    %37 = vector.broadcast %36 : vector<1x128xf32> to vector<256x128xf32>
    %38 = arith.addf %35, %37 : vector<256x128xf32>
    %cst_26 = arith.constant 0.000000e+00 : f32
    %39 = vector.broadcast %cst_26 : f32 to vector<256x128xf32>
    %40 = arith.maximumf %38, %39 : vector<256x128xf32>
    %41 = vector.shape_cast %40 : vector<256x128xf32> to vector<16x16x128xf32>
    %42 = arith.truncf %41 : vector<16x16x128xf32> to vector<16x16x128xbf16>
    %c0_27 = arith.constant 0 : index
    %c0_28 = arith.constant 0 : index
    %c0_29 = arith.constant 0 : index
    %c0_30 = arith.constant 0 : index
    %43 = vector.load %arg8[%c0_27, %c0_28, %c0_29, %c0_30] : memref<1x16x16x128xbf16, #tpu.memory_space<vmem>>, vector<1x16x16x128xbf16>
    %44 = vector.shape_cast %43 : vector<1x16x16x128xbf16> to vector<16x16x128xbf16>
    %45 = vector.shape_cast %42 : vector<16x16x128xbf16> to vector<1x16x16x128xbf16>
    tpu.vector_store %arg8[%c0_27, %c0_28, %c0_29, %c0_30], %45 {strides = array<i32>} : memref<1x16x16x128xbf16, #tpu.memory_space<vmem>>, vector<1x16x16x128xbf16>,
    return
  }
  func.func @transform_0(%arg0: i32, %arg1: i32, %arg2: i32) -> (i32, i32, i32, i32) {
    %c0_i32 = arith.constant 0 : i32
    %c0_i32_0 = arith.constant 0 : i32
    %c0_i32_1 = arith.constant 0 : i32
    return %arg0, %arg2, %c0_i32, %c0_i32_0 : i32, i32, i32, i32
  }
  func.func @transform_1(%arg0: i32, %arg1: i32, %arg2: i32) -> (i32, i32, i32, i32) {
    %c16_i32 = arith.constant 16 : i32
    %0 = arith.muli %arg2, %c16_i32 : i32
    %c1_i32 = arith.constant 1 : i32
    %1 = arith.subi %0, %c1_i32 : i32
    %c0_i32 = arith.constant 0 : i32
    %2 = arith.maxsi %1, %c0_i32 : i32
    %c0_i32_0 = arith.constant 0 : i32
    %c0_i32_1 = arith.constant 0 : i32
    %c0_i32_2 = arith.constant 0 : i32
    return %arg0, %2, %c0_i32_0, %c0_i32_1 : i32, i32, i32, i32
  }
  func.func @transform_2(%arg0: i32, %arg1: i32, %arg2: i32) -> (i32, i32, i32, i32) {
    %c16_i32 = arith.constant 16 : i32
    %0 = arith.muli %arg2, %c16_i32 : i32
    %c16_i32_0 = arith.constant 16 : i32
    %1 = arith.addi %0, %c16_i32_0 : i32
    %c15_i32 = arith.constant 15 : i32
    %2 = arith.minsi %1, %c15_i32 : i32
    %c0_i32 = arith.constant 0 : i32
    %c0_i32_1 = arith.constant 0 : i32
    %c0_i32_2 = arith.constant 0 : i32
    return %arg0, %2, %c0_i32, %c0_i32_1 : i32, i32, i32, i32
  }
  func.func @transform_3(%arg0: i32, %arg1: i32, %arg2: i32) -> (i32, i32, i32) {
    %c0_i32 = arith.constant 0 : i32
    %c0_i32_0 = arith.constant 0 : i32
    %c0_i32_1 = arith.constant 0 : i32
    return %c0_i32, %c0_i32_0, %arg1 : i32, i32, i32
  }
  func.func @transform_4(%arg0: i32, %arg1: i32, %arg2: i32) -> (i32, i32) {
    %c0_i32 = arith.constant 0 : i32
    %c0_i32_0 = arith.constant 0 : i32
    return %c0_i32, %arg1 : i32, i32
  }
  func.func @transform_5(%arg0: i32, %arg1: i32, %arg2: i32) -> (i32, i32, i32, i32) {
    %c0_i32 = arith.constant 0 : i32
    %c0_i32_0 = arith.constant 0 : i32
    return %arg0, %arg2, %c0_i32, %arg1 : i32, i32, i32, i32
  }
}

</mosaic_0001>

<llo_original>
// kernel: _lambda_.3
$region0: #{_lambda_.3}
  #allocation0 [shape = 'u32[]', space=smem, size = 0x4, offset = 0x4, fixed_abs, tag = 'smem constant byte address 0x4 - core index']
  #allocation1 [shape = 'u32[144,128]{1,0:T(1,128)}', space=vmem, size = 0x12000, scoped, tag = 'internal scratch']
  %s0 = inlined_call_operand.vmem [shape: bf16[2,16,16,4], index: 0, kind: input, shape index: {}, may-alias: {0,1,2}]
  %s1 = inlined_call_operand.vmem [shape: bf16[2,16,16,4], index: 1, kind: input, shape index: {}, may-alias: {0,1,2}]
  %s2 = inlined_call_operand.vmem [shape: bf16[2,16,16,4], index: 2, kind: input, shape index: {}, may-alias: {0,1,2}]
  %s3 = inlined_call_operand.vmem [shape: bf16[3,12,128], index: 3, kind: input, shape index: {}]
  %s4 = inlined_call_operand.vmem [shape: f32[1,128], index: 4, kind: input, shape index: {}]
  %s5 = inlined_call_operand.vmem [shape: bf16[2,16,16,128], index: 5, kind: output, shape index: {}]
  %s6 = sld [smem:[#allocation0]]
  $region53: #{_lambda_.3} parent=0
    _
  %s8 = ssub.s32 1, %s6
  %s9 = scalar_select 0, %s8, %s6
  loop: start=0, step=1, limit=4
  $region2: #{_lambda_.3} parent=0 // loop_pre_header
    _
  $region3: #{_lambda_.3} parent=0 // loop_header
    %s11 = sphi 0, %s15
    %p12 = scmp.ge.s32.totalorder %s11, 4
    %s18 = sphi 0, %s37
    %s19 = sphi 0, %s33
    %s20 = sphi 0, %s29
    %s21 = sphi 0, %s18
    %s22 = sphi 0, %s19
    %s23 = sphi 0, %s20
    %s24 = sphi 0, %s21
    %s25 = sphi 0, %s22
    %s26 = sphi 0, %s23
    %s42 = sphi 0, %s44
    %s45 = sphi 0, %s42
    %s46 = sphi 0, %s45
    %s62 = sphi 0, %s46
    %s78 = sphi 0, %s80
    %s81 = sphi 0, %s78
    %s82 = sphi 0, %s81
    %s98 = sphi 0, %s82
    %s114 = sphi 0, %s116
    %s117 = sphi 0, %s114
    %s118 = sphi 0, %s117
    %s134 = sphi 0, %s118
    %s140 = sphi 0, %s142
    %s143 = sphi 0, %s140
    %s144 = sphi 0, %s143
    %s160 = sphi 0, %s144
    %s166 = sphi 0, %s168
    %s169 = sphi 0, %s166
    %s170 = sphi 0, %s169
    %s186 = sphi 0, %s170
    %s196 = sphi 0, %s198
    %s199 = sphi 0, %s196
    %s200 = sphi 0, %s199
    %s216 = sphi 0, %s200
  $region4: #{_lambda_.3} parent=0 // loop_header_branch
    %14 = sbr.rel (%p12) target = $region8
  $region5: #{_lambda_.3} parent=0 // loop_body
    %s16 = ssub.s32 %s11, 1
    %s17 = ssub.s32 %s11, 2
    %s27 = sadd.s32 1, %s20
    %p28 = scmp.ge.s32.totalorder %s27, 1
    %s29 = scalar_select %p28, 0, %s27
    %s30 = sadd.s32 1, %s19
    %s31 = scalar_select %p28, %s30, %s19
    %p32 = scmp.ge.s32.totalorder %s31, 1
    %s33 = scalar_select %p32, 0, %s31
    %s34 = sadd.s32 1, %s18
    %s35 = scalar_select %p32, %s34, %s18
    %p36 = scmp.ge.s32.totalorder %s35, 2
    %s37 = scalar_select %p36, 0, %s35
    %s38 = ssub.s32 %s18, %s37
    %s39 = ssub.s32 %s20, %s29
    %s40 = sor.u32 %s38, %s39
    %p41 = scmp.eq.s32.totalorder %s40, 0
    %s43 = sadd.s32 %s42, 1
    %s44 = scalar_select %p41, %s42, %s43
    %p47 = pneg %p41
    %p48 = scmp.eq.s32.totalorder %s11, 1
    %p49 = por %p47, %p48
    %p50 = scmp.ne.s32.totalorder %s42, %s45
    %p51 = scmp.eq.s32.totalorder %s11, 0
    %p52 = por %p50, %p51
    %p53 = scmp.ne.s32.totalorder %s42, %s45
    %p54 = scmp.eq.s32.totalorder %s16, 1
    %p55 = por %p53, %p54
    %p56 = scmp.ne.s32.totalorder %s45, %s46
    %p57 = scmp.eq.s32.totalorder %s16, 0
    %p58 = por %p56, %p57
    %p59 = scmp.ne.s32.totalorder %s45, %s46
    %p60 = scmp.eq.s32.totalorder %s17, 1
    %p61 = por %p59, %p60
    %p63 = scmp.ne.s32.totalorder %s46, %s62
    %p64 = scmp.eq.s32.totalorder %s17, 0
    %p65 = por %p63, %p64
    %s66 = smul.u32 %s20, 16
    %s67 = ssub.s32 %s66, 1
    %p68 = scmp.gt.s32.totalorder %s67, 0
    %s69 = scalar_select %p68, %s67, 0
    %s70 = smul.u32 %s29, 16
    %s71 = ssub.s32 %s70, 1
    %p72 = scmp.gt.s32.totalorder %s71, 0
    %s73 = scalar_select %p72, %s71, 0
    %s74 = ssub.s32 %s18, %s37
    %s75 = ssub.s32 %s69, %s73
    %s76 = sor.u32 %s74, %s75
    %p77 = scmp.eq.s32.totalorder %s76, 0
    %s79 = sadd.s32 %s78, 1
    %s80 = scalar_select %p77, %s78, %s79
    %p83 = pneg %p77
    %p84 = scmp.eq.s32.totalorder %s11, 1
    %p85 = por %p83, %p84
    %p86 = scmp.ne.s32.totalorder %s78, %s81
    %p87 = scmp.eq.s32.totalorder %s11, 0
    %p88 = por %p86, %p87
    %p89 = scmp.ne.s32.totalorder %s78, %s81
    %p90 = scmp.eq.s32.totalorder %s16, 1
    %p91 = por %p89, %p90
    %p92 = scmp.ne.s32.totalorder %s81, %s82
    %p93 = scmp.eq.s32.totalorder %s16, 0
    %p94 = por %p92, %p93
    %p95 = scmp.ne.s32.totalorder %s81, %s82
    %p96 = scmp.eq.s32.totalorder %s17, 1
    %p97 = por %p95, %p96
    %p99 = scmp.ne.s32.totalorder %s82, %s98
    %p100 = scmp.eq.s32.totalorder %s17, 0
    %p101 = por %p99, %p100
    %s102 = smul.u32 %s20, 16
    %s103 = sadd.s32 %s102, 16
    %p104 = scmp.lt.s32.totalorder %s103, 15
    %s105 = scalar_select %p104, %s103, 15
    %s106 = smul.u32 %s29, 16
    %s107 = sadd.s32 %s106, 16
    %p108 = scmp.lt.s32.totalorder %s107, 15
    %s109 = scalar_select %p108, %s107, 15
    %s110 = ssub.s32 %s18, %s37
    %s111 = ssub.s32 %s105, %s109
    %s112 = sor.u32 %s110, %s111
    %p113 = scmp.eq.s32.totalorder %s112, 0
    %s115 = sadd.s32 %s114, 1
    %s116 = scalar_select %p113, %s114, %s115
    %p119 = pneg %p113
    %p120 = scmp.eq.s32.totalorder %s11, 1
    %p121 = por %p119, %p120
    %p122 = scmp.ne.s32.totalorder %s114, %s117
    %p123 = scmp.eq.s32.totalorder %s11, 0
    %p124 = por %p122, %p123
    %p125 = scmp.ne.s32.totalorder %s114, %s117
    %p126 = scmp.eq.s32.totalorder %s16, 1
    %p127 = por %p125, %p126
    %p128 = scmp.ne.s32.totalorder %s117, %s118
    %p129 = scmp.eq.s32.totalorder %s16, 0
    %p130 = por %p128, %p129
    %p131 = scmp.ne.s32.totalorder %s117, %s118
    %p132 = scmp.eq.s32.totalorder %s17, 1
    %p133 = por %p131, %p132
    %p135 = scmp.ne.s32.totalorder %s118, %s134
    %p136 = scmp.eq.s32.totalorder %s17, 0
    %p137 = por %p135, %p136
    %s138 = ssub.s32 %s19, %s33
    %p139 = scmp.eq.s32.totalorder %s138, 0
    %s141 = sadd.s32 %s140, 1
    %s142 = scalar_select %p139, %s140, %s141
    %p145 = pneg %p139
    %p146 = scmp.eq.s32.totalorder %s11, 1
    %p147 = por %p145, %p146
    %p148 = scmp.ne.s32.totalorder %s140, %s143
    %p149 = scmp.eq.s32.totalorder %s11, 0
    %p150 = por %p148, %p149
    %p151 = scmp.ne.s32.totalorder %s140, %s143
    %p152 = scmp.eq.s32.totalorder %s16, 1
    %p153 = por %p151, %p152
    %p154 = scmp.ne.s32.totalorder %s143, %s144
    %p155 = scmp.eq.s32.totalorder %s16, 0
    %p156 = por %p154, %p155
    %p157 = scmp.ne.s32.totalorder %s143, %s144
    %p158 = scmp.eq.s32.totalorder %s17, 1
    %p159 = por %p157, %p158
    %p161 = scmp.ne.s32.totalorder %s144, %s160
    %p162 = scmp.eq.s32.totalorder %s17, 0
    %p163 = por %p161, %p162
    %s164 = ssub.s32 %s19, %s33
    %p165 = scmp.eq.s32.totalorder %s164, 0
    %s167 = sadd.s32 %s166, 1
    %s168 = scalar_select %p165, %s166, %s167
    %p171 = pneg %p165
    %p172 = scmp.eq.s32.totalorder %s11, 1
    %p173 = por %p171, %p172
    %p174 = scmp.ne.s32.totalorder %s166, %s169
    %p175 = scmp.eq.s32.totalorder %s11, 0
    %p176 = por %p174, %p175
    %p177 = scmp.ne.s32.totalorder %s166, %s169
    %p178 = scmp.eq.s32.totalorder %s16, 1
    %p179 = por %p177, %p178
    %p180 = scmp.ne.s32.totalorder %s169, %s170
    %p181 = scmp.eq.s32.totalorder %s16, 0
    %p182 = por %p180, %p181
    %p183 = scmp.ne.s32.totalorder %s169, %s170
    %p184 = scmp.eq.s32.totalorder %s17, 1
    %p185 = por %p183, %p184
    %p187 = scmp.ne.s32.totalorder %s170, %s186
    %p188 = scmp.eq.s32.totalorder %s17, 0
    %p189 = por %p187, %p188
    %s190 = ssub.s32 %s18, %s37
    %s191 = ssub.s32 %s20, %s29
    %s192 = sor.u32 %s190, %s191
    %s193 = ssub.s32 %s19, %s33
    %s194 = sor.u32 %s192, %s193
    %p195 = scmp.eq.s32.totalorder %s194, 0
    %s197 = sadd.s32 %s196, 1
    %s198 = scalar_select %p195, %s196, %s197
    %p201 = pneg %p195
    %p202 = scmp.eq.s32.totalorder %s11, 1
    %p203 = por %p201, %p202
    %p204 = scmp.ne.s32.totalorder %s196, %s199
    %p205 = scmp.eq.s32.totalorder %s11, 0
    %p206 = por %p204, %p205
    %p207 = scmp.ne.s32.totalorder %s196, %s199
    %p208 = scmp.eq.s32.totalorder %s16, 1
    %p209 = por %p207, %p208
    %p210 = scmp.ne.s32.totalorder %s199, %s200
    %p211 = scmp.eq.s32.totalorder %s16, 0
    %p212 = por %p210, %p211
    %p213 = scmp.ne.s32.totalorder %s199, %s200
    %p214 = scmp.eq.s32.totalorder %s17, 1
    %p215 = por %p213, %p214
    %p217 = scmp.ne.s32.totalorder %s200, %s216
    %p218 = scmp.eq.s32.totalorder %s17, 0
    %p219 = por %p217, %p218
    %p220 = scmp.le.s32.totalorder 1, %s11
    %p221 = scmp.lt.s32.totalorder %s11, 3
    %p222 = pnand %p220, %p221
    %p223 = pneg %p222
    // Predicated region
    $region9: #{_lambda_.3} parent=5 // pred_check
      _
    $region10: #{_lambda_.3} parent=5 // pred_check_branch
      %225 = sbr.rel (%p222) target = $region12
    $region11: #{_lambda_.3} parent=5 // pred_region
      %s226 = ssub.s32 %s11, 1
      // Predicated region
      $region13: #{_lambda_.3} parent=11 // pred_check
        %p227 = pneg %p156
      $region14: #{_lambda_.3} parent=11 // pred_check_branch
        %229 = sbr.rel (%p227) target = $region16
      $region15: #{_lambda_.3} parent=11 // pred_region
        %p230 = scmp.lt.s32.totalorder %s22, 0
        %s231 = scalar_select %p230, %s22, 0
        %s232 = smul.addr %s231, 4
        %s233 = scalar_lea.vmem %s3, %s232
      $region16: #{_lambda_.3} parent=11 // pred_fallthru
        _
      // Predicated region
      $region17: #{_lambda_.3} parent=11 // pred_check
        %p234 = pneg %p182
      $region18: #{_lambda_.3} parent=11 // pred_check_branch
        %236 = sbr.rel (%p234) target = $region20
      $region19: #{_lambda_.3} parent=11 // pred_region
        %p237 = scmp.lt.s32.totalorder %s22, 0
        %s238 = scalar_select %p237, %s22, 0
        %s239 = scalar_lea.vmem %s4, %s238
      $region20: #{_lambda_.3} parent=11 // pred_fallthru
        _
    $region12: #{_lambda_.3} parent=5 // pred_fallthru
      _
    %p240 = scmp.lt.s32.totalorder %s11, 2
    // Predicated region
    $region21: #{_lambda_.3} parent=5 // pred_check
      %p241 = pneg %p240
    $region22: #{_lambda_.3} parent=5 // pred_check_branch
      %243 = sbr.rel (%p241) target = $region24
    $region23: #{_lambda_.3} parent=5 // pred_region
      // Predicated region
      $region25: #{_lambda_.3} parent=23 // pred_check
        %p244 = pneg %p52
      $region26: #{_lambda_.3} parent=23 // pred_check_branch
        %246 = sbr.rel (%p244) target = $region28
      $region27: #{_lambda_.3} parent=23 // pred_region
        %s247 = smul.u32 16, %s20
        %p248 = scmp.lt.s32.totalorder %s18, 1
        %s249 = scalar_select %p248, %s18, 1
        %p250 = scmp.lt.s32.totalorder %s247, 15
        %s251 = scalar_select %p250, %s247, 15
        %s252 = smul.addr %s251, 2
        %s253 = smul.addr %s249, 32
        %s254 = sadd.s32 %s252, %s253
        %s255 = smul.addr %s254, 4
        %s256 = scalar_lea.vmem %s0, %s255
        %s257 = smul.u32 16, %s20
      $region28: #{_lambda_.3} parent=23 // pred_fallthru
        _
      // Predicated region
      $region29: #{_lambda_.3} parent=23 // pred_check
        %p258 = pneg %p88
      $region30: #{_lambda_.3} parent=23 // pred_check_branch
        %260 = sbr.rel (%p258) target = $region32
      $region31: #{_lambda_.3} parent=23 // pred_region
        %s261 = smul.u32 %s20, 16
        %s262 = ssub.s32 %s261, 1
        %p263 = scmp.gt.s32.totalorder %s262, 0
        %s264 = scalar_select %p263, %s262, 0
        %p265 = scmp.lt.s32.totalorder %s18, 1
        %s266 = scalar_select %p265, %s18, 1
        %p267 = scmp.lt.s32.totalorder %s264, 15
        %s268 = scalar_select %p267, %s264, 15
        %s269 = smul.addr %s268, 2
        %s270 = smul.addr %s266, 32
        %s271 = sadd.s32 %s269, %s270
        %s272 = smul.addr %s271, 4
        %s273 = scalar_lea.vmem %s1, %s272
        %s274 = smul.u32 %s20, 16
        %s275 = ssub.s32 %s274, 1
        %p276 = scmp.gt.s32.totalorder %s275, 0
        %s277 = scalar_select %p276, %s275, 0
      $region32: #{_lambda_.3} parent=23 // pred_fallthru
        _
      // Predicated region
      $region33: #{_lambda_.3} parent=23 // pred_check
        %p278 = pneg %p124
      $region34: #{_lambda_.3} parent=23 // pred_check_branch
        %280 = sbr.rel (%p278) target = $region36
      $region35: #{_lambda_.3} parent=23 // pred_region
        %s281 = smul.u32 %s20, 16
        %s282 = sadd.s32 %s281, 16
        %p283 = scmp.lt.s32.totalorder %s282, 15
        %s284 = scalar_select %p283, %s282, 15
        %p285 = scmp.lt.s32.totalorder %s18, 1
        %s286 = scalar_select %p285, %s18, 1
        %p287 = scmp.lt.s32.totalorder %s284, 15
        %s288 = scalar_select %p287, %s284, 15
        %s289 = smul.addr %s288, 2
        %s290 = smul.addr %s286, 32
        %s291 = sadd.s32 %s289, %s290
        %s292 = smul.addr %s291, 4
        %s293 = scalar_lea.vmem %s2, %s292
        %s294 = smul.u32 %s20, 16
        %s295 = sadd.s32 %s294, 16
        %p296 = scmp.lt.s32.totalorder %s295, 15
        %s297 = scalar_select %p296, %s295, 15
      $region36: #{_lambda_.3} parent=23 // pred_fallthru
        _
    $region24: #{_lambda_.3} parent=5 // pred_fallthru
      _
    %p298 = scmp.le.s32.totalorder 1, %s11
    %p299 = scmp.lt.s32.totalorder %s11, 3
    %p300 = pnand %p298, %p299
    %p301 = pneg %p300
    // Predicated region
    $region37: #{_lambda_.3} parent=5 // pred_check
      _
    $region38: #{_lambda_.3} parent=5 // pred_check_branch
      %303 = sbr.rel (%p300) target = $region40
    $region39: #{_lambda_.3} parent=5 // pred_region
      %s304 = ssub.s32 %s11, 1
      %s305 = smul.u32 16, %s23
      %p306 = scmp.lt.s32.totalorder %s21, 1
      %s307 = scalar_select %p306, %s21, 1
      %p308 = scmp.lt.s32.totalorder %s305, 15
      %s309 = scalar_select %p308, %s305, 15
      %s310 = smul.addr %s309, 2
      %s311 = smul.addr %s307, 32
      %s312 = sadd.s32 %s310, %s311
      %s313 = smul.addr %s312, 4
      %s314 = scalar_lea.vmem %s0, %s313
      %p315 = pneg %p58
      %p316 = pneg %p55
      %s317 = smul.u32 %s23, 16
      %s318 = ssub.s32 %s317, 1
      %p319 = scmp.gt.s32.totalorder %s318, 0
      %s320 = scalar_select %p319, %s318, 0
      %p321 = scmp.lt.s32.totalorder %s21, 1
      %s322 = scalar_select %p321, %s21, 1
      %p323 = scmp.lt.s32.totalorder %s320, 15
      %s324 = scalar_select %p323, %s320, 15
      %s325 = smul.addr %s324, 2
      %s326 = smul.addr %s322, 32
      %s327 = sadd.s32 %s325, %s326
      %s328 = smul.addr %s327, 4
      %s329 = scalar_lea.vmem %s1, %s328
      %p330 = pneg %p94
      %p331 = pneg %p91
      %s332 = smul.u32 %s23, 16
      %s333 = sadd.s32 %s332, 16
      %p334 = scmp.lt.s32.totalorder %s333, 15
      %s335 = scalar_select %p334, %s333, 15
      %p336 = scmp.lt.s32.totalorder %s21, 1
      %s337 = scalar_select %p336, %s21, 1
      %p338 = scmp.lt.s32.totalorder %s335, 15
      %s339 = scalar_select %p338, %s335, 15
      %s340 = smul.addr %s339, 2
      %s341 = smul.addr %s337, 32
      %s342 = sadd.s32 %s340, %s341
      %s343 = smul.addr %s342, 4
      %s344 = scalar_lea.vmem %s2, %s343
      %p345 = pneg %p130
      %p346 = pneg %p127
      %p347 = scmp.lt.s32.totalorder %s22, 0
      %s348 = scalar_select %p347, %s22, 0
      %s349 = smul.addr %s348, 4
      %s350 = scalar_lea.vmem %s3, %s349
      %p351 = pneg %p156
      %p352 = pneg %p153
      %p353 = scmp.lt.s32.totalorder %s22, 0
      %s354 = scalar_select %p353, %s22, 0
      %s355 = scalar_lea.vmem %s4, %s354
      %p356 = pneg %p182
      %p357 = pneg %p179
      %p358 = pneg %p212
      %p359 = pneg %p209
      %s360 = smul.u32 16, %s23
      %p361 = scmp.lt.s32.totalorder %s21, 1
      %s362 = scalar_select %p361, %s21, 1
      %p363 = scmp.lt.s32.totalorder %s360, 15
      %s364 = scalar_select %p363, %s360, 15
      %p365 = scmp.lt.s32.totalorder %s22, 0
      %s366 = scalar_select %p365, %s22, 0
      %s367 = smul.addr %s364, 2
      %s368 = sadd.s32 %s366, %s367
      %s369 = smul.addr %s362, 32
      %s370 = sadd.s32 %s368, %s369
      %s371 = smul.addr %s370, 4
      %s372 = scalar_lea.vmem %s5, %s371
      %s373 = smul.u32 16, %s23
      %p374 = scmp.lt.s32.totalorder %s21, 1
      %s375 = scalar_select %p374, %s21, 1
      %p376 = scmp.lt.s32.totalorder %s373, 15
      %s377 = scalar_select %p376, %s373, 15
      %s378 = smul.addr %s377, 2
      %s379 = smul.addr %s375, 32
      %s380 = sadd.s32 %s378, %s379
      %s381 = smul.addr %s380, 4
      %s382 = scalar_lea.vmem %s0, %s381
      %s383 = smul.u32 16, %s23
      %s384 = smul.u32 %s23, 16
      %s385 = ssub.s32 %s384, 1
      %p386 = scmp.gt.s32.totalorder %s385, 0
      %s387 = scalar_select %p386, %s385, 0
      %p388 = scmp.lt.s32.totalorder %s21, 1
      %s389 = scalar_select %p388, %s21, 1
      %p390 = scmp.lt.s32.totalorder %s387, 15
      %s391 = scalar_select %p390, %s387, 15
      %s392 = smul.addr %s391, 2
      %s393 = smul.addr %s389, 32
      %s394 = sadd.s32 %s392, %s393
      %s395 = smul.addr %s394, 4
      %s396 = scalar_lea.vmem %s1, %s395
      %s397 = smul.u32 %s23, 16
      %s398 = ssub.s32 %s397, 1
      %p399 = scmp.gt.s32.totalorder %s398, 0
      %s400 = scalar_select %p399, %s398, 0
      %s401 = smul.u32 %s23, 16
      %s402 = sadd.s32 %s401, 16
      %p403 = scmp.lt.s32.totalorder %s402, 15
      %s404 = scalar_select %p403, %s402, 15
      %p405 = scmp.lt.s32.totalorder %s21, 1
      %s406 = scalar_select %p405, %s21, 1
      %p407 = scmp.lt.s32.totalorder %s404, 15
      %s408 = scalar_select %p407, %s404, 15
      %s409 = smul.addr %s408, 2
      %s410 = smul.addr %s406, 32
      %s411 = sadd.s32 %s409, %s410
      %s412 = smul.addr %s411, 4
      %s413 = scalar_lea.vmem %s2, %s412
      %s414 = smul.u32 %s23, 16
      %s415 = sadd.s32 %s414, 16
      %p416 = scmp.lt.s32.totalorder %s415, 15
      %s417 = scalar_select %p416, %s415, 15
      %p418 = scmp.lt.s32.totalorder %s22, 0
      %s419 = scalar_select %p418, %s22, 0
      %s420 = smul.addr %s419, 4
      %s421 = scalar_lea.vmem %s3, %s420
      %p422 = scmp.lt.s32.totalorder %s22, 0
      %s423 = scalar_select %p422, %s22, 0
      %s424 = scalar_lea.vmem %s4, %s423
      %s425 = smul.u32 16, %s23
      %p426 = scmp.lt.s32.totalorder %s21, 1
      %s427 = scalar_select %p426, %s21, 1
      %p428 = scmp.lt.s32.totalorder %s425, 15
      %s429 = scalar_select %p428, %s425, 15
      %p430 = scmp.lt.s32.totalorder %s22, 0
      %s431 = scalar_select %p430, %s22, 0
      %s432 = smul.addr %s429, 2
      %s433 = sadd.s32 %s431, %s432
      %s434 = smul.addr %s427, 32
      %s435 = sadd.s32 %s433, %s434
      %s436 = smul.addr %s435, 4
      %s437 = scalar_lea.vmem %s5, %s436
      %s438 = smul.u32 16, %s23
      %v440 = vld [vmem:[%s382] sm:$0xf]
      %v441 = vld [vmem:[%s382 + $0x4] sm:$0xf]
      %v442 = vld [vmem:[%s382 + $0x8] sm:$0xf]
      %v443 = vld [vmem:[%s382 + $0xc] sm:$0xf]
      %v444 = vld [vmem:[%s382 + $0x10] sm:$0xf]
      %v445 = vld [vmem:[%s382 + $0x14] sm:$0xf]
      %v446 = vld [vmem:[%s382 + $0x18] sm:$0xf]
      %v447 = vld [vmem:[%s382 + $0x1c] sm:$0xf]
      %v448 = vld [vmem:[%s382 + $0x20] sm:$0xf]
      %v449 = vld [vmem:[%s382 + $0x24] sm:$0xf]
      %v450 = vld [vmem:[%s382 + $0x28] sm:$0xf]
      %v451 = vld [vmem:[%s382 + $0x2c] sm:$0xf]
      %v452 = vld [vmem:[%s382 + $0x30] sm:$0xf]
      %v453 = vld [vmem:[%s382 + $0x34] sm:$0xf]
      %v454 = vld [vmem:[%s382 + $0x38] sm:$0xf]
      %v455 = vld [vmem:[%s382 + $0x3c] sm:$0xf]
      %v456 = vld [vmem:[%s382 + $0x40] sm:$0xf]
      %v457 = vld [vmem:[%s382 + $0x44] sm:$0xf]
      %v458 = vld [vmem:[%s382 + $0x48] sm:$0xf]
      %v459 = vld [vmem:[%s382 + $0x4c] sm:$0xf]
      %v460 = vld [vmem:[%s382 + $0x50] sm:$0xf]
      %v461 = vld [vmem:[%s382 + $0x54] sm:$0xf]
      %v462 = vld [vmem:[%s382 + $0x58] sm:$0xf]
      %v463 = vld [vmem:[%s382 + $0x5c] sm:$0xf]
      %v464 = vld [vmem:[%s382 + $0x60] sm:$0xf]
      %v465 = vld [vmem:[%s382 + $0x64] sm:$0xf]
      %v466 = vld [vmem:[%s382 + $0x68] sm:$0xf]
      %v467 = vld [vmem:[%s382 + $0x6c] sm:$0xf]
      %v468 = vld [vmem:[%s382 + $0x70] sm:$0xf]
      %v469 = vld [vmem:[%s382 + $0x74] sm:$0xf]
      %v470 = vld [vmem:[%s382 + $0x78] sm:$0xf]
      %v471 = vld [vmem:[%s382 + $0x7c] sm:$0xf]
      %v472 = vld [vmem:[%s396] sm:$0xf]
      %v473 = vld [vmem:[%s396 + $0x4] sm:$0xf]
      %v474 = vld [vmem:[%s413] sm:$0xf]
      %v475 = vld [vmem:[%s413 + $0x4] sm:$0xf]
      %p476 = scmp.eq.s32.totalorder %s23, 0
      %s477 = scalar_select %p476, 1, 0
      %v478 = vstv %s477
      %vm479 = vcmp.eq.s32.totalorder %v478, 1
      %v480 = vsel %vm479, 0, %v472
      %v481 = vsel %vm479, 0, %v473
      %v482 = vsel %vm479, 0, %v474
      %v483 = vsel %vm479, 0, %v475
      %v520 = vunpack.c.l.b16 %v480
      %v521 = vunpack.c.l.b16 %v481
      %v522 = vunpack.c.l.b16 %v440
      %v523 = vunpack.c.l.b16 %v441
      %v524 = vunpack.c.l.b16 %v442
      %v525 = vunpack.c.l.b16 %v443
      %v526 = vunpack.c.l.b16 %v444
      %v527 = vunpack.c.l.b16 %v445
      %v528 = vunpack.c.l.b16 %v446
      %v529 = vunpack.c.l.b16 %v447
      %v530 = vunpack.c.l.b16 %v448
      %v531 = vunpack.c.l.b16 %v449
      %v532 = vunpack.c.l.b16 %v450
      %v533 = vunpack.c.l.b16 %v451
      %v534 = vunpack.c.l.b16 %v452
      %v535 = vunpack.c.l.b16 %v453
      %v536 = vunpack.c.l.b16 %v454
      %v537 = vunpack.c.l.b16 %v455
      %v538 = vunpack.c.l.b16 %v456
      %v539 = vunpack.c.l.b16 %v457
      %v540 = vunpack.c.l.b16 %v458
      %v541 = vunpack.c.l.b16 %v459
      %v542 = vunpack.c.l.b16 %v460
      %v543 = vunpack.c.l.b16 %v461
      %v544 = vunpack.c.l.b16 %v462
      %v545 = vunpack.c.l.b16 %v463
      %v546 = vunpack.c.l.b16 %v464
      %v547 = vunpack.c.l.b16 %v465
      %v548 = vunpack.c.l.b16 %v466
      %v549 = vunpack.c.l.b16 %v467
      %v550 = vunpack.c.l.b16 %v468
      %v551 = vunpack.c.l.b16 %v469
      %v552 = vunpack.c.l.b16 %v470
      %v553 = vunpack.c.l.b16 %v471
      %v554 = vunpack.c.l.b16 %v482
      %v555 = vunpack.c.l.b16 %v483
      %v556 = vpack.c.b16 %v521, %v520
      %v557 = vpack.c.b16 %v523, %v522
      %v558 = vpack.c.b16 %v525, %v524
      %v559 = vpack.c.b16 %v527, %v526
      %v560 = vpack.c.b16 %v529, %v528
      %v561 = vpack.c.b16 %v531, %v530
      %v562 = vpack.c.b16 %v533, %v532
      %v563 = vpack.c.b16 %v535, %v534
      %v564 = vpack.c.b16 %v537, %v536
      %v565 = vpack.c.b16 %v539, %v538
      %v566 = vpack.c.b16 %v541, %v540
      %v567 = vpack.c.b16 %v543, %v542
      %v568 = vpack.c.b16 %v545, %v544
      %v569 = vpack.c.b16 %v547, %v546
      %v570 = vpack.c.b16 %v549, %v548
      %v571 = vpack.c.b16 %v551, %v550
      %v572 = vpack.c.b16 %v553, %v552
      %v573 = vpack.c.b16 %v555, %v554
      %v575 = vshrl.u32 %v556, 16
      %v577 = vrot.slane %v575, 7
      %v578 = vshll.u32 %v556, 16
      %v580 = vor.u32 %v577, %v578
      %v582 = vshrl.u32 %v557, 16
      %v584 = vrot.slane %v582, 7
      %v585 = vshll.u32 %v557, 16
      %v587 = vor.u32 %v584, %v585
      %v589 = vshrl.u32 %v558, 16
      %v591 = vrot.slane %v589, 7
      %v592 = vshll.u32 %v558, 16
      %v594 = vor.u32 %v591, %v592
      %v596 = vshrl.u32 %v559, 16
      %v598 = vrot.slane %v596, 7
      %v599 = vshll.u32 %v559, 16
      %v601 = vor.u32 %v598, %v599
      %v603 = vshrl.u32 %v560, 16
      %v605 = vrot.slane %v603, 7
      %v606 = vshll.u32 %v560, 16
      %v608 = vor.u32 %v605, %v606
      %v610 = vshrl.u32 %v561, 16
      %v612 = vrot.slane %v610, 7
      %v613 = vshll.u32 %v561, 16
      %v615 = vor.u32 %v612, %v613
      %v617 = vshrl.u32 %v562, 16
      %v619 = vrot.slane %v617, 7
      %v620 = vshll.u32 %v562, 16
      %v622 = vor.u32 %v619, %v620
      %v624 = vshrl.u32 %v563, 16
      %v626 = vrot.slane %v624, 7
      %v627 = vshll.u32 %v563, 16
      %v629 = vor.u32 %v626, %v627
      %v631 = vshrl.u32 %v564, 16
      %v633 = vrot.slane %v631, 7
      %v634 = vshll.u32 %v564, 16
      %v636 = vor.u32 %v633, %v634
      %v638 = vshrl.u32 %v565, 16
      %v640 = vrot.slane %v638, 7
      %v641 = vshll.u32 %v565, 16
      %v643 = vor.u32 %v640, %v641
      %v645 = vshrl.u32 %v566, 16
      %v647 = vrot.slane %v645, 7
      %v648 = vshll.u32 %v566, 16
      %v650 = vor.u32 %v647, %v648
      %v652 = vshrl.u32 %v567, 16
      %v654 = vrot.slane %v652, 7
      %v655 = vshll.u32 %v567, 16
      %v657 = vor.u32 %v654, %v655
      %v659 = vshrl.u32 %v568, 16
      %v661 = vrot.slane %v659, 7
      %v662 = vshll.u32 %v568, 16
      %v664 = vor.u32 %v661, %v662
      %v666 = vshrl.u32 %v569, 16
      %v668 = vrot.slane %v666, 7
      %v669 = vshll.u32 %v569, 16
      %v671 = vor.u32 %v668, %v669
      %v673 = vshrl.u32 %v570, 16
      %v675 = vrot.slane %v673, 7
      %v676 = vshll.u32 %v570, 16
      %v678 = vor.u32 %v675, %v676
      %v680 = vshrl.u32 %v571, 16
      %v682 = vrot.slane %v680, 7
      %v683 = vshll.u32 %v571, 16
      %v685 = vor.u32 %v682, %v683
      %v687 = vshrl.u32 %v572, 16
      %v689 = vrot.slane %v687, 7
      %v690 = vshll.u32 %v572, 16
      %v692 = vor.u32 %v689, %v690
      %v694 = vshrl.u32 %v573, 16
      %v696 = vrot.slane %v694, 7
      %v697 = vshll.u32 %v573, 16
      %v699 = vor.u32 %v696, %v697
      %vm718 = vcmask 1040384
      %vm719 = vsmask.f32 256
      %vm720 = vmand %vm718, %vm719
      %v721 = vsel %vm720, 0, %v580
      %v722 = vsel %vm720, 0, %v587
      %v723 = vsel %vm720, 0, %v594
      %v724 = vsel %vm720, 0, %v601
      %v725 = vsel %vm720, 0, %v608
      %v726 = vsel %vm720, 0, %v615
      %v727 = vsel %vm720, 0, %v622
      %v728 = vsel %vm720, 0, %v629
      %v729 = vsel %vm720, 0, %v636
      %v730 = vsel %vm720, 0, %v643
      %v731 = vsel %vm720, 0, %v650
      %v732 = vsel %vm720, 0, %v657
      %v733 = vsel %vm720, 0, %v664
      %v734 = vsel %vm720, 0, %v671
      %v735 = vsel %vm720, 0, %v678
      %v736 = vsel %vm720, 0, %v685
      %v737 = vsel %vm720, 0, %v692
      %v738 = vsel %vm720, 0, %v699
      %v739 = vrot.slane %v578, 1
      %v740 = vor.u32 %v575, %v739
      %v741 = vrot.slane %v585, 1
      %v742 = vor.u32 %v582, %v741
      %v743 = vrot.slane %v592, 1
      %v744 = vor.u32 %v589, %v743
      %v745 = vrot.slane %v599, 1
      %v746 = vor.u32 %v596, %v745
      %v747 = vrot.slane %v606, 1
      %v748 = vor.u32 %v603, %v747
      %v749 = vrot.slane %v613, 1
      %v750 = vor.u32 %v610, %v749
      %v751 = vrot.slane %v620, 1
      %v752 = vor.u32 %v617, %v751
      %v753 = vrot.slane %v627, 1
      %v754 = vor.u32 %v624, %v753
      %v755 = vrot.slane %v634, 1
      %v756 = vor.u32 %v631, %v755
      %v757 = vrot.slane %v641, 1
      %v758 = vor.u32 %v638, %v757
      %v759 = vrot.slane %v648, 1
      %v760 = vor.u32 %v645, %v759
      %v761 = vrot.slane %v655, 1
      %v762 = vor.u32 %v652, %v761
      %v763 = vrot.slane %v662, 1
      %v764 = vor.u32 %v659, %v763
      %v765 = vrot.slane %v669, 1
      %v766 = vor.u32 %v666, %v765
      %v767 = vrot.slane %v676, 1
      %v768 = vor.u32 %v673, %v767
      %v769 = vrot.slane %v683, 1
      %v770 = vor.u32 %v680, %v769
      %v771 = vrot.slane %v690, 1
      %v772 = vor.u32 %v687, %v771
      %v773 = vrot.slane %v697, 1
      %v774 = vor.u32 %v694, %v773
      %vm793 = vcmask 1047552
      %vm794 = vsmask.f32 7424
      %vm795 = vmand %vm793, %vm794
      %v796 = vsel %vm795, %v740, 0
      %v797 = vsel %vm795, %v742, 0
      %v798 = vsel %vm795, %v744, 0
      %v799 = vsel %vm795, %v746, 0
      %v800 = vsel %vm795, %v748, 0
      %v801 = vsel %vm795, %v750, 0
      %v802 = vsel %vm795, %v752, 0
      %v803 = vsel %vm795, %v754, 0
      %v804 = vsel %vm795, %v756, 0
      %v805 = vsel %vm795, %v758, 0
      %v806 = vsel %vm795, %v760, 0
      %v807 = vsel %vm795, %v762, 0
      %v808 = vsel %vm795, %v764, 0
      %v809 = vsel %vm795, %v766, 0
      %v810 = vsel %vm795, %v768, 0
      %v811 = vsel %vm795, %v770, 0
      %v812 = vsel %vm795, %v772, 0
      %v813 = vsel %vm795, %v774, 0
      %814 = vrot.lane.b32.xlu0 %v556, 4
      %v815 = vpop.permute.xlu0 %814
      %816 = vrot.lane.b32.xlu0 %v557, 4
      %v817 = vpop.permute.xlu0 %816
      %818 = vrot.lane.b32.xlu0 %v558, 4
      %v819 = vpop.permute.xlu0 %818
      %820 = vrot.lane.b32.xlu0 %v559, 4
      %v821 = vpop.permute.xlu0 %820
      %822 = vrot.lane.b32.xlu0 %v560, 4
      %v823 = vpop.permute.xlu0 %822
      %824 = vrot.lane.b32.xlu0 %v561, 4
      %v825 = vpop.permute.xlu0 %824
      %826 = vrot.lane.b32.xlu0 %v562, 4
      %v827 = vpop.permute.xlu0 %826
      %828 = vrot.lane.b32.xlu0 %v563, 4
      %v829 = vpop.permute.xlu0 %828
      %830 = vrot.lane.b32.xlu0 %v564, 4
      %v831 = vpop.permute.xlu0 %830
      %832 = vrot.lane.b32.xlu0 %v565, 4
      %v833 = vpop.permute.xlu0 %832
      %834 = vrot.lane.b32.xlu0 %v566, 4
      %v835 = vpop.permute.xlu0 %834
      %836 = vrot.lane.b32.xlu0 %v567, 4
      %v837 = vpop.permute.xlu0 %836
      %838 = vrot.lane.b32.xlu0 %v568, 4
      %v839 = vpop.permute.xlu0 %838
      %840 = vrot.lane.b32.xlu0 %v569, 4
      %v841 = vpop.permute.xlu0 %840
      %842 = vrot.lane.b32.xlu0 %v570, 4
      %v843 = vpop.permute.xlu0 %842
      %844 = vrot.lane.b32.xlu0 %v571, 4
      %v845 = vpop.permute.xlu0 %844
      %846 = vrot.lane.b32.xlu0 %v572, 4
      %v847 = vpop.permute.xlu0 %846
      %848 = vrot.lane.b32.xlu0 %v573, 4
      %v849 = vpop.permute.xlu0 %848
      %868 = vrot.lane.b32.xlu0 %v796, 8
      %v869 = vpop.permute.xlu0 %868
      %870 = vrot.lane.b32.xlu0 %v797, 8
      %v871 = vpop.permute.xlu0 %870
      %872 = vrot.lane.b32.xlu0 %v798, 8
      %v873 = vpop.permute.xlu0 %872
      %874 = vrot.lane.b32.xlu0 %v799, 8
      %v875 = vpop.permute.xlu0 %874
      %876 = vrot.lane.b32.xlu0 %v800, 8
      %v877 = vpop.permute.xlu0 %876
      %878 = vrot.lane.b32.xlu0 %v801, 8
      %v879 = vpop.permute.xlu0 %878
      %880 = vrot.lane.b32.xlu0 %v802, 8
      %v881 = vpop.permute.xlu0 %880
      %882 = vrot.lane.b32.xlu0 %v803, 8
      %v883 = vpop.permute.xlu0 %882
      %884 = vrot.lane.b32.xlu0 %v804, 8
      %v885 = vpop.permute.xlu0 %884
      %886 = vrot.lane.b32.xlu0 %v805, 8
      %v887 = vpop.permute.xlu0 %886
      %888 = vrot.lane.b32.xlu0 %v806, 8
      %v889 = vpop.permute.xlu0 %888
      %890 = vrot.lane.b32.xlu0 %v807, 8
      %v891 = vpop.permute.xlu0 %890
      %892 = vrot.lane.b32.xlu0 %v808, 8
      %v893 = vpop.permute.xlu0 %892
      %894 = vrot.lane.b32.xlu0 %v809, 8
      %v895 = vpop.permute.xlu0 %894
      %896 = vrot.lane.b32.xlu0 %v810, 8
      %v897 = vpop.permute.xlu0 %896
      %898 = vrot.lane.b32.xlu0 %v811, 8
      %v899 = vpop.permute.xlu0 %898
      %900 = vrot.lane.b32.xlu0 %v812, 8
      %v901 = vpop.permute.xlu0 %900
      %902 = vrot.lane.b32.xlu0 %v813, 8
      %v903 = vpop.permute.xlu0 %902
      %vm904 = vcmask 31744
      %v907 = vsel %vm904, %v721, %v815
      %v910 = vsel %vm904, %v722, %v817
      %v913 = vsel %vm904, %v723, %v819
      %v916 = vsel %vm904, %v724, %v821
      %v919 = vsel %vm904, %v725, %v823
      %v922 = vsel %vm904, %v726, %v825
      %v925 = vsel %vm904, %v727, %v827
      %v928 = vsel %vm904, %v728, %v829
      %v931 = vsel %vm904, %v729, %v831
      %v934 = vsel %vm904, %v730, %v833
      %v937 = vsel %vm904, %v731, %v835
      %v940 = vsel %vm904, %v732, %v837
      %v943 = vsel %vm904, %v733, %v839
      %v946 = vsel %vm904, %v734, %v841
      %v949 = vsel %vm904, %v735, %v843
      %v952 = vsel %vm904, %v736, %v845
      %v955 = vsel %vm904, %v737, %v847
      %v958 = vsel %vm904, %v738, %v849
      %vm959 = vcmask 64512
      %v961 = vsel %vm959, %v907, %v869
      %v963 = vsel %vm959, %v910, %v871
      %v965 = vsel %vm959, %v913, %v873
      %v967 = vsel %vm959, %v916, %v875
      %v969 = vsel %vm959, %v919, %v877
      %v971 = vsel %vm959, %v922, %v879
      %v973 = vsel %vm959, %v925, %v881
      %v975 = vsel %vm959, %v928, %v883
      %v977 = vsel %vm959, %v931, %v885
      %v979 = vsel %vm959, %v934, %v887
      %v981 = vsel %vm959, %v937, %v889
      %v983 = vsel %vm959, %v940, %v891
      %v985 = vsel %vm959, %v943, %v893
      %v987 = vsel %vm959, %v946, %v895
      %v989 = vsel %vm959, %v949, %v897
      %v991 = vsel %vm959, %v952, %v899
      %v993 = vsel %vm959, %v955, %v901
      %v995 = vsel %vm959, %v958, %v903
      %v996 = vld [vmem:[%s421] sm:$0xf]
      %v997 = vld [vmem:[%s421 + $0x4] sm:$0x3]
      %s998 = scalar_lea.vmem %s421, 8
      %v999 = vld [vmem:[%s998] sm:$0xf]
      %v1000 = vld [vmem:[%s998 + $0x4] sm:$0x3]
      %v1003 = vunpack.c.l.b16 %v999
      %v1004 = vunpack.c.l.b16 %v1000
      %v1005 = vpack.c.b16 %v1004, %v1003
      %vm1006 = vcmask 97280
      %v1007 = vsel %vm1006, %v963, 0
      %v1009 = vsel %vm1006, %v965, 0
      %v1011 = vsel %vm1006, %v967, 0
      %v1013 = vsel %vm1006, %v969, 0
      %v1015 = vsel %vm1006, %v971, 0
      %v1017 = vsel %vm1006, %v973, 0
      %v1019 = vsel %vm1006, %v975, 0
      %v1021 = vsel %vm1006, %v977, 0
      %v1023 = vsel %vm1006, %v979, 0
      %v1025 = vsel %vm1006, %v981, 0
      %v1027 = vsel %vm1006, %v983, 0
      %v1029 = vsel %vm1006, %v985, 0
      %v1031 = vsel %vm1006, %v987, 0
      %v1033 = vsel %vm1006, %v989, 0
      %v1035 = vsel %vm1006, %v991, 0
      %v1037 = vsel %vm1006, %v993, 0
      %vm1039 = vcmask 1045504
      %v1041 = vsel %vm1039, %v1005, 0
      %1043 = vmatprep.subr.bf16.mxu0 0
      %1044 = vmatpush1.bf16.msra.mxu0 %v1041
      %1045 = vmatprep.subr.bf16.mxu0 0
      %1046 = vmatpush1.bf16.msra.mxu0 0
      %1047 = vmatprep.subr.bf16.mxu0 0
      %1048 = vmatpush1.bf16.msra.mxu0 0
      %1049 = vmatprep.subr.bf16.mxu0 0
      %1050 = vmatpush1.bf16.msra.mxu0 0
      %1051 = vmatprep.subr.bf16.mxu0 0
      %1052 = vmatpush1.bf16.msra.mxu0 0
      %1053 = vmatprep.subr.bf16.mxu0 0
      %1054 = vmatpush1.bf16.msra.mxu0 0
      %1055 = vmatprep.subr.bf16.mxu0 0
      %1056 = vmatpush1.bf16.msra.mxu0 0
      %1057 = vmatprep.subr.bf16.mxu0 0
      %1058 = vmatpush1.bf16.msra.mxu0 0
      %1059 = vmatprep.subr.bf16.mxu0 0
      %1060 = vmatpush1.bf16.msra.mxu0 0
      %1061 = vmatprep.subr.bf16.mxu0 0
      %1062 = vmatpush1.bf16.msra.mxu0 0
      %1063 = vmatprep.subr.bf16.mxu0 0
      %1064 = vmatpush1.bf16.msra.mxu0 0
      %1065 = vmatprep.subr.bf16.mxu0 0
      %1066 = vmatpush1.bf16.msra.mxu0 0
      %1067 = vmatprep.subr.bf16.mxu0 0
      %1068 = vmatpush1.bf16.msra.mxu0 0
      %1069 = vmatprep.subr.bf16.mxu0 0
      %1070 = vmatpush1.bf16.msra.mxu0 0
      %1071 = vmatprep.subr.bf16.mxu0 0
      %1072 = vmatpush1.bf16.msra.mxu0 0
      %1073 = vmatprep.subr.bf16.mxu0 0
      %1074 = vmatpush1.bf16.msra.mxu0 0
      %1075 = vmatprep.mubr.bf16.mxu0 0
      %1076 = vmatmul.mubr.bf16.gmra.mrb[0].mxu0 %v1007
      %v1077 = vpop.f32.mrb[0].mxu0
      %v1078 = vadd.f32 0.0, %v1077
      %v1079 = vpop.f32.mrb[0].mxu0
      %v1080 = vpop.f32.mrb[0].mxu0
      %v1081 = vadd.f32 0.0, %v1080
      %v1082 = vpop.f32.mrb[0].mxu0
      %1083 = vmatprep.mubr.bf16.mxu0 0
      %1084 = vmatmul.mubr.bf16.gmra.mrb[0].mxu0 %v1009
      %v1085 = vpop.f32.mrb[0].mxu0
      %v1086 = vadd.f32 0.0, %v1085
      %v1087 = vpop.f32.mrb[0].mxu0
      %v1088 = vpop.f32.mrb[0].mxu0
      %v1089 = vadd.f32 0.0, %v1088
      %v1090 = vpop.f32.mrb[0].mxu0
      %1091 = vmatprep.mubr.bf16.mxu0 0
      %1092 = vmatmul.mubr.bf16.gmra.mrb[0].mxu0 %v1011
      %v1093 = vpop.f32.mrb[0].mxu0
      %v1094 = vadd.f32 0.0, %v1093
      %v1095 = vpop.f32.mrb[0].mxu0
      %v1096 = vpop.f32.mrb[0].mxu0
      %v1097 = vadd.f32 0.0, %v1096
      %v1098 = vpop.f32.mrb[0].mxu0
      %1099 = vmatprep.mubr.bf16.mxu0 0
      %1100 = vmatmul.mubr.bf16.gmra.mrb[0].mxu0 %v1013
      %v1101 = vpop.f32.mrb[0].mxu0
      %v1102 = vadd.f32 0.0, %v1101
      %v1103 = vpop.f32.mrb[0].mxu0
      %v1104 = vpop.f32.mrb[0].mxu0
      %v1105 = vadd.f32 0.0, %v1104
      %v1106 = vpop.f32.mrb[0].mxu0
      %1107 = vmatprep.mubr.bf16.mxu0 0
      %1108 = vmatmul.mubr.bf16.gmra.mrb[0].mxu0 %v1015
      %v1109 = vpop.f32.mrb[0].mxu0
      %v1110 = vadd.f32 0.0, %v1109
      %v1111 = vpop.f32.mrb[0].mxu0
      %v1112 = vpop.f32.mrb[0].mxu0
      %v1113 = vadd.f32 0.0, %v1112
      %v1114 = vpop.f32.mrb[0].mxu0
      %1115 = vmatprep.mubr.bf16.mxu0 0
      %1116 = vmatmul.mubr.bf16.gmra.mrb[0].mxu0 %v1017
      %v1117 = vpop.f32.mrb[0].mxu0
      %v1118 = vadd.f32 0.0, %v1117
      %v1119 = vpop.f32.mrb[0].mxu0
      %v1120 = vpop.f32.mrb[0].mxu0
      %v1121 = vadd.f32 0.0, %v1120
      %v1122 = vpop.f32.mrb[0].mxu0
      %1123 = vmatprep.mubr.bf16.mxu0 0
      %1124 = vmatmul.mubr.bf16.gmra.mrb[0].mxu0 %v1019
      %v1125 = vpop.f32.mrb[0].mxu0
      %v1126 = vadd.f32 0.0, %v1125
      %v1127 = vpop.f32.mrb[0].mxu0
      %v1128 = vpop.f32.mrb[0].mxu0
      %v1129 = vadd.f32 0.0, %v1128
      %v1130 = vpop.f32.mrb[0].mxu0
      %1131 = vmatprep.mubr.bf16.mxu0 0
      %1132 = vmatmul.mubr.bf16.gmra.mrb[0].mxu0 %v1021
      %v1133 = vpop.f32.mrb[0].mxu0
      %v1134 = vadd.f32 0.0, %v1133
      %v1135 = vpop.f32.mrb[0].mxu0
      %v1136 = vpop.f32.mrb[0].mxu0
      %v1137 = vadd.f32 0.0, %v1136
      %v1138 = vpop.f32.mrb[0].mxu0
      %1139 = vmatprep.mubr.bf16.mxu0 0
      %1140 = vmatmul.mubr.bf16.gmra.mrb[0].mxu0 %v1023
      %v1141 = vpop.f32.mrb[0].mxu0
      %v1142 = vadd.f32 0.0, %v1141
      %v1143 = vpop.f32.mrb[0].mxu0
      %v1144 = vpop.f32.mrb[0].mxu0
      %v1145 = vadd.f32 0.0, %v1144
      %v1146 = vpop.f32.mrb[0].mxu0
      %1147 = vmatprep.mubr.bf16.mxu0 0
      %1148 = vmatmul.mubr.bf16.gmra.mrb[0].mxu0 %v1025
      %v1149 = vpop.f32.mrb[0].mxu0
      %v1150 = vadd.f32 0.0, %v1149
      %v1151 = vpop.f32.mrb[0].mxu0
      %v1152 = vpop.f32.mrb[0].mxu0
      %v1153 = vadd.f32 0.0, %v1152
      %v1154 = vpop.f32.mrb[0].mxu0
      %1155 = vmatprep.mubr.bf16.mxu0 0
      %1156 = vmatmul.mubr.bf16.gmra.mrb[0].mxu0 %v1027
      %v1157 = vpop.f32.mrb[0].mxu0
      %v1158 = vadd.f32 0.0, %v1157
      %v1159 = vpop.f32.mrb[0].mxu0
      %v1160 = vpop.f32.mrb[0].mxu0
      %v1161 = vadd.f32 0.0, %v1160
      %v1162 = vpop.f32.mrb[0].mxu0
      %1163 = vmatprep.mubr.bf16.mxu0 0
      %1164 = vmatmul.mubr.bf16.gmra.mrb[0].mxu0 %v1029
      %v1165 = vpop.f32.mrb[0].mxu0
      %v1166 = vadd.f32 0.0, %v1165
      %v1167 = vpop.f32.mrb[0].mxu0
      %v1168 = vpop.f32.mrb[0].mxu0
      %v1169 = vadd.f32 0.0, %v1168
      %v1170 = vpop.f32.mrb[0].mxu0
      %1171 = vmatprep.mubr.bf16.mxu0 0
      %1172 = vmatmul.mubr.bf16.gmra.mrb[0].mxu0 %v1031
      %v1173 = vpop.f32.mrb[0].mxu0
      %v1174 = vadd.f32 0.0, %v1173
      %v1175 = vpop.f32.mrb[0].mxu0
      %v1176 = vpop.f32.mrb[0].mxu0
      %v1177 = vadd.f32 0.0, %v1176
      %v1178 = vpop.f32.mrb[0].mxu0
      %1179 = vmatprep.mubr.bf16.mxu0 0
      %1180 = vmatmul.mubr.bf16.gmra.mrb[0].mxu0 %v1033
      %v1181 = vpop.f32.mrb[0].mxu0
      %v1182 = vadd.f32 0.0, %v1181
      %v1183 = vpop.f32.mrb[0].mxu0
      %v1184 = vpop.f32.mrb[0].mxu0
      %v1185 = vadd.f32 0.0, %v1184
      %v1186 = vpop.f32.mrb[0].mxu0
      %1187 = vmatprep.mubr.bf16.mxu0 0
      %1188 = vmatmul.mubr.bf16.gmra.mrb[0].mxu0 %v1035
      %v1189 = vpop.f32.mrb[0].mxu0
      %v1190 = vadd.f32 0.0, %v1189
      %v1191 = vpop.f32.mrb[0].mxu0
      %v1192 = vpop.f32.mrb[0].mxu0
      %v1193 = vadd.f32 0.0, %v1192
      %v1194 = vpop.f32.mrb[0].mxu0
      %1195 = vmatprep.mubr.bf16.mxu0 0
      %1196 = vmatmul.mubr.bf16.gmra.mrb[0].mxu0 %v1037
      %v1197 = vpop.f32.mrb[0].mxu0
      %v1198 = vadd.f32 0.0, %v1197
      %v1199 = vpop.f32.mrb[0].mxu0
      %v1200 = vpop.f32.mrb[0].mxu0
      %v1201 = vadd.f32 0.0, %v1200
      %v1202 = vpop.f32.mrb[0].mxu0
      %1203 = vdwg.mxu0
      %v1206 = vunpack.c.l.b16 %v996
      %v1207 = vunpack.c.l.b16 %v997
      %v1208 = vpack.c.b16 %v1207, %v1206
      %v1209 = vsel %vm1006, %v961, 0
      %v1212 = vsel %vm1039, %v1208, 0
      %1214 = vmatprep.subr.bf16.mxu0 0
      %1215 = vmatpush1.bf16.msra.mxu0 %v1212
      %1216 = vmatprep.subr.bf16.mxu0 0
      %1217 = vmatpush1.bf16.msra.mxu0 0
      %1218 = vmatprep.subr.bf16.mxu0 0
      %1219 = vmatpush1.bf16.msra.mxu0 0
      %1220 = vmatprep.subr.bf16.mxu0 0
      %1221 = vmatpush1.bf16.msra.mxu0 0
      %1222 = vmatprep.subr.bf16.mxu0 0
      %1223 = vmatpush1.bf16.msra.mxu0 0
      %1224 = vmatprep.subr.bf16.mxu0 0
      %1225 = vmatpush1.bf16.msra.mxu0 0
      %1226 = vmatprep.subr.bf16.mxu0 0
      %1227 = vmatpush1.bf16.msra.mxu0 0
      %1228 = vmatprep.subr.bf16.mxu0 0
      %1229 = vmatpush1.bf16.msra.mxu0 0
      %1230 = vmatprep.subr.bf16.mxu0 0
      %1231 = vmatpush1.bf16.msra.mxu0 0
      %1232 = vmatprep.subr.bf16.mxu0 0
      %1233 = vmatpush1.bf16.msra.mxu0 0
      %1234 = vmatprep.subr.bf16.mxu0 0
      %1235 = vmatpush1.bf16.msra.mxu0 0
      %1236 = vmatprep.subr.bf16.mxu0 0
      %1237 = vmatpush1.bf16.msra.mxu0 0
      %1238 = vmatprep.subr.bf16.mxu0 0
      %1239 = vmatpush1.bf16.msra.mxu0 0
      %1240 = vmatprep.subr.bf16.mxu0 0
      %1241 = vmatpush1.bf16.msra.mxu0 0
      %1242 = vmatprep.subr.bf16.mxu0 0
      %1243 = vmatpush1.bf16.msra.mxu0 0
      %1244 = vmatprep.subr.bf16.mxu0 0
      %1245 = vmatpush1.bf16.msra.mxu0 0
      %1246 = vmatprep.mubr.bf16.mxu0 0
      %1247 = vmatmul.mubr.bf16.gmra.mrb[0].mxu0 %v1209
      %v1248 = vpop.f32.mrb[0].mxu0
      %v1249 = vadd.f32 %v1078, %v1248
      %v1250 = vpop.f32.mrb[0].mxu0
      %v1251 = vpop.f32.mrb[0].mxu0
      %v1252 = vadd.f32 %v1081, %v1251
      %v1253 = vpop.f32.mrb[0].mxu0
      %1254 = vmatprep.mubr.bf16.mxu0 0
      %1255 = vmatmul.mubr.bf16.gmra.mrb[0].mxu0 %v1007
      %v1256 = vpop.f32.mrb[0].mxu0
      %v1257 = vadd.f32 %v1086, %v1256
      %v1258 = vpop.f32.mrb[0].mxu0
      %v1259 = vpop.f32.mrb[0].mxu0
      %v1260 = vadd.f32 %v1089, %v1259
      %v1261 = vpop.f32.mrb[0].mxu0
      %1262 = vmatprep.mubr.bf16.mxu0 0
      %1263 = vmatmul.mubr.bf16.gmra.mrb[0].mxu0 %v1009
      %v1264 = vpop.f32.mrb[0].mxu0
      %v1265 = vadd.f32 %v1094, %v1264
      %v1266 = vpop.f32.mrb[0].mxu0
      %v1267 = vpop.f32.mrb[0].mxu0
      %v1268 = vadd.f32 %v1097, %v1267
      %v1269 = vpop.f32.mrb[0].mxu0
      %1270 = vmatprep.mubr.bf16.mxu0 0
      %1271 = vmatmul.mubr.bf16.gmra.mrb[0].mxu0 %v1011
      %v1272 = vpop.f32.mrb[0].mxu0
      %v1273 = vadd.f32 %v1102, %v1272
      %v1274 = vpop.f32.mrb[0].mxu0
      %v1275 = vpop.f32.mrb[0].mxu0
      %v1276 = vadd.f32 %v1105, %v1275
      %v1277 = vpop.f32.mrb[0].mxu0
      %1278 = vmatprep.mubr.bf16.mxu0 0
      %1279 = vmatmul.mubr.bf16.gmra.mrb[0].mxu0 %v1013
      %v1280 = vpop.f32.mrb[0].mxu0
      %v1281 = vadd.f32 %v1110, %v1280
      %v1282 = vpop.f32.mrb[0].mxu0
      %v1283 = vpop.f32.mrb[0].mxu0
      %v1284 = vadd.f32 %v1113, %v1283
      %v1285 = vpop.f32.mrb[0].mxu0
      %1286 = vmatprep.mubr.bf16.mxu0 0
      %1287 = vmatmul.mubr.bf16.gmra.mrb[0].mxu0 %v1015
      %v1288 = vpop.f32.mrb[0].mxu0
      %v1289 = vadd.f32 %v1118, %v1288
      %v1290 = vpop.f32.mrb[0].mxu0
      %v1291 = vpop.f32.mrb[0].mxu0
      %v1292 = vadd.f32 %v1121, %v1291
      %v1293 = vpop.f32.mrb[0].mxu0
      %1294 = vmatprep.mubr.bf16.mxu0 0
      %1295 = vmatmul.mubr.bf16.gmra.mrb[0].mxu0 %v1017
      %v1296 = vpop.f32.mrb[0].mxu0
      %v1297 = vadd.f32 %v1126, %v1296
      %v1298 = vpop.f32.mrb[0].mxu0
      %v1299 = vpop.f32.mrb[0].mxu0
      %v1300 = vadd.f32 %v1129, %v1299
      %v1301 = vpop.f32.mrb[0].mxu0
      %1302 = vmatprep.mubr.bf16.mxu0 0
      %1303 = vmatmul.mubr.bf16.gmra.mrb[0].mxu0 %v1019
      %v1304 = vpop.f32.mrb[0].mxu0
      %v1305 = vadd.f32 %v1134, %v1304
      %v1306 = vpop.f32.mrb[0].mxu0
      %v1307 = vpop.f32.mrb[0].mxu0
      %v1308 = vadd.f32 %v1137, %v1307
      %v1309 = vpop.f32.mrb[0].mxu0
      %1310 = vmatprep.mubr.bf16.mxu0 0
      %1311 = vmatmul.mubr.bf16.gmra.mrb[0].mxu0 %v1021
      %v1312 = vpop.f32.mrb[0].mxu0
      %v1313 = vadd.f32 %v1142, %v1312
      %v1314 = vpop.f32.mrb[0].mxu0
      %v1315 = vpop.f32.mrb[0].mxu0
      %v1316 = vadd.f32 %v1145, %v1315
      %v1317 = vpop.f32.mrb[0].mxu0
      %1318 = vmatprep.mubr.bf16.mxu0 0
      %1319 = vmatmul.mubr.bf16.gmra.mrb[0].mxu0 %v1023
      %v1320 = vpop.f32.mrb[0].mxu0
      %v1321 = vadd.f32 %v1150, %v1320
      %v1322 = vpop.f32.mrb[0].mxu0
      %v1323 = vpop.f32.mrb[0].mxu0
      %v1324 = vadd.f32 %v1153, %v1323
      %v1325 = vpop.f32.mrb[0].mxu0
      %1326 = vmatprep.mubr.bf16.mxu0 0
      %1327 = vmatmul.mubr.bf16.gmra.mrb[0].mxu0 %v1025
      %v1328 = vpop.f32.mrb[0].mxu0
      %v1329 = vadd.f32 %v1158, %v1328
      %v1330 = vpop.f32.mrb[0].mxu0
      %v1331 = vpop.f32.mrb[0].mxu0
      %v1332 = vadd.f32 %v1161, %v1331
      %v1333 = vpop.f32.mrb[0].mxu0
      %1334 = vmatprep.mubr.bf16.mxu0 0
      %1335 = vmatmul.mubr.bf16.gmra.mrb[0].mxu0 %v1027
      %v1336 = vpop.f32.mrb[0].mxu0
      %v1337 = vadd.f32 %v1166, %v1336
      %v1338 = vpop.f32.mrb[0].mxu0
      %v1339 = vpop.f32.mrb[0].mxu0
      %v1340 = vadd.f32 %v1169, %v1339
      %v1341 = vpop.f32.mrb[0].mxu0
      %1342 = vmatprep.mubr.bf16.mxu0 0
      %1343 = vmatmul.mubr.bf16.gmra.mrb[0].mxu0 %v1029
      %v1344 = vpop.f32.mrb[0].mxu0
      %v1345 = vadd.f32 %v1174, %v1344
      %v1346 = vpop.f32.mrb[0].mxu0
      %v1347 = vpop.f32.mrb[0].mxu0
      %v1348 = vadd.f32 %v1177, %v1347
      %v1349 = vpop.f32.mrb[0].mxu0
      %1350 = vmatprep.mubr.bf16.mxu0 0
      %1351 = vmatmul.mubr.bf16.gmra.mrb[0].mxu0 %v1031
      %v1352 = vpop.f32.mrb[0].mxu0
      %v1353 = vadd.f32 %v1182, %v1352
      %v1354 = vpop.f32.mrb[0].mxu0
      %v1355 = vpop.f32.mrb[0].mxu0
      %v1356 = vadd.f32 %v1185, %v1355
      %v1357 = vpop.f32.mrb[0].mxu0
      %1358 = vmatprep.mubr.bf16.mxu0 0
      %1359 = vmatmul.mubr.bf16.gmra.mrb[0].mxu0 %v1033
      %v1360 = vpop.f32.mrb[0].mxu0
      %v1361 = vadd.f32 %v1190, %v1360
      %v1362 = vpop.f32.mrb[0].mxu0
      %v1363 = vpop.f32.mrb[0].mxu0
      %v1364 = vadd.f32 %v1193, %v1363
      %v1365 = vpop.f32.mrb[0].mxu0
      %1366 = vmatprep.mubr.bf16.mxu0 0
      %1367 = vmatmul.mubr.bf16.gmra.mrb[0].mxu0 %v1035
      %v1368 = vpop.f32.mrb[0].mxu0
      %v1369 = vadd.f32 %v1198, %v1368
      %v1370 = vpop.f32.mrb[0].mxu0
      %v1371 = vpop.f32.mrb[0].mxu0
      %v1372 = vadd.f32 %v1201, %v1371
      %v1373 = vpop.f32.mrb[0].mxu0
      %1374 = vdwg.mxu0
      %s1375 = scalar_lea.vmem %s421, 16
      %v1376 = vld [vmem:[%s1375] sm:$0xf]
      %v1377 = vld [vmem:[%s1375 + $0x4] sm:$0x3]
      %v1380 = vunpack.c.l.b16 %v1376
      %v1381 = vunpack.c.l.b16 %v1377
      %v1382 = vpack.c.b16 %v1381, %v1380
      %v1383 = vsel %vm1006, %v995, 0
      %v1386 = vsel %vm1039, %v1382, 0
      %1388 = vmatprep.subr.bf16.mxu0 0
      %1389 = vmatpush1.bf16.msra.mxu0 %v1386
      %1390 = vmatprep.subr.bf16.mxu0 0
      %1391 = vmatpush1.bf16.msra.mxu0 0
      %1392 = vmatprep.subr.bf16.mxu0 0
      %1393 = vmatpush1.bf16.msra.mxu0 0
      %1394 = vmatprep.subr.bf16.mxu0 0
      %1395 = vmatpush1.bf16.msra.mxu0 0
      %1396 = vmatprep.subr.bf16.mxu0 0
      %1397 = vmatpush1.bf16.msra.mxu0 0
      %1398 = vmatprep.subr.bf16.mxu0 0
      %1399 = vmatpush1.bf16.msra.mxu0 0
      %1400 = vmatprep.subr.bf16.mxu0 0
      %1401 = vmatpush1.bf16.msra.mxu0 0
      %1402 = vmatprep.subr.bf16.mxu0 0
      %1403 = vmatpush1.bf16.msra.mxu0 0
      %1404 = vmatprep.subr.bf16.mxu0 0
      %1405 = vmatpush1.bf16.msra.mxu0 0
      %1406 = vmatprep.subr.bf16.mxu0 0
      %1407 = vmatpush1.bf16.msra.mxu0 0
      %1408 = vmatprep.subr.bf16.mxu0 0
      %1409 = vmatpush1.bf16.msra.mxu0 0
      %1410 = vmatprep.subr.bf16.mxu0 0
      %1411 = vmatpush1.bf16.msra.mxu0 0
      %1412 = vmatprep.subr.bf16.mxu0 0
      %1413 = vmatpush1.bf16.msra.mxu0 0
      %1414 = vmatprep.subr.bf16.mxu0 0
      %1415 = vmatpush1.bf16.msra.mxu0 0
      %1416 = vmatprep.subr.bf16.mxu0 0
      %1417 = vmatpush1.bf16.msra.mxu0 0
      %1418 = vmatprep.subr.bf16.mxu0 0
      %1419 = vmatpush1.bf16.msra.mxu0 0
      %1420 = vmatprep.mubr.bf16.mxu0 0
      %1421 = vmatmul.mubr.bf16.gmra.mrb[0].mxu0 %v1009
      %v1422 = vpop.f32.mrb[0].mxu0
      %v1423 = vadd.f32 0.0, %v1422
      %v1424 = vpop.f32.mrb[0].mxu0
      %v1425 = vpop.f32.mrb[0].mxu0
      %v1426 = vadd.f32 0.0, %v1425
      %v1427 = vpop.f32.mrb[0].mxu0
      %1428 = vmatprep.mubr.bf16.mxu0 0
      %1429 = vmatmul.mubr.bf16.gmra.mrb[0].mxu0 %v1011
      %v1430 = vpop.f32.mrb[0].mxu0
      %v1431 = vadd.f32 0.0, %v1430
      %v1432 = vpop.f32.mrb[0].mxu0
      %v1433 = vpop.f32.mrb[0].mxu0
      %v1434 = vadd.f32 0.0, %v1433
      %v1435 = vpop.f32.mrb[0].mxu0
      %1436 = vmatprep.mubr.bf16.mxu0 0
      %1437 = vmatmul.mubr.bf16.gmra.mrb[0].mxu0 %v1013
      %v1438 = vpop.f32.mrb[0].mxu0
      %v1439 = vadd.f32 0.0, %v1438
      %v1440 = vpop.f32.mrb[0].mxu0
      %v1441 = vpop.f32.mrb[0].mxu0
      %v1442 = vadd.f32 0.0, %v1441
      %v1443 = vpop.f32.mrb[0].mxu0
      %1444 = vmatprep.mubr.bf16.mxu0 0
      %1445 = vmatmul.mubr.bf16.gmra.mrb[0].mxu0 %v1015
      %v1446 = vpop.f32.mrb[0].mxu0
      %v1447 = vadd.f32 0.0, %v1446
      %v1448 = vpop.f32.mrb[0].mxu0
      %v1449 = vpop.f32.mrb[0].mxu0
      %v1450 = vadd.f32 0.0, %v1449
      %v1451 = vpop.f32.mrb[0].mxu0
      %1452 = vmatprep.mubr.bf16.mxu0 0
      %1453 = vmatmul.mubr.bf16.gmra.mrb[0].mxu0 %v1017
      %v1454 = vpop.f32.mrb[0].mxu0
      %v1455 = vadd.f32 0.0, %v1454
      %v1456 = vpop.f32.mrb[0].mxu0
      %v1457 = vpop.f32.mrb[0].mxu0
      %v1458 = vadd.f32 0.0, %v1457
      %v1459 = vpop.f32.mrb[0].mxu0
      %1460 = vmatprep.mubr.bf16.mxu0 0
      %1461 = vmatmul.mubr.bf16.gmra.mrb[0].mxu0 %v1019
      %v1462 = vpop.f32.mrb[0].mxu0
      %v1463 = vadd.f32 0.0, %v1462
      %v1464 = vpop.f32.mrb[0].mxu0
      %v1465 = vpop.f32.mrb[0].mxu0
      %v1466 = vadd.f32 0.0, %v1465
      %v1467 = vpop.f32.mrb[0].mxu0
      %1468 = vmatprep.mubr.bf16.mxu0 0
      %1469 = vmatmul.mubr.bf16.gmra.mrb[0].mxu0 %v1021
      %v1470 = vpop.f32.mrb[0].mxu0
      %v1471 = vadd.f32 0.0, %v1470
      %v1472 = vpop.f32.mrb[0].mxu0
      %v1473 = vpop.f32.mrb[0].mxu0
      %v1474 = vadd.f32 0.0, %v1473
      %v1475 = vpop.f32.mrb[0].mxu0
      %1476 = vmatprep.mubr.bf16.mxu0 0
      %1477 = vmatmul.mubr.bf16.gmra.mrb[0].mxu0 %v1023
      %v1478 = vpop.f32.mrb[0].mxu0
      %v1479 = vadd.f32 0.0, %v1478
      %v1480 = vpop.f32.mrb[0].mxu0
      %v1481 = vpop.f32.mrb[0].mxu0
      %v1482 = vadd.f32 0.0, %v1481
      %v1483 = vpop.f32.mrb[0].mxu0
      %1484 = vmatprep.mubr.bf16.mxu0 0
      %1485 = vmatmul.mubr.bf16.gmra.mrb[0].mxu0 %v1025
      %v1486 = vpop.f32.mrb[0].mxu0
      %v1487 = vadd.f32 0.0, %v1486
      %v1488 = vpop.f32.mrb[0].mxu0
      %v1489 = vpop.f32.mrb[0].mxu0
      %v1490 = vadd.f32 0.0, %v1489
      %v1491 = vpop.f32.mrb[0].mxu0
      %1492 = vmatprep.mubr.bf16.mxu0 0
      %1493 = vmatmul.mubr.bf16.gmra.mrb[0].mxu0 %v1027
      %v1494 = vpop.f32.mrb[0].mxu0
      %v1495 = vadd.f32 0.0, %v1494
      %v1496 = vpop.f32.mrb[0].mxu0
      %v1497 = vpop.f32.mrb[0].mxu0
      %v1498 = vadd.f32 0.0, %v1497
      %v1499 = vpop.f32.mrb[0].mxu0
      %1500 = vmatprep.mubr.bf16.mxu0 0
      %1501 = vmatmul.mubr.bf16.gmra.mrb[0].mxu0 %v1029
      %v1502 = vpop.f32.mrb[0].mxu0
      %v1503 = vadd.f32 0.0, %v1502
      %v1504 = vpop.f32.mrb[0].mxu0
      %v1505 = vpop.f32.mrb[0].mxu0
      %v1506 = vadd.f32 0.0, %v1505
      %v1507 = vpop.f32.mrb[0].mxu0
      %1508 = vmatprep.mubr.bf16.mxu0 0
      %1509 = vmatmul.mubr.bf16.gmra.mrb[0].mxu0 %v1031
      %v1510 = vpop.f32.mrb[0].mxu0
      %v1511 = vadd.f32 0.0, %v1510
      %v1512 = vpop.f32.mrb[0].mxu0
      %v1513 = vpop.f32.mrb[0].mxu0
      %v1514 = vadd.f32 0.0, %v1513
      %v1515 = vpop.f32.mrb[0].mxu0
      %1516 = vmatprep.mubr.bf16.mxu0 0
      %1517 = vmatmul.mubr.bf16.gmra.mrb[0].mxu0 %v1033
      %v1518 = vpop.f32.mrb[0].mxu0
      %v1519 = vadd.f32 0.0, %v1518
      %v1520 = vpop.f32.mrb[0].mxu0
      %v1521 = vpop.f32.mrb[0].mxu0
      %v1522 = vadd.f32 0.0, %v1521
      %v1523 = vpop.f32.mrb[0].mxu0
      %1524 = vmatprep.mubr.bf16.mxu0 0
      %1525 = vmatmul.mubr.bf16.gmra.mrb[0].mxu0 %v1035
      %v1526 = vpop.f32.mrb[0].mxu0
      %v1527 = vadd.f32 0.0, %v1526
      %v1528 = vpop.f32.mrb[0].mxu0
      %v1529 = vpop.f32.mrb[0].mxu0
      %v1530 = vadd.f32 0.0, %v1529
      %v1531 = vpop.f32.mrb[0].mxu0
      %1532 = vmatprep.mubr.bf16.mxu0 0
      %1533 = vmatmul.mubr.bf16.gmra.mrb[0].mxu0 %v1037
      %v1534 = vpop.f32.mrb[0].mxu0
      %v1535 = vadd.f32 0.0, %v1534
      %v1536 = vpop.f32.mrb[0].mxu0
      %v1537 = vpop.f32.mrb[0].mxu0
      %v1538 = vadd.f32 0.0, %v1537
      %v1539 = vpop.f32.mrb[0].mxu0
      %1540 = vmatprep.mubr.bf16.mxu0 0
      %1541 = vmatmul.mubr.bf16.gmra.mrb[0].mxu0 %v1383
      %v1542 = vpop.f32.mrb[0].mxu0
      %v1543 = vadd.f32 0.0, %v1542
      %v1544 = vpop.f32.mrb[0].mxu0
      %v1545 = vpop.f32.mrb[0].mxu0
      %v1546 = vadd.f32 0.0, %v1545
      %v1547 = vpop.f32.mrb[0].mxu0
      %1548 = vdwg.mxu0
      %v1549 = vadd.f32 %v1249, %v1423
      %v1550 = vadd.f32 %v1252, %v1426
      %v1551 = vadd.f32 %v1257, %v1431
      %v1552 = vadd.f32 %v1260, %v1434
      %v1553 = vadd.f32 %v1265, %v1439
      %v1554 = vadd.f32 %v1268, %v1442
      %v1555 = vadd.f32 %v1273, %v1447
      %v1556 = vadd.f32 %v1276, %v1450
      %v1557 = vadd.f32 %v1281, %v1455
      %v1558 = vadd.f32 %v1284, %v1458
      %v1559 = vadd.f32 %v1289, %v1463
      %v1560 = vadd.f32 %v1292, %v1466
      %v1561 = vadd.f32 %v1297, %v1471
      %v1562 = vadd.f32 %v1300, %v1474
      %v1563 = vadd.f32 %v1305, %v1479
      %v1564 = vadd.f32 %v1308, %v1482
      %v1565 = vadd.f32 %v1313, %v1487
      %v1566 = vadd.f32 %v1316, %v1490
      %v1567 = vadd.f32 %v1321, %v1495
      %v1568 = vadd.f32 %v1324, %v1498
      %v1569 = vadd.f32 %v1329, %v1503
      %v1570 = vadd.f32 %v1332, %v1506
      %v1571 = vadd.f32 %v1337, %v1511
      %v1572 = vadd.f32 %v1340, %v1514
      %v1573 = vadd.f32 %v1345, %v1519
      %v1574 = vadd.f32 %v1348, %v1522
      %v1575 = vadd.f32 %v1353, %v1527
      %v1576 = vadd.f32 %v1356, %v1530
      %v1577 = vadd.f32 %v1361, %v1535
      %v1578 = vadd.f32 %v1364, %v1538
      %v1579 = vadd.f32 %v1369, %v1543
      %v1580 = vadd.f32 %v1372, %v1546
      %v1581 = vld [vmem:[%s424] sm:$0x1]
      %v1583 = vlaneseq
      %v1584 = vshrl.u32 %v1583, 7
      %v1585 = vsub.s32 0, %v1584
      %v1586 = vrot.slane %v1581, %v1585
      %v1588 = vadd.f32 %v1549, %v1586
      %v1589 = vadd.f32 %v1550, %v1586
      %v1590 = vadd.f32 %v1551, %v1586
      %v1591 = vadd.f32 %v1552, %v1586
      %v1592 = vadd.f32 %v1553, %v1586
      %v1593 = vadd.f32 %v1554, %v1586
      %v1594 = vadd.f32 %v1555, %v1586
      %v1595 = vadd.f32 %v1556, %v1586
      %v1596 = vadd.f32 %v1557, %v1586
      %v1597 = vadd.f32 %v1558, %v1586
      %v1598 = vadd.f32 %v1559, %v1586
      %v1599 = vadd.f32 %v1560, %v1586
      %v1600 = vadd.f32 %v1561, %v1586
      %v1601 = vadd.f32 %v1562, %v1586
      %v1602 = vadd.f32 %v1563, %v1586
      %v1603 = vadd.f32 %v1564, %v1586
      %v1604 = vadd.f32 %v1565, %v1586
      %v1605 = vadd.f32 %v1566, %v1586
      %v1606 = vadd.f32 %v1567, %v1586
      %v1607 = vadd.f32 %v1568, %v1586
      %v1608 = vadd.f32 %v1569, %v1586
      %v1609 = vadd.f32 %v1570, %v1586
      %v1610 = vadd.f32 %v1571, %v1586
      %v1611 = vadd.f32 %v1572, %v1586
      %v1612 = vadd.f32 %v1573, %v1586
      %v1613 = vadd.f32 %v1574, %v1586
      %v1614 = vadd.f32 %v1575, %v1586
      %v1615 = vadd.f32 %v1576, %v1586
      %v1616 = vadd.f32 %v1577, %v1586
      %v1617 = vadd.f32 %v1578, %v1586
      %v1618 = vadd.f32 %v1579, %v1586
      %v1619 = vadd.f32 %v1580, %v1586
      %v1620 = vmax.f32 %v1588, 0.0
      %v1621 = vmax.f32 %v1589, 0.0
      %v1622 = vmax.f32 %v1590, 0.0
      %v1623 = vmax.f32 %v1591, 0.0
      %v1624 = vmax.f32 %v1592, 0.0
      %v1625 = vmax.f32 %v1593, 0.0
      %v1626 = vmax.f32 %v1594, 0.0
      %v1627 = vmax.f32 %v1595, 0.0
      %v1628 = vmax.f32 %v1596, 0.0
      %v1629 = vmax.f32 %v1597, 0.0
      %v1630 = vmax.f32 %v1598, 0.0
      %v1631 = vmax.f32 %v1599, 0.0
      %v1632 = vmax.f32 %v1600, 0.0
      %v1633 = vmax.f32 %v1601, 0.0
      %v1634 = vmax.f32 %v1602, 0.0
      %v1635 = vmax.f32 %v1603, 0.0
      %v1636 = vmax.f32 %v1604, 0.0
      %v1637 = vmax.f32 %v1605, 0.0
      %v1638 = vmax.f32 %v1606, 0.0
      %v1639 = vmax.f32 %v1607, 0.0
      %v1640 = vmax.f32 %v1608, 0.0
      %v1641 = vmax.f32 %v1609, 0.0
      %v1642 = vmax.f32 %v1610, 0.0
      %v1643 = vmax.f32 %v1611, 0.0
      %v1644 = vmax.f32 %v1612, 0.0
      %v1645 = vmax.f32 %v1613, 0.0
      %v1646 = vmax.f32 %v1614, 0.0
      %v1647 = vmax.f32 %v1615, 0.0
      %v1648 = vmax.f32 %v1616, 0.0
      %v1649 = vmax.f32 %v1617, 0.0
      %v1650 = vmax.f32 %v1618, 0.0
      %v1651 = vmax.f32 %v1619, 0.0
      %v1652 = vpack.c.bf16 %v1621, %v1620
      %v1653 = vpack.c.bf16 %v1623, %v1622
      %v1654 = vpack.c.bf16 %v1625, %v1624
      %v1655 = vpack.c.bf16 %v1627, %v1626
      %v1656 = vpack.c.bf16 %v1629, %v1628
      %v1657 = vpack.c.bf16 %v1631, %v1630
      %v1658 = vpack.c.bf16 %v1633, %v1632
      %v1659 = vpack.c.bf16 %v1635, %v1634
      %v1660 = vpack.c.bf16 %v1637, %v1636
      %v1661 = vpack.c.bf16 %v1639, %v1638
      %v1662 = vpack.c.bf16 %v1641, %v1640
      %v1663 = vpack.c.bf16 %v1643, %v1642
      %v1664 = vpack.c.bf16 %v1645, %v1644
      %v1665 = vpack.c.bf16 %v1647, %v1646
      %v1666 = vpack.c.bf16 %v1649, %v1648
      %v1667 = vpack.c.bf16 %v1651, %v1650
      %v1684 = vunpack.c.l.b16 %v1652
      %v1685 = vunpack.c.h.b16 %v1652
      %v1686 = vunpack.c.l.b16 %v1653
      %v1687 = vunpack.c.h.b16 %v1653
      %v1688 = vunpack.c.l.b16 %v1654
      %v1689 = vunpack.c.h.b16 %v1654
      %v1690 = vunpack.c.l.b16 %v1655
      %v1691 = vunpack.c.h.b16 %v1655
      %v1692 = vunpack.c.l.b16 %v1656
      %v1693 = vunpack.c.h.b16 %v1656
      %v1694 = vunpack.c.l.b16 %v1657
      %v1695 = vunpack.c.h.b16 %v1657
      %v1696 = vunpack.c.l.b16 %v1658
      %v1697 = vunpack.c.h.b16 %v1658
      %v1698 = vunpack.c.l.b16 %v1659
      %v1699 = vunpack.c.h.b16 %v1659
      %v1700 = vunpack.c.l.b16 %v1660
      %v1701 = vunpack.c.h.b16 %v1660
      %v1702 = vunpack.c.l.b16 %v1661
      %v1703 = vunpack.c.h.b16 %v1661
      %v1704 = vunpack.c.l.b16 %v1662
      %v1705 = vunpack.c.h.b16 %v1662
      %v1706 = vunpack.c.l.b16 %v1663
      %v1707 = vunpack.c.h.b16 %v1663
      %v1708 = vunpack.c.l.b16 %v1664
      %v1709 = vunpack.c.h.b16 %v1664
      %v1710 = vunpack.c.l.b16 %v1665
      %v1711 = vunpack.c.h.b16 %v1665
      %v1712 = vunpack.c.l.b16 %v1666
      %v1713 = vunpack.c.h.b16 %v1666
      %v1714 = vunpack.c.l.b16 %v1667
      %v1715 = vunpack.c.h.b16 %v1667
      %v1716 = vpack.c.b16 %v1684, %v1684
      %v1717 = vpack.c.b16 %v1685, %v1685
      %v1718 = vpack.c.b16 %v1686, %v1686
      %v1719 = vpack.c.b16 %v1687, %v1687
      %v1720 = vpack.c.b16 %v1688, %v1688
      %v1721 = vpack.c.b16 %v1689, %v1689
      %v1722 = vpack.c.b16 %v1690, %v1690
      %v1723 = vpack.c.b16 %v1691, %v1691
      %v1724 = vpack.c.b16 %v1692, %v1692
      %v1725 = vpack.c.b16 %v1693, %v1693
      %v1726 = vpack.c.b16 %v1694, %v1694
      %v1727 = vpack.c.b16 %v1695, %v1695
      %v1728 = vpack.c.b16 %v1696, %v1696
      %v1729 = vpack.c.b16 %v1697, %v1697
      %v1730 = vpack.c.b16 %v1698, %v1698
      %v1731 = vpack.c.b16 %v1699, %v1699
      %v1732 = vpack.c.b16 %v1700, %v1700
      %v1733 = vpack.c.b16 %v1701, %v1701
      %v1734 = vpack.c.b16 %v1702, %v1702
      %v1735 = vpack.c.b16 %v1703, %v1703
      %v1736 = vpack.c.b16 %v1704, %v1704
      %v1737 = vpack.c.b16 %v1705, %v1705
      %v1738 = vpack.c.b16 %v1706, %v1706
      %v1739 = vpack.c.b16 %v1707, %v1707
      %v1740 = vpack.c.b16 %v1708, %v1708
      %v1741 = vpack.c.b16 %v1709, %v1709
      %v1742 = vpack.c.b16 %v1710, %v1710
      %v1743 = vpack.c.b16 %v1711, %v1711
      %v1744 = vpack.c.b16 %v1712, %v1712
      %v1745 = vpack.c.b16 %v1713, %v1713
      %v1746 = vpack.c.b16 %v1714, %v1714
      %v1747 = vpack.c.b16 %v1715, %v1715
      %1780 = vst [vmem:[%s437] sm:$0xf] %v1716
      %1781 = vst [vmem:[%s437 + $0x4] sm:$0xf] %v1717
      %1782 = vst [vmem:[%s437 + $0x8] sm:$0xf] %v1718
      %1783 = vst [vmem:[%s437 + $0xc] sm:$0xf] %v1719
      %1784 = vst [vmem:[%s437 + $0x10] sm:$0xf] %v1720
      %1785 = vst [vmem:[%s437 + $0x14] sm:$0xf] %v1721
      %1786 = vst [vmem:[%s437 + $0x18] sm:$0xf] %v1722
      %1787 = vst [vmem:[%s437 + $0x1c] sm:$0xf] %v1723
      %1788 = vst [vmem:[%s437 + $0x20] sm:$0xf] %v1724
      %1789 = vst [vmem:[%s437 + $0x24] sm:$0xf] %v1725
      %1790 = vst [vmem:[%s437 + $0x28] sm:$0xf] %v1726
      %1791 = vst [vmem:[%s437 + $0x2c] sm:$0xf] %v1727
      %1792 = vst [vmem:[%s437 + $0x30] sm:$0xf] %v1728
      %1793 = vst [vmem:[%s437 + $0x34] sm:$0xf] %v1729
      %1794 = vst [vmem:[%s437 + $0x38] sm:$0xf] %v1730
      %1795 = vst [vmem:[%s437 + $0x3c] sm:$0xf] %v1731
      %1796 = vst [vmem:[%s437 + $0x40] sm:$0xf] %v1732
      %1797 = vst [vmem:[%s437 + $0x44] sm:$0xf] %v1733
      %1798 = vst [vmem:[%s437 + $0x48] sm:$0xf] %v1734
      %1799 = vst [vmem:[%s437 + $0x4c] sm:$0xf] %v1735
      %1800 = vst [vmem:[%s437 + $0x50] sm:$0xf] %v1736
      %1801 = vst [vmem:[%s437 + $0x54] sm:$0xf] %v1737
      %1802 = vst [vmem:[%s437 + $0x58] sm:$0xf] %v1738
      %1803 = vst [vmem:[%s437 + $0x5c] sm:$0xf] %v1739
      %1804 = vst [vmem:[%s437 + $0x60] sm:$0xf] %v1740
      %1805 = vst [vmem:[%s437 + $0x64] sm:$0xf] %v1741
      %1806 = vst [vmem:[%s437 + $0x68] sm:$0xf] %v1742
      %1807 = vst [vmem:[%s437 + $0x6c] sm:$0xf] %v1743
      %1808 = vst [vmem:[%s437 + $0x70] sm:$0xf] %v1744
      %1809 = vst [vmem:[%s437 + $0x74] sm:$0xf] %v1745
      %1810 = vst [vmem:[%s437 + $0x78] sm:$0xf] %v1746
      %1811 = vst [vmem:[%s437 + $0x7c] sm:$0xf] %v1747
      %s1812 = smul.u32 16, %s23
      %p1813 = scmp.lt.s32.totalorder %s21, 1
      %s1814 = scalar_select %p1813, %s21, 1
      %p1815 = scmp.lt.s32.totalorder %s1812, 15
      %s1816 = scalar_select %p1815, %s1812, 15
      %p1817 = scmp.lt.s32.totalorder %s22, 0
      %s1818 = scalar_select %p1817, %s22, 0
      %s1819 = smul.addr %s1816, 2
      %s1820 = sadd.s32 %s1818, %s1819
      %s1821 = smul.addr %s1814, 32
      %s1822 = sadd.s32 %s1820, %s1821
      %s1823 = smul.addr %s1822, 4
      %s1824 = scalar_lea.vmem %s5, %s1823
      // Predicated region
      $region41: #{_lambda_.3} parent=39 // pred_check
        %p1825 = pneg %p209
      $region42: #{_lambda_.3} parent=39 // pred_check_branch
        %1827 = sbr.rel (%p1825) target = $region44
      $region43: #{_lambda_.3} parent=39 // pred_region
        %s1828 = smul.u32 16, %s23
      $region44: #{_lambda_.3} parent=39 // pred_fallthru
        _
    $region40: #{_lambda_.3} parent=5 // pred_fallthru
      _
    %p1829 = scmp.le.s32.totalorder 2, %s11
    // Predicated region
    $region45: #{_lambda_.3} parent=5 // pred_check
      %p1830 = pneg %p1829
    $region46: #{_lambda_.3} parent=5 // pred_check_branch
      %1832 = sbr.rel (%p1830) target = $region48
    $region47: #{_lambda_.3} parent=5 // pred_region
      %s1833 = ssub.s32 %s11, 2
      // Predicated region
      $region49: #{_lambda_.3} parent=47 // pred_check
        %p1834 = pneg %p215
      $region50: #{_lambda_.3} parent=47 // pred_check_branch
        %1836 = sbr.rel (%p1834) target = $region52
      $region51: #{_lambda_.3} parent=47 // pred_region
        %s1837 = smul.u32 16, %s26
        %p1838 = scmp.lt.s32.totalorder %s24, 1
        %s1839 = scalar_select %p1838, %s24, 1
        %p1840 = scmp.lt.s32.totalorder %s1837, 15
        %s1841 = scalar_select %p1840, %s1837, 15
        %p1842 = scmp.lt.s32.totalorder %s25, 0
        %s1843 = scalar_select %p1842, %s25, 0
        %s1844 = smul.addr %s1841, 2
        %s1845 = sadd.s32 %s1843, %s1844
        %s1846 = smul.addr %s1839, 32
        %s1847 = sadd.s32 %s1845, %s1846
        %s1848 = smul.addr %s1847, 4
        %s1849 = scalar_lea.vmem %s5, %s1848
      $region52: #{_lambda_.3} parent=47 // pred_fallthru
        _
    $region48: #{_lambda_.3} parent=5 // pred_fallthru
      _
  $region6: #{_lambda_.3} parent=0 // loop_footer
    %s15 = sadd.s32 1, %s11
  $region7: #{_lambda_.3} parent=0 // loop_footer_branch
    %10 = sbr.rel target = $region3
  $region8: #{_lambda_.3} parent=0 // loop_exit
    _

// kernel: _lambda_.4
$region0: #{_lambda_.4}
  #allocation0 [shape = 'u32[]', space=smem, size = 0x4, offset = 0x4, fixed_abs, tag = 'smem constant byte address 0x4 - core index']
  #allocation1 [shape = 'u32[144,128]{1,0:T(1,128)}', space=vmem, size = 0x12000, scoped, tag = 'internal scratch']
  %s0 = inlined_call_operand.vmem [shape: bf16[2,16,16,8], index: 0, kind: input, shape index: {}, may-alias: {0,1,2}]
  %s1 = inlined_call_operand.vmem [shape: bf16[2,16,16,8], index: 1, kind: input, shape index: {}, may-alias: {0,1,2}]
  %s2 = inlined_call_operand.vmem [shape: bf16[2,16,16,8], index: 2, kind: input, shape index: {}, may-alias: {0,1,2}]
  %s3 = inlined_call_operand.vmem [shape: bf16[3,24,128], index: 3, kind: input, shape index: {}]
  %s4 = inlined_call_operand.vmem [shape: f32[1,128], index: 4, kind: input, shape index: {}]
  %s5 = inlined_call_operand.vmem [shape: bf16[2,16,16,128], index: 5, kind: output, shape index: {}]
  %s6 = sld [smem:[#allocation0]]
  $region53: #{_lambda_.4} parent=0
    _
  %s8 = ssub.s32 1, %s6
  %s9 = scalar_select 0, %s8, %s6
  loop: start=0, step=1, limit=4
  $region2: #{_lambda_.4} parent=0 // loop_pre_header
    _
  $region3: #{_lambda_.4} parent=0 // loop_header
    %s11 = sphi 0, %s15
    %p12 = scmp.ge.s32.totalorder %s11, 4
    %s18 = sphi 0, %s37
    %s19 = sphi 0, %s33
    %s20 = sphi 0, %s29
    %s21 = sphi 0, %s18
    %s22 = sphi 0, %s19
    %s23 = sphi 0, %s20
    %s24 = sphi 0, %s21
    %s25 = sphi 0, %s22
    %s26 = sphi 0, %s23
    %s42 = sphi 0, %s44
    %s45 = sphi 0, %s42
    %s46 = sphi 0, %s45
    %s62 = sphi 0, %s46
    %s78 = sphi 0, %s80
    %s81 = sphi 0, %s78
    %s82 = sphi 0, %s81
    %s98 = sphi 0, %s82
    %s114 = sphi 0, %s116
    %s117 = sphi 0, %s114
    %s118 = sphi 0, %s117
    %s134 = sphi 0, %s118
    %s140 = sphi 0, %s142
    %s143 = sphi 0, %s140
    %s144 = sphi 0, %s143
    %s160 = sphi 0, %s144
    %s166 = sphi 0, %s168
    %s169 = sphi 0, %s166
    %s170 = sphi 0, %s169
    %s186 = sphi 0, %s170
    %s196 = sphi 0, %s198
    %s199 = sphi 0, %s196
    %s200 = sphi 0, %s199
    %s216 = sphi 0, %s200
  $region4: #{_lambda_.4} parent=0 // loop_header_branch
    %14 = sbr.rel (%p12) target = $region8
  $region5: #{_lambda_.4} parent=0 // loop_body
    %s16 = ssub.s32 %s11, 1
    %s17 = ssub.s32 %s11, 2
    %s27 = sadd.s32 1, %s20
    %p28 = scmp.ge.s32.totalorder %s27, 1
    %s29 = scalar_select %p28, 0, %s27
    %s30 = sadd.s32 1, %s19
    %s31 = scalar_select %p28, %s30, %s19
    %p32 = scmp.ge.s32.totalorder %s31, 1
    %s33 = scalar_select %p32, 0, %s31
    %s34 = sadd.s32 1, %s18
    %s35 = scalar_select %p32, %s34, %s18
    %p36 = scmp.ge.s32.totalorder %s35, 2
    %s37 = scalar_select %p36, 0, %s35
    %s38 = ssub.s32 %s18, %s37
    %s39 = ssub.s32 %s20, %s29
    %s40 = sor.u32 %s38, %s39
    %p41 = scmp.eq.s32.totalorder %s40, 0
    %s43 = sadd.s32 %s42, 1
    %s44 = scalar_select %p41, %s42, %s43
    %p47 = pneg %p41
    %p48 = scmp.eq.s32.totalorder %s11, 1
    %p49 = por %p47, %p48
    %p50 = scmp.ne.s32.totalorder %s42, %s45
    %p51 = scmp.eq.s32.totalorder %s11, 0
    %p52 = por %p50, %p51
    %p53 = scmp.ne.s32.totalorder %s42, %s45
    %p54 = scmp.eq.s32.totalorder %s16, 1
    %p55 = por %p53, %p54
    %p56 = scmp.ne.s32.totalorder %s45, %s46
    %p57 = scmp.eq.s32.totalorder %s16, 0
    %p58 = por %p56, %p57
    %p59 = scmp.ne.s32.totalorder %s45, %s46
    %p60 = scmp.eq.s32.totalorder %s17, 1
    %p61 = por %p59, %p60
    %p63 = scmp.ne.s32.totalorder %s46, %s62
    %p64 = scmp.eq.s32.totalorder %s17, 0
    %p65 = por %p63, %p64
    %s66 = smul.u32 %s20, 16
    %s67 = ssub.s32 %s66, 1
    %p68 = scmp.gt.s32.totalorder %s67, 0
    %s69 = scalar_select %p68, %s67, 0
    %s70 = smul.u32 %s29, 16
    %s71 = ssub.s32 %s70, 1
    %p72 = scmp.gt.s32.totalorder %s71, 0
    %s73 = scalar_select %p72, %s71, 0
    %s74 = ssub.s32 %s18, %s37
    %s75 = ssub.s32 %s69, %s73
    %s76 = sor.u32 %s74, %s75
    %p77 = scmp.eq.s32.totalorder %s76, 0
    %s79 = sadd.s32 %s78, 1
    %s80 = scalar_select %p77, %s78, %s79
    %p83 = pneg %p77
    %p84 = scmp.eq.s32.totalorder %s11, 1
    %p85 = por %p83, %p84
    %p86 = scmp.ne.s32.totalorder %s78, %s81
    %p87 = scmp.eq.s32.totalorder %s11, 0
    %p88 = por %p86, %p87
    %p89 = scmp.ne.s32.totalorder %s78, %s81
    %p90 = scmp.eq.s32.totalorder %s16, 1
    %p91 = por %p89, %p90
    %p92 = scmp.ne.s32.totalorder %s81, %s82
    %p93 = scmp.eq.s32.totalorder %s16, 0
    %p94 = por %p92, %p93
    %p95 = scmp.ne.s32.totalorder %s81, %s82
    %p96 = scmp.eq.s32.totalorder %s17, 1
    %p97 = por %p95, %p96
    %p99 = scmp.ne.s32.totalorder %s82, %s98
    %p100 = scmp.eq.s32.totalorder %s17, 0
    %p101 = por %p99, %p100
    %s102 = smul.u32 %s20, 16
    %s103 = sadd.s32 %s102, 16
    %p104 = scmp.lt.s32.totalorder %s103, 15
    %s105 = scalar_select %p104, %s103, 15
    %s106 = smul.u32 %s29, 16
    %s107 = sadd.s32 %s106, 16
    %p108 = scmp.lt.s32.totalorder %s107, 15
    %s109 = scalar_select %p108, %s107, 15
    %s110 = ssub.s32 %s18, %s37
    %s111 = ssub.s32 %s105, %s109
    %s112 = sor.u32 %s110, %s111
    %p113 = scmp.eq.s32.totalorder %s112, 0
    %s115 = sadd.s32 %s114, 1
    %s116 = scalar_select %p113, %s114, %s115
    %p119 = pneg %p113
    %p120 = scmp.eq.s32.totalorder %s11, 1
    %p121 = por %p119, %p120
    %p122 = scmp.ne.s32.totalorder %s114, %s117
    %p123 = scmp.eq.s32.totalorder %s11, 0
    %p124 = por %p122, %p123
    %p125 = scmp.ne.s32.totalorder %s114, %s117
    %p126 = scmp.eq.s32.totalorder %s16, 1
    %p127 = por %p125, %p126
    %p128 = scmp.ne.s32.totalorder %s117, %s118
    %p129 = scmp.eq.s32.totalorder %s16, 0
    %p130 = por %p128, %p129
    %p131 = scmp.ne.s32.totalorder %s117, %s118
    %p132 = scmp.eq.s32.totalorder %s17, 1
    %p133 = por %p131, %p132
    %p135 = scmp.ne.s32.totalorder %s118, %s134
    %p136 = scmp.eq.s32.totalorder %s17, 0
    %p137 = por %p135, %p136
    %s138 = ssub.s32 %s19, %s33
    %p139 = scmp.eq.s32.totalorder %s138, 0
    %s141 = sadd.s32 %s140, 1
    %s142 = scalar_select %p139, %s140, %s141
    %p145 = pneg %p139
    %p146 = scmp.eq.s32.totalorder %s11, 1
    %p147 = por %p145, %p146
    %p148 = scmp.ne.s32.totalorder %s140, %s143
    %p149 = scmp.eq.s32.totalorder %s11, 0
    %p150 = por %p148, %p149
    %p151 = scmp.ne.s32.totalorder %s140, %s143
    %p152 = scmp.eq.s32.totalorder %s16, 1
    %p153 = por %p151, %p152
    %p154 = scmp.ne.s32.totalorder %s143, %s144
    %p155 = scmp.eq.s32.totalorder %s16, 0
    %p156 = por %p154, %p155
    %p157 = scmp.ne.s32.totalorder %s143, %s144
    %p158 = scmp.eq.s32.totalorder %s17, 1
    %p159 = por %p157, %p158
    %p161 = scmp.ne.s32.totalorder %s144, %s160
    %p162 = scmp.eq.s32.totalorder %s17, 0
    %p163 = por %p161, %p162
    %s164 = ssub.s32 %s19, %s33
    %p165 = scmp.eq.s32.totalorder %s164, 0
    %s167 = sadd.s32 %s166, 1
    %s168 = scalar_select %p165, %s166, %s167
    %p171 = pneg %p165
    %p172 = scmp.eq.s32.totalorder %s11, 1
    %p173 = por %p171, %p172
    %p174 = scmp.ne.s32.totalorder %s166, %s169
    %p175 = scmp.eq.s32.totalorder %s11, 0
    %p176 = por %p174, %p175
    %p177 = scmp.ne.s32.totalorder %s166, %s169
    %p178 = scmp.eq.s32.totalorder %s16, 1
    %p179 = por %p177, %p178
    %p180 = scmp.ne.s32.totalorder %s169, %s170
    %p181 = scmp.eq.s32.totalorder %s16, 0
    %p182 = por %p180, %p181
    %p183 = scmp.ne.s32.totalorder %s169, %s170
    %p184 = scmp.eq.s32.totalorder %s17, 1
    %p185 = por %p183, %p184
    %p187 = scmp.ne.s32.totalorder %s170, %s186
    %p188 = scmp.eq.s32.totalorder %s17, 0
    %p189 = por %p187, %p188
    %s190 = ssub.s32 %s18, %s37
    %s191 = ssub.s32 %s20, %s29
    %s192 = sor.u32 %s190, %s191
    %s193 = ssub.s32 %s19, %s33
    %s194 = sor.u32 %s192, %s193
    %p195 = scmp.eq.s32.totalorder %s194, 0
    %s197 = sadd.s32 %s196, 1
    %s198 = scalar_select %p195, %s196, %s197
    %p201 = pneg %p195
    %p202 = scmp.eq.s32.totalorder %s11, 1
    %p203 = por %p201, %p202
    %p204 = scmp.ne.s32.totalorder %s196, %s199
    %p205 = scmp.eq.s32.totalorder %s11, 0
    %p206 = por %p204, %p205
    %p207 = scmp.ne.s32.totalorder %s196, %s199
    %p208 = scmp.eq.s32.totalorder %s16, 1
    %p209 = por %p207, %p208
    %p210 = scmp.ne.s32.totalorder %s199, %s200
    %p211 = scmp.eq.s32.totalorder %s16, 0
    %p212 = por %p210, %p211
    %p213 = scmp.ne.s32.totalorder %s199, %s200
    %p214 = scmp.eq.s32.totalorder %s17, 1
    %p215 = por %p213, %p214
    %p217 = scmp.ne.s32.totalorder %s200, %s216
    %p218 = scmp.eq.s32.totalorder %s17, 0
    %p219 = por %p217, %p218
    %p220 = scmp.le.s32.totalorder 1, %s11
    %p221 = scmp.lt.s32.totalorder %s11, 3
    %p222 = pnand %p220, %p221
    %p223 = pneg %p222
    // Predicated region
    $region9: #{_lambda_.4} parent=5 // pred_check
      _
    $region10: #{_lambda_.4} parent=5 // pred_check_branch
      %225 = sbr.rel (%p222) target = $region12
    $region11: #{_lambda_.4} parent=5 // pred_region
      %s226 = ssub.s32 %s11, 1
      // Predicated region
      $region13: #{_lambda_.4} parent=11 // pred_check
        %p227 = pneg %p156
      $region14: #{_lambda_.4} parent=11 // pred_check_branch
        %229 = sbr.rel (%p227) target = $region16
      $region15: #{_lambda_.4} parent=11 // pred_region
        %p230 = scmp.lt.s32.totalorder %s22, 0
        %s231 = scalar_select %p230, %s22, 0
        %s232 = smul.addr %s231, 4
        %s233 = scalar_lea.vmem %s3, %s232
      $region16: #{_lambda_.4} parent=11 // pred_fallthru
        _
      // Predicated region
      $region17: #{_lambda_.4} parent=11 // pred_check
        %p234 = pneg %p182
      $region18: #{_lambda_.4} parent=11 // pred_check_branch
        %236 = sbr.rel (%p234) target = $region20
      $region19: #{_lambda_.4} parent=11 // pred_region
        %p237 = scmp.lt.s32.totalorder %s22, 0
        %s238 = scalar_select %p237, %s22, 0
        %s239 = scalar_lea.vmem %s4, %s238
      $region20: #{_lambda_.4} parent=11 // pred_fallthru
        _
    $region12: #{_lambda_.4} parent=5 // pred_fallthru
      _
    %p240 = scmp.lt.s32.totalorder %s11, 2
    // Predicated region
    $region21: #{_lambda_.4} parent=5 // pred_check
      %p241 = pneg %p240
    $region22: #{_lambda_.4} parent=5 // pred_check_branch
      %243 = sbr.rel (%p241) target = $region24
    $region23: #{_lambda_.4} parent=5 // pred_region
      // Predicated region
      $region25: #{_lambda_.4} parent=23 // pred_check
        %p244 = pneg %p52
      $region26: #{_lambda_.4} parent=23 // pred_check_branch
        %246 = sbr.rel (%p244) target = $region28
      $region27: #{_lambda_.4} parent=23 // pred_region
        %s247 = smul.u32 16, %s20
        %p248 = scmp.lt.s32.totalorder %s18, 1
        %s249 = scalar_select %p248, %s18, 1
        %p250 = scmp.lt.s32.totalorder %s247, 15
        %s251 = scalar_select %p250, %s247, 15
        %s252 = smul.addr %s251, 2
        %s253 = smul.addr %s249, 32
        %s254 = sadd.s32 %s252, %s253
        %s255 = smul.addr %s254, 4
        %s256 = scalar_lea.vmem %s0, %s255
        %s257 = smul.u32 16, %s20
      $region28: #{_lambda_.4} parent=23 // pred_fallthru
        _
      // Predicated region
      $region29: #{_lambda_.4} parent=23 // pred_check
        %p258 = pneg %p88
      $region30: #{_lambda_.4} parent=23 // pred_check_branch
        %260 = sbr.rel (%p258) target = $region32
      $region31: #{_lambda_.4} parent=23 // pred_region
        %s261 = smul.u32 %s20, 16
        %s262 = ssub.s32 %s261, 1
        %p263 = scmp.gt.s32.totalorder %s262, 0
        %s264 = scalar_select %p263, %s262, 0
        %p265 = scmp.lt.s32.totalorder %s18, 1
        %s266 = scalar_select %p265, %s18, 1
        %p267 = scmp.lt.s32.totalorder %s264, 15
        %s268 = scalar_select %p267, %s264, 15
        %s269 = smul.addr %s268, 2
        %s270 = smul.addr %s266, 32
        %s271 = sadd.s32 %s269, %s270
        %s272 = smul.addr %s271, 4
        %s273 = scalar_lea.vmem %s1, %s272
        %s274 = smul.u32 %s20, 16
        %s275 = ssub.s32 %s274, 1
        %p276 = scmp.gt.s32.totalorder %s275, 0
        %s277 = scalar_select %p276, %s275, 0
      $region32: #{_lambda_.4} parent=23 // pred_fallthru
        _
      // Predicated region
      $region33: #{_lambda_.4} parent=23 // pred_check
        %p278 = pneg %p124
      $region34: #{_lambda_.4} parent=23 // pred_check_branch
        %280 = sbr.rel (%p278) target = $region36
      $region35: #{_lambda_.4} parent=23 // pred_region
        %s281 = smul.u32 %s20, 16
        %s282 = sadd.s32 %s281, 16
        %p283 = scmp.lt.s32.totalorder %s282, 15
        %s284 = scalar_select %p283, %s282, 15
        %p285 = scmp.lt.s32.totalorder %s18, 1
        %s286 = scalar_select %p285, %s18, 1
        %p287 = scmp.lt.s32.totalorder %s284, 15
        %s288 = scalar_select %p287, %s284, 15
        %s289 = smul.addr %s288, 2
        %s290 = smul.addr %s286, 32
        %s291 = sadd.s32 %s289, %s290
        %s292 = smul.addr %s291, 4
        %s293 = scalar_lea.vmem %s2, %s292
        %s294 = smul.u32 %s20, 16
        %s295 = sadd.s32 %s294, 16
        %p296 = scmp.lt.s32.totalorder %s295, 15
        %s297 = scalar_select %p296, %s295, 15
      $region36: #{_lambda_.4} parent=23 // pred_fallthru
        _
    $region24: #{_lambda_.4} parent=5 // pred_fallthru
      _
    %p298 = scmp.le.s32.totalorder 1, %s11
    %p299 = scmp.lt.s32.totalorder %s11, 3
    %p300 = pnand %p298, %p299
    %p301 = pneg %p300
    // Predicated region
    $region37: #{_lambda_.4} parent=5 // pred_check
      _
    $region38: #{_lambda_.4} parent=5 // pred_check_branch
      %303 = sbr.rel (%p300) target = $region40
    $region39: #{_lambda_.4} parent=5 // pred_region
      %s304 = ssub.s32 %s11, 1
      %s305 = smul.u32 16, %s23
      %p306 = scmp.lt.s32.totalorder %s21, 1
      %s307 = scalar_select %p306, %s21, 1
      %p308 = scmp.lt.s32.totalorder %s305, 15
      %s309 = scalar_select %p308, %s305, 15
      %s310 = smul.addr %s309, 2
      %s311 = smul.addr %s307, 32
      %s312 = sadd.s32 %s310, %s311
      %s313 = smul.addr %s312, 4
      %s314 = scalar_lea.vmem %s0, %s313
      %p315 = pneg %p58
      %p316 = pneg %p55
      %s317 = smul.u32 %s23, 16
      %s318 = ssub.s32 %s317, 1
      %p319 = scmp.gt.s32.totalorder %s318, 0
      %s320 = scalar_select %p319, %s318, 0
      %p321 = scmp.lt.s32.totalorder %s21, 1
      %s322 = scalar_select %p321, %s21, 1
      %p323 = scmp.lt.s32.totalorder %s320, 15
      %s324 = scalar_select %p323, %s320, 15
      %s325 = smul.addr %s324, 2
      %s326 = smul.addr %s322, 32
      %s327 = sadd.s32 %s325, %s326
      %s328 = smul.addr %s327, 4
      %s329 = scalar_lea.vmem %s1, %s328
      %p330 = pneg %p94
      %p331 = pneg %p91
      %s332 = smul.u32 %s23, 16
      %s333 = sadd.s32 %s332, 16
      %p334 = scmp.lt.s32.totalorder %s333, 15
      %s335 = scalar_select %p334, %s333, 15
      %p336 = scmp.lt.s32.totalorder %s21, 1
      %s337 = scalar_select %p336, %s21, 1
      %p338 = scmp.lt.s32.totalorder %s335, 15
      %s339 = scalar_select %p338, %s335, 15
      %s340 = smul.addr %s339, 2
      %s341 = smul.addr %s337, 32
      %s342 = sadd.s32 %s340, %s341
      %s343 = smul.addr %s342, 4
      %s344 = scalar_lea.vmem %s2, %s343
      %p345 = pneg %p130
      %p346 = pneg %p127
      %p347 = scmp.lt.s32.totalorder %s22, 0
      %s348 = scalar_select %p347, %s22, 0
      %s349 = smul.addr %s348, 4
      %s350 = scalar_lea.vmem %s3, %s349
      %p351 = pneg %p156
      %p352 = pneg %p153
      %p353 = scmp.lt.s32.totalorder %s22, 0
      %s354 = scalar_select %p353, %s22, 0
      %s355 = scalar_lea.vmem %s4, %s354
      %p356 = pneg %p182
      %p357 = pneg %p179
      %p358 = pneg %p212
      %p359 = pneg %p209
      %s360 = smul.u32 16, %s23
      %p361 = scmp.lt.s32.totalorder %s21, 1
      %s362 = scalar_select %p361, %s21, 1
      %p363 = scmp.lt.s32.totalorder %s360, 15
      %s364 = scalar_select %p363, %s360, 15
      %p365 = scmp.lt.s32.totalorder %s22, 0
      %s366 = scalar_select %p365, %s22, 0
      %s367 = smul.addr %s364, 2
      %s368 = sadd.s32 %s366, %s367
      %s369 = smul.addr %s362, 32
      %s370 = sadd.s32 %s368, %s369
      %s371 = smul.addr %s370, 4
      %s372 = scalar_lea.vmem %s5, %s371
      %s373 = smul.u32 16, %s23
      %p374 = scmp.lt.s32.totalorder %s21, 1
      %s375 = scalar_select %p374, %s21, 1
      %p376 = scmp.lt.s32.totalorder %s373, 15
      %s377 = scalar_select %p376, %s373, 15
      %s378 = smul.addr %s377, 2
      %s379 = smul.addr %s375, 32
      %s380 = sadd.s32 %s378, %s379
      %s381 = smul.addr %s380, 4
      %s382 = scalar_lea.vmem %s0, %s381
      %s383 = smul.u32 16, %s23
      %s384 = smul.u32 %s23, 16
      %s385 = ssub.s32 %s384, 1
      %p386 = scmp.gt.s32.totalorder %s385, 0
      %s387 = scalar_select %p386, %s385, 0
      %p388 = scmp.lt.s32.totalorder %s21, 1
      %s389 = scalar_select %p388, %s21, 1
      %p390 = scmp.lt.s32.totalorder %s387, 15
      %s391 = scalar_select %p390, %s387, 15
      %s392 = smul.addr %s391, 2
      %s393 = smul.addr %s389, 32
      %s394 = sadd.s32 %s392, %s393
      %s395 = smul.addr %s394, 4
      %s396 = scalar_lea.vmem %s1, %s395
      %s397 = smul.u32 %s23, 16
      %s398 = ssub.s32 %s397, 1
      %p399 = scmp.gt.s32.totalorder %s398, 0
      %s400 = scalar_select %p399, %s398, 0
      %s401 = smul.u32 %s23, 16
      %s402 = sadd.s32 %s401, 16
      %p403 = scmp.lt.s32.totalorder %s402, 15
      %s404 = scalar_select %p403, %s402, 15
      %p405 = scmp.lt.s32.totalorder %s21, 1
      %s406 = scalar_select %p405, %s21, 1
      %p407 = scmp.lt.s32.totalorder %s404, 15
      %s408 = scalar_select %p407, %s404, 15
      %s409 = smul.addr %s408, 2
      %s410 = smul.addr %s406, 32
      %s411 = sadd.s32 %s409, %s410
      %s412 = smul.addr %s411, 4
      %s413 = scalar_lea.vmem %s2, %s412
      %s414 = smul.u32 %s23, 16
      %s415 = sadd.s32 %s414, 16
      %p416 = scmp.lt.s32.totalorder %s415, 15
      %s417 = scalar_select %p416, %s415, 15
      %p418 = scmp.lt.s32.totalorder %s22, 0
      %s419 = scalar_select %p418, %s22, 0
      %s420 = smul.addr %s419, 4
      %s421 = scalar_lea.vmem %s3, %s420
      %p422 = scmp.lt.s32.totalorder %s22, 0
      %s423 = scalar_select %p422, %s22, 0
      %s424 = scalar_lea.vmem %s4, %s423
      %s425 = smul.u32 16, %s23
      %p426 = scmp.lt.s32.totalorder %s21, 1
      %s427 = scalar_select %p426, %s21, 1
      %p428 = scmp.lt.s32.totalorder %s425, 15
      %s429 = scalar_select %p428, %s425, 15
      %p430 = scmp.lt.s32.totalorder %s22, 0
      %s431 = scalar_select %p430, %s22, 0
      %s432 = smul.addr %s429, 2
      %s433 = sadd.s32 %s431, %s432
      %s434 = smul.addr %s427, 32
      %s435 = sadd.s32 %s433, %s434
      %s436 = smul.addr %s435, 4
      %s437 = scalar_lea.vmem %s5, %s436
      %s438 = smul.u32 16, %s23
      %v440 = vld [vmem:[%s382] sm:$0xf]
      %v441 = vld [vmem:[%s382 + $0x4] sm:$0xf]
      %v442 = vld [vmem:[%s382 + $0x8] sm:$0xf]
      %v443 = vld [vmem:[%s382 + $0xc] sm:$0xf]
      %v444 = vld [vmem:[%s382 + $0x10] sm:$0xf]
      %v445 = vld [vmem:[%s382 + $0x14] sm:$0xf]
      %v446 = vld [vmem:[%s382 + $0x18] sm:$0xf]
      %v447 = vld [vmem:[%s382 + $0x1c] sm:$0xf]
      %v448 = vld [vmem:[%s382 + $0x20] sm:$0xf]
      %v449 = vld [vmem:[%s382 + $0x24] sm:$0xf]
      %v450 = vld [vmem:[%s382 + $0x28] sm:$0xf]
      %v451 = vld [vmem:[%s382 + $0x2c] sm:$0xf]
      %v452 = vld [vmem:[%s382 + $0x30] sm:$0xf]
      %v453 = vld [vmem:[%s382 + $0x34] sm:$0xf]
      %v454 = vld [vmem:[%s382 + $0x38] sm:$0xf]
      %v455 = vld [vmem:[%s382 + $0x3c] sm:$0xf]
      %v456 = vld [vmem:[%s382 + $0x40] sm:$0xf]
      %v457 = vld [vmem:[%s382 + $0x44] sm:$0xf]
      %v458 = vld [vmem:[%s382 + $0x48] sm:$0xf]
      %v459 = vld [vmem:[%s382 + $0x4c] sm:$0xf]
      %v460 = vld [vmem:[%s382 + $0x50] sm:$0xf]
      %v461 = vld [vmem:[%s382 + $0x54] sm:$0xf]
      %v462 = vld [vmem:[%s382 + $0x58] sm:$0xf]
      %v463 = vld [vmem:[%s382 + $0x5c] sm:$0xf]
      %v464 = vld [vmem:[%s382 + $0x60] sm:$0xf]
      %v465 = vld [vmem:[%s382 + $0x64] sm:$0xf]
      %v466 = vld [vmem:[%s382 + $0x68] sm:$0xf]
      %v467 = vld [vmem:[%s382 + $0x6c] sm:$0xf]
      %v468 = vld [vmem:[%s382 + $0x70] sm:$0xf]
      %v469 = vld [vmem:[%s382 + $0x74] sm:$0xf]
      %v470 = vld [vmem:[%s382 + $0x78] sm:$0xf]
      %v471 = vld [vmem:[%s382 + $0x7c] sm:$0xf]
      %v472 = vld [vmem:[%s396] sm:$0xf]
      %v473 = vld [vmem:[%s396 + $0x4] sm:$0xf]
      %v474 = vld [vmem:[%s413] sm:$0xf]
      %v475 = vld [vmem:[%s413 + $0x4] sm:$0xf]
      %p476 = scmp.eq.s32.totalorder %s23, 0
      %s477 = scalar_select %p476, 1, 0
      %v478 = vstv %s477
      %vm479 = vcmp.eq.s32.totalorder %v478, 1
      %v480 = vsel %vm479, 0, %v472
      %v481 = vsel %vm479, 0, %v473
      %v482 = vsel %vm479, 0, %v474
      %v483 = vsel %vm479, 0, %v475
      %v520 = vunpack.c.l.b16 %v480
      %v521 = vunpack.c.l.b16 %v481
      %v522 = vunpack.c.l.b16 %v440
      %v523 = vunpack.c.l.b16 %v441
      %v524 = vunpack.c.l.b16 %v442
      %v525 = vunpack.c.l.b16 %v443
      %v526 = vunpack.c.l.b16 %v444
      %v527 = vunpack.c.l.b16 %v445
      %v528 = vunpack.c.l.b16 %v446
      %v529 = vunpack.c.l.b16 %v447
      %v530 = vunpack.c.l.b16 %v448
      %v531 = vunpack.c.l.b16 %v449
      %v532 = vunpack.c.l.b16 %v450
      %v533 = vunpack.c.l.b16 %v451
      %v534 = vunpack.c.l.b16 %v452
      %v535 = vunpack.c.l.b16 %v453
      %v536 = vunpack.c.l.b16 %v454
      %v537 = vunpack.c.l.b16 %v455
      %v538 = vunpack.c.l.b16 %v456
      %v539 = vunpack.c.l.b16 %v457
      %v540 = vunpack.c.l.b16 %v458
      %v541 = vunpack.c.l.b16 %v459
      %v542 = vunpack.c.l.b16 %v460
      %v543 = vunpack.c.l.b16 %v461
      %v544 = vunpack.c.l.b16 %v462
      %v545 = vunpack.c.l.b16 %v463
      %v546 = vunpack.c.l.b16 %v464
      %v547 = vunpack.c.l.b16 %v465
      %v548 = vunpack.c.l.b16 %v466
      %v549 = vunpack.c.l.b16 %v467
      %v550 = vunpack.c.l.b16 %v468
      %v551 = vunpack.c.l.b16 %v469
      %v552 = vunpack.c.l.b16 %v470
      %v553 = vunpack.c.l.b16 %v471
      %v554 = vunpack.c.l.b16 %v482
      %v555 = vunpack.c.l.b16 %v483
      %v556 = vpack.c.b16 %v521, %v520
      %v557 = vpack.c.b16 %v523, %v522
      %v558 = vpack.c.b16 %v525, %v524
      %v559 = vpack.c.b16 %v527, %v526
      %v560 = vpack.c.b16 %v529, %v528
      %v561 = vpack.c.b16 %v531, %v530
      %v562 = vpack.c.b16 %v533, %v532
      %v563 = vpack.c.b16 %v535, %v534
      %v564 = vpack.c.b16 %v537, %v536
      %v565 = vpack.c.b16 %v539, %v538
      %v566 = vpack.c.b16 %v541, %v540
      %v567 = vpack.c.b16 %v543, %v542
      %v568 = vpack.c.b16 %v545, %v544
      %v569 = vpack.c.b16 %v547, %v546
      %v570 = vpack.c.b16 %v549, %v548
      %v571 = vpack.c.b16 %v551, %v550
      %v572 = vpack.c.b16 %v553, %v552
      %v573 = vpack.c.b16 %v555, %v554
      %v575 = vshrl.u32 %v556, 16
      %v577 = vrot.slane %v575, 7
      %v578 = vshll.u32 %v556, 16
      %v580 = vor.u32 %v577, %v578
      %v582 = vshrl.u32 %v557, 16
      %v584 = vrot.slane %v582, 7
      %v585 = vshll.u32 %v557, 16
      %v587 = vor.u32 %v584, %v585
      %v589 = vshrl.u32 %v558, 16
      %v591 = vrot.slane %v589, 7
      %v592 = vshll.u32 %v558, 16
      %v594 = vor.u32 %v591, %v592
      %v596 = vshrl.u32 %v559, 16
      %v598 = vrot.slane %v596, 7
      %v599 = vshll.u32 %v559, 16
      %v601 = vor.u32 %v598, %v599
      %v603 = vshrl.u32 %v560, 16
      %v605 = vrot.slane %v603, 7
      %v606 = vshll.u32 %v560, 16
      %v608 = vor.u32 %v605, %v606
      %v610 = vshrl.u32 %v561, 16
      %v612 = vrot.slane %v610, 7
      %v613 = vshll.u32 %v561, 16
      %v615 = vor.u32 %v612, %v613
      %v617 = vshrl.u32 %v562, 16
      %v619 = vrot.slane %v617, 7
      %v620 = vshll.u32 %v562, 16
      %v622 = vor.u32 %v619, %v620
      %v624 = vshrl.u32 %v563, 16
      %v626 = vrot.slane %v624, 7
      %v627 = vshll.u32 %v563, 16
      %v629 = vor.u32 %v626, %v627
      %v631 = vshrl.u32 %v564, 16
      %v633 = vrot.slane %v631, 7
      %v634 = vshll.u32 %v564, 16
      %v636 = vor.u32 %v633, %v634
      %v638 = vshrl.u32 %v565, 16
      %v640 = vrot.slane %v638, 7
      %v641 = vshll.u32 %v565, 16
      %v643 = vor.u32 %v640, %v641
      %v645 = vshrl.u32 %v566, 16
      %v647 = vrot.slane %v645, 7
      %v648 = vshll.u32 %v566, 16
      %v650 = vor.u32 %v647, %v648
      %v652 = vshrl.u32 %v567, 16
      %v654 = vrot.slane %v652, 7
      %v655 = vshll.u32 %v567, 16
      %v657 = vor.u32 %v654, %v655
      %v659 = vshrl.u32 %v568, 16
      %v661 = vrot.slane %v659, 7
      %v662 = vshll.u32 %v568, 16
      %v664 = vor.u32 %v661, %v662
      %v666 = vshrl.u32 %v569, 16
      %v668 = vrot.slane %v666, 7
      %v669 = vshll.u32 %v569, 16
      %v671 = vor.u32 %v668, %v669
      %v673 = vshrl.u32 %v570, 16
      %v675 = vrot.slane %v673, 7
      %v676 = vshll.u32 %v570, 16
      %v678 = vor.u32 %v675, %v676
      %v680 = vshrl.u32 %v571, 16
      %v682 = vrot.slane %v680, 7
      %v683 = vshll.u32 %v571, 16
      %v685 = vor.u32 %v682, %v683
      %v687 = vshrl.u32 %v572, 16
      %v689 = vrot.slane %v687, 7
      %v690 = vshll.u32 %v572, 16
      %v692 = vor.u32 %v689, %v690
      %v694 = vshrl.u32 %v573, 16
      %v696 = vrot.slane %v694, 7
      %v697 = vshll.u32 %v573, 16
      %v699 = vor.u32 %v696, %v697
      %vm718 = vcmask 1040384
      %vm719 = vsmask.f32 256
      %vm720 = vmand %vm718, %vm719
      %v721 = vsel %vm720, 0, %v580
      %v722 = vsel %vm720, 0, %v587
      %v723 = vsel %vm720, 0, %v594
      %v724 = vsel %vm720, 0, %v601
      %v725 = vsel %vm720, 0, %v608
      %v726 = vsel %vm720, 0, %v615
      %v727 = vsel %vm720, 0, %v622
      %v728 = vsel %vm720, 0, %v629
      %v729 = vsel %vm720, 0, %v636
      %v730 = vsel %vm720, 0, %v643
      %v731 = vsel %vm720, 0, %v650
      %v732 = vsel %vm720, 0, %v657
      %v733 = vsel %vm720, 0, %v664
      %v734 = vsel %vm720, 0, %v671
      %v735 = vsel %vm720, 0, %v678
      %v736 = vsel %vm720, 0, %v685
      %v737 = vsel %vm720, 0, %v692
      %v738 = vsel %vm720, 0, %v699
      %v739 = vrot.slane %v578, 1
      %v740 = vor.u32 %v575, %v739
      %v741 = vrot.slane %v585, 1
      %v742 = vor.u32 %v582, %v741
      %v743 = vrot.slane %v592, 1
      %v744 = vor.u32 %v589, %v743
      %v745 = vrot.slane %v599, 1
      %v746 = vor.u32 %v596, %v745
      %v747 = vrot.slane %v606, 1
      %v748 = vor.u32 %v603, %v747
      %v749 = vrot.slane %v613, 1
      %v750 = vor.u32 %v610, %v749
      %v751 = vrot.slane %v620, 1
      %v752 = vor.u32 %v617, %v751
      %v753 = vrot.slane %v627, 1
      %v754 = vor.u32 %v624, %v753
      %v755 = vrot.slane %v634, 1
      %v756 = vor.u32 %v631, %v755
      %v757 = vrot.slane %v641, 1
      %v758 = vor.u32 %v638, %v757
      %v759 = vrot.slane %v648, 1
      %v760 = vor.u32 %v645, %v759
      %v761 = vrot.slane %v655, 1
      %v762 = vor.u32 %v652, %v761
      %v763 = vrot.slane %v662, 1
      %v764 = vor.u32 %v659, %v763
      %v765 = vrot.slane %v669, 1
      %v766 = vor.u32 %v666, %v765
      %v767 = vrot.slane %v676, 1
      %v768 = vor.u32 %v673, %v767
      %v769 = vrot.slane %v683, 1
      %v770 = vor.u32 %v680, %v769
      %v771 = vrot.slane %v690, 1
      %v772 = vor.u32 %v687, %v771
      %v773 = vrot.slane %v697, 1
      %v774 = vor.u32 %v694, %v773
      %vm793 = vcmask 1047552
      %vm794 = vsmask.f32 7424
      %vm795 = vmand %vm793, %vm794
      %v796 = vsel %vm795, %v740, 0
      %v797 = vsel %vm795, %v742, 0
      %v798 = vsel %vm795, %v744, 0
      %v799 = vsel %vm795, %v746, 0
      %v800 = vsel %vm795, %v748, 0
      %v801 = vsel %vm795, %v750, 0
      %v802 = vsel %vm795, %v752, 0
      %v803 = vsel %vm795, %v754, 0
      %v804 = vsel %vm795, %v756, 0
      %v805 = vsel %vm795, %v758, 0
      %v806 = vsel %vm795, %v760, 0
      %v807 = vsel %vm795, %v762, 0
      %v808 = vsel %vm795, %v764, 0
      %v809 = vsel %vm795, %v766, 0
      %v810 = vsel %vm795, %v768, 0
      %v811 = vsel %vm795, %v770, 0
      %v812 = vsel %vm795, %v772, 0
      %v813 = vsel %vm795, %v774, 0
      %814 = vrot.lane.b32.xlu0 %v556, 8
      %v815 = vpop.permute.xlu0 %814
      %816 = vrot.lane.b32.xlu0 %v557, 8
      %v817 = vpop.permute.xlu0 %816
      %818 = vrot.lane.b32.xlu0 %v558, 8
      %v819 = vpop.permute.xlu0 %818
      %820 = vrot.lane.b32.xlu0 %v559, 8
      %v821 = vpop.permute.xlu0 %820
      %822 = vrot.lane.b32.xlu0 %v560, 8
      %v823 = vpop.permute.xlu0 %822
      %824 = vrot.lane.b32.xlu0 %v561, 8
      %v825 = vpop.permute.xlu0 %824
      %826 = vrot.lane.b32.xlu0 %v562, 8
      %v827 = vpop.permute.xlu0 %826
      %828 = vrot.lane.b32.xlu0 %v563, 8
      %v829 = vpop.permute.xlu0 %828
      %830 = vrot.lane.b32.xlu0 %v564, 8
      %v831 = vpop.permute.xlu0 %830
      %832 = vrot.lane.b32.xlu0 %v565, 8
      %v833 = vpop.permute.xlu0 %832
      %834 = vrot.lane.b32.xlu0 %v566, 8
      %v835 = vpop.permute.xlu0 %834
      %836 = vrot.lane.b32.xlu0 %v567, 8
      %v837 = vpop.permute.xlu0 %836
      %838 = vrot.lane.b32.xlu0 %v568, 8
      %v839 = vpop.permute.xlu0 %838
      %840 = vrot.lane.b32.xlu0 %v569, 8
      %v841 = vpop.permute.xlu0 %840
      %842 = vrot.lane.b32.xlu0 %v570, 8
      %v843 = vpop.permute.xlu0 %842
      %844 = vrot.lane.b32.xlu0 %v571, 8
      %v845 = vpop.permute.xlu0 %844
      %846 = vrot.lane.b32.xlu0 %v572, 8
      %v847 = vpop.permute.xlu0 %846
      %848 = vrot.lane.b32.xlu0 %v573, 8
      %v849 = vpop.permute.xlu0 %848
      %868 = vrot.lane.b32.xlu0 %v796, 16
      %v869 = vpop.permute.xlu0 %868
      %870 = vrot.lane.b32.xlu0 %v797, 16
      %v871 = vpop.permute.xlu0 %870
      %872 = vrot.lane.b32.xlu0 %v798, 16
      %v873 = vpop.permute.xlu0 %872
      %874 = vrot.lane.b32.xlu0 %v799, 16
      %v875 = vpop.permute.xlu0 %874
      %876 = vrot.lane.b32.xlu0 %v800, 16
      %v877 = vpop.permute.xlu0 %876
      %878 = vrot.lane.b32.xlu0 %v801, 16
      %v879 = vpop.permute.xlu0 %878
      %880 = vrot.lane.b32.xlu0 %v802, 16
      %v881 = vpop.permute.xlu0 %880
      %882 = vrot.lane.b32.xlu0 %v803, 16
      %v883 = vpop.permute.xlu0 %882
      %884 = vrot.lane.b32.xlu0 %v804, 16
      %v885 = vpop.permute.xlu0 %884
      %886 = vrot.lane.b32.xlu0 %v805, 16
      %v887 = vpop.permute.xlu0 %886
      %888 = vrot.lane.b32.xlu0 %v806, 16
      %v889 = vpop.permute.xlu0 %888
      %890 = vrot.lane.b32.xlu0 %v807, 16
      %v891 = vpop.permute.xlu0 %890
      %892 = vrot.lane.b32.xlu0 %v808, 16
      %v893 = vpop.permute.xlu0 %892
      %894 = vrot.lane.b32.xlu0 %v809, 16
      %v895 = vpop.permute.xlu0 %894
      %896 = vrot.lane.b32.xlu0 %v810, 16
      %v897 = vpop.permute.xlu0 %896
      %898 = vrot.lane.b32.xlu0 %v811, 16
      %v899 = vpop.permute.xlu0 %898
      %900 = vrot.lane.b32.xlu0 %v812, 16
      %v901 = vpop.permute.xlu0 %900
      %902 = vrot.lane.b32.xlu0 %v813, 16
      %v903 = vpop.permute.xlu0 %902
      %vm904 = vcmask 64512
      %v907 = vsel %vm904, %v721, %v815
      %v910 = vsel %vm904, %v722, %v817
      %v913 = vsel %vm904, %v723, %v819
      %v916 = vsel %vm904, %v724, %v821
      %v919 = vsel %vm904, %v725, %v823
      %v922 = vsel %vm904, %v726, %v825
      %v925 = vsel %vm904, %v727, %v827
      %v928 = vsel %vm904, %v728, %v829
      %v931 = vsel %vm904, %v729, %v831
      %v934 = vsel %vm904, %v730, %v833
      %v937 = vsel %vm904, %v731, %v835
      %v940 = vsel %vm904, %v732, %v837
      %v943 = vsel %vm904, %v733, %v839
      %v946 = vsel %vm904, %v734, %v841
      %v949 = vsel %vm904, %v735, %v843
      %v952 = vsel %vm904, %v736, %v845
      %v955 = vsel %vm904, %v737, %v847
      %v958 = vsel %vm904, %v738, %v849
      %vm959 = vcmask 130048
      %v961 = vsel %vm959, %v907, %v869
      %v963 = vsel %vm959, %v910, %v871
      %v965 = vsel %vm959, %v913, %v873
      %v967 = vsel %vm959, %v916, %v875
      %v969 = vsel %vm959, %v919, %v877
      %v971 = vsel %vm959, %v922, %v879
      %v973 = vsel %vm959, %v925, %v881
      %v975 = vsel %vm959, %v928, %v883
      %v977 = vsel %vm959, %v931, %v885
      %v979 = vsel %vm959, %v934, %v887
      %v981 = vsel %vm959, %v937, %v889
      %v983 = vsel %vm959, %v940, %v891
      %v985 = vsel %vm959, %v943, %v893
      %v987 = vsel %vm959, %v946, %v895
      %v989 = vsel %vm959, %v949, %v897
      %v991 = vsel %vm959, %v952, %v899
      %v993 = vsel %vm959, %v955, %v901
      %v995 = vsel %vm959, %v958, %v903
      %v996 = vld [vmem:[%s421] sm:$0xf]
      %v997 = vld [vmem:[%s421 + $0x4] sm:$0xf]
      %v998 = vld [vmem:[%s421 + $0x8] sm:$0xf]
      %s999 = scalar_lea.vmem %s421, 12
      %v1000 = vld [vmem:[%s999] sm:$0xf]
      %v1001 = vld [vmem:[%s999 + $0x4] sm:$0xf]
      %v1002 = vld [vmem:[%s999 + $0x8] sm:$0xf]
      %v1006 = vunpack.c.l.b16 %v1000
      %v1007 = vunpack.c.l.b16 %v1001
      %v1008 = vunpack.c.l.b16 %v1002
      %v1009 = vpack.c.b16 %v1007, %v1006
      %v1010 = vpack.c.b16 %v1008, %v1008
      %vm1012 = vcmask 195584
      %v1013 = vsel %vm1012, %v963, 0
      %v1015 = vsel %vm1012, %v965, 0
      %v1017 = vsel %vm1012, %v967, 0
      %v1019 = vsel %vm1012, %v969, 0
      %v1021 = vsel %vm1012, %v971, 0
      %v1023 = vsel %vm1012, %v973, 0
      %v1025 = vsel %vm1012, %v975, 0
      %v1027 = vsel %vm1012, %v977, 0
      %v1029 = vsel %vm1012, %v979, 0
      %v1031 = vsel %vm1012, %v981, 0
      %v1033 = vsel %vm1012, %v983, 0
      %v1035 = vsel %vm1012, %v985, 0
      %v1037 = vsel %vm1012, %v987, 0
      %v1039 = vsel %vm1012, %v989, 0
      %v1041 = vsel %vm1012, %v991, 0
      %v1043 = vsel %vm1012, %v993, 0
      %vm1045 = vcmask 1043456
      %v1047 = vsel %vm1045, %v1010, 0
      %1049 = vmatprep.subr.bf16.mxu0 0
      %1050 = vmatpush1.bf16.msra.mxu0 %v1009
      %1051 = vmatprep.subr.bf16.mxu0 0
      %1052 = vmatpush1.bf16.msra.mxu0 %v1047
      %1053 = vmatprep.subr.bf16.mxu0 0
      %1054 = vmatpush1.bf16.msra.mxu0 0
      %1055 = vmatprep.subr.bf16.mxu0 0
      %1056 = vmatpush1.bf16.msra.mxu0 0
      %1057 = vmatprep.subr.bf16.mxu0 0
      %1058 = vmatpush1.bf16.msra.mxu0 0
      %1059 = vmatprep.subr.bf16.mxu0 0
      %1060 = vmatpush1.bf16.msra.mxu0 0
      %1061 = vmatprep.subr.bf16.mxu0 0
      %1062 = vmatpush1.bf16.msra.mxu0 0
      %1063 = vmatprep.subr.bf16.mxu0 0
      %1064 = vmatpush1.bf16.msra.mxu0 0
      %1065 = vmatprep.subr.bf16.mxu0 0
      %1066 = vmatpush1.bf16.msra.mxu0 0
      %1067 = vmatprep.subr.bf16.mxu0 0
      %1068 = vmatpush1.bf16.msra.mxu0 0
      %1069 = vmatprep.subr.bf16.mxu0 0
      %1070 = vmatpush1.bf16.msra.mxu0 0
      %1071 = vmatprep.subr.bf16.mxu0 0
      %1072 = vmatpush1.bf16.msra.mxu0 0
      %1073 = vmatprep.subr.bf16.mxu0 0
      %1074 = vmatpush1.bf16.msra.mxu0 0
      %1075 = vmatprep.subr.bf16.mxu0 0
      %1076 = vmatpush1.bf16.msra.mxu0 0
      %1077 = vmatprep.subr.bf16.mxu0 0
      %1078 = vmatpush1.bf16.msra.mxu0 0
      %1079 = vmatprep.subr.bf16.mxu0 0
      %1080 = vmatpush1.bf16.msra.mxu0 0
      %1081 = vmatprep.mubr.bf16.mxu0 0
      %1082 = vmatmul.mubr.bf16.gmra.mrb[0].mxu0 %v1013
      %v1083 = vpop.f32.mrb[0].mxu0
      %v1084 = vadd.f32 0.0, %v1083
      %v1085 = vpop.f32.mrb[0].mxu0
      %v1086 = vpop.f32.mrb[0].mxu0
      %v1087 = vadd.f32 0.0, %v1086
      %v1088 = vpop.f32.mrb[0].mxu0
      %1089 = vmatprep.mubr.bf16.mxu0 0
      %1090 = vmatmul.mubr.bf16.gmra.mrb[0].mxu0 %v1015
      %v1091 = vpop.f32.mrb[0].mxu0
      %v1092 = vadd.f32 0.0, %v1091
      %v1093 = vpop.f32.mrb[0].mxu0
      %v1094 = vpop.f32.mrb[0].mxu0
      %v1095 = vadd.f32 0.0, %v1094
      %v1096 = vpop.f32.mrb[0].mxu0
      %1097 = vmatprep.mubr.bf16.mxu0 0
      %1098 = vmatmul.mubr.bf16.gmra.mrb[0].mxu0 %v1017
      %v1099 = vpop.f32.mrb[0].mxu0
      %v1100 = vadd.f32 0.0, %v1099
      %v1101 = vpop.f32.mrb[0].mxu0
      %v1102 = vpop.f32.mrb[0].mxu0
      %v1103 = vadd.f32 0.0, %v1102
      %v1104 = vpop.f32.mrb[0].mxu0
      %1105 = vmatprep.mubr.bf16.mxu0 0
      %1106 = vmatmul.mubr.bf16.gmra.mrb[0].mxu0 %v1019
      %v1107 = vpop.f32.mrb[0].mxu0
      %v1108 = vadd.f32 0.0, %v1107
      %v1109 = vpop.f32.mrb[0].mxu0
      %v1110 = vpop.f32.mrb[0].mxu0
      %v1111 = vadd.f32 0.0, %v1110
      %v1112 = vpop.f32.mrb[0].mxu0
      %1113 = vmatprep.mubr.bf16.mxu0 0
      %1114 = vmatmul.mubr.bf16.gmra.mrb[0].mxu0 %v1021
      %v1115 = vpop.f32.mrb[0].mxu0
      %v1116 = vadd.f32 0.0, %v1115
      %v1117 = vpop.f32.mrb[0].mxu0
      %v1118 = vpop.f32.mrb[0].mxu0
      %v1119 = vadd.f32 0.0, %v1118
      %v1120 = vpop.f32.mrb[0].mxu0
      %1121 = vmatprep.mubr.bf16.mxu0 0
      %1122 = vmatmul.mubr.bf16.gmra.mrb[0].mxu0 %v1023
      %v1123 = vpop.f32.mrb[0].mxu0
      %v1124 = vadd.f32 0.0, %v1123
      %v1125 = vpop.f32.mrb[0].mxu0
      %v1126 = vpop.f32.mrb[0].mxu0
      %v1127 = vadd.f32 0.0, %v1126
      %v1128 = vpop.f32.mrb[0].mxu0
      %1129 = vmatprep.mubr.bf16.mxu0 0
      %1130 = vmatmul.mubr.bf16.gmra.mrb[0].mxu0 %v1025
      %v1131 = vpop.f32.mrb[0].mxu0
      %v1132 = vadd.f32 0.0, %v1131
      %v1133 = vpop.f32.mrb[0].mxu0
      %v1134 = vpop.f32.mrb[0].mxu0
      %v1135 = vadd.f32 0.0, %v1134
      %v1136 = vpop.f32.mrb[0].mxu0
      %1137 = vmatprep.mubr.bf16.mxu0 0
      %1138 = vmatmul.mubr.bf16.gmra.mrb[0].mxu0 %v1027
      %v1139 = vpop.f32.mrb[0].mxu0
      %v1140 = vadd.f32 0.0, %v1139
      %v1141 = vpop.f32.mrb[0].mxu0
      %v1142 = vpop.f32.mrb[0].mxu0
      %v1143 = vadd.f32 0.0, %v1142
      %v1144 = vpop.f32.mrb[0].mxu0
      %1145 = vmatprep.mubr.bf16.mxu0 0
      %1146 = vmatmul.mubr.bf16.gmra.mrb[0].mxu0 %v1029
      %v1147 = vpop.f32.mrb[0].mxu0
      %v1148 = vadd.f32 0.0, %v1147
      %v1149 = vpop.f32.mrb[0].mxu0
      %v1150 = vpop.f32.mrb[0].mxu0
      %v1151 = vadd.f32 0.0, %v1150
      %v1152 = vpop.f32.mrb[0].mxu0
      %1153 = vmatprep.mubr.bf16.mxu0 0
      %1154 = vmatmul.mubr.bf16.gmra.mrb[0].mxu0 %v1031
      %v1155 = vpop.f32.mrb[0].mxu0
      %v1156 = vadd.f32 0.0, %v1155
      %v1157 = vpop.f32.mrb[0].mxu0
      %v1158 = vpop.f32.mrb[0].mxu0
      %v1159 = vadd.f32 0.0, %v1158
      %v1160 = vpop.f32.mrb[0].mxu0
      %1161 = vmatprep.mubr.bf16.mxu0 0
      %1162 = vmatmul.mubr.bf16.gmra.mrb[0].mxu0 %v1033
      %v1163 = vpop.f32.mrb[0].mxu0
      %v1164 = vadd.f32 0.0, %v1163
      %v1165 = vpop.f32.mrb[0].mxu0
      %v1166 = vpop.f32.mrb[0].mxu0
      %v1167 = vadd.f32 0.0, %v1166
      %v1168 = vpop.f32.mrb[0].mxu0
      %1169 = vmatprep.mubr.bf16.mxu0 0
      %1170 = vmatmul.mubr.bf16.gmra.mrb[0].mxu0 %v1035
      %v1171 = vpop.f32.mrb[0].mxu0
      %v1172 = vadd.f32 0.0, %v1171
      %v1173 = vpop.f32.mrb[0].mxu0
      %v1174 = vpop.f32.mrb[0].mxu0
      %v1175 = vadd.f32 0.0, %v1174
      %v1176 = vpop.f32.mrb[0].mxu0
      %1177 = vmatprep.mubr.bf16.mxu0 0
      %1178 = vmatmul.mubr.bf16.gmra.mrb[0].mxu0 %v1037
      %v1179 = vpop.f32.mrb[0].mxu0
      %v1180 = vadd.f32 0.0, %v1179
      %v1181 = vpop.f32.mrb[0].mxu0
      %v1182 = vpop.f32.mrb[0].mxu0
      %v1183 = vadd.f32 0.0, %v1182
      %v1184 = vpop.f32.mrb[0].mxu0
      %1185 = vmatprep.mubr.bf16.mxu0 0
      %1186 = vmatmul.mubr.bf16.gmra.mrb[0].mxu0 %v1039
      %v1187 = vpop.f32.mrb[0].mxu0
      %v1188 = vadd.f32 0.0, %v1187
      %v1189 = vpop.f32.mrb[0].mxu0
      %v1190 = vpop.f32.mrb[0].mxu0
      %v1191 = vadd.f32 0.0, %v1190
      %v1192 = vpop.f32.mrb[0].mxu0
      %1193 = vmatprep.mubr.bf16.mxu0 0
      %1194 = vmatmul.mubr.bf16.gmra.mrb[0].mxu0 %v1041
      %v1195 = vpop.f32.mrb[0].mxu0
      %v1196 = vadd.f32 0.0, %v1195
      %v1197 = vpop.f32.mrb[0].mxu0
      %v1198 = vpop.f32.mrb[0].mxu0
      %v1199 = vadd.f32 0.0, %v1198
      %v1200 = vpop.f32.mrb[0].mxu0
      %1201 = vmatprep.mubr.bf16.mxu0 0
      %1202 = vmatmul.mubr.bf16.gmra.mrb[0].mxu0 %v1043
      %v1203 = vpop.f32.mrb[0].mxu0
      %v1204 = vadd.f32 0.0, %v1203
      %v1205 = vpop.f32.mrb[0].mxu0
      %v1206 = vpop.f32.mrb[0].mxu0
      %v1207 = vadd.f32 0.0, %v1206
      %v1208 = vpop.f32.mrb[0].mxu0
      %1209 = vdwg.mxu0
      %v1213 = vunpack.c.l.b16 %v996
      %v1214 = vunpack.c.l.b16 %v997
      %v1215 = vunpack.c.l.b16 %v998
      %v1216 = vpack.c.b16 %v1214, %v1213
      %v1217 = vpack.c.b16 %v1215, %v1215
      %v1219 = vsel %vm1012, %v961, 0
      %v1222 = vsel %vm1045, %v1217, 0
      %1224 = vmatprep.subr.bf16.mxu0 0
      %1225 = vmatpush1.bf16.msra.mxu0 %v1216
      %1226 = vmatprep.subr.bf16.mxu0 0
      %1227 = vmatpush1.bf16.msra.mxu0 %v1222
      %1228 = vmatprep.subr.bf16.mxu0 0
      %1229 = vmatpush1.bf16.msra.mxu0 0
      %1230 = vmatprep.subr.bf16.mxu0 0
      %1231 = vmatpush1.bf16.msra.mxu0 0
      %1232 = vmatprep.subr.bf16.mxu0 0
      %1233 = vmatpush1.bf16.msra.mxu0 0
      %1234 = vmatprep.subr.bf16.mxu0 0
      %1235 = vmatpush1.bf16.msra.mxu0 0
      %1236 = vmatprep.subr.bf16.mxu0 0
      %1237 = vmatpush1.bf16.msra.mxu0 0
      %1238 = vmatprep.subr.bf16.mxu0 0
      %1239 = vmatpush1.bf16.msra.mxu0 0
      %1240 = vmatprep.subr.bf16.mxu0 0
      %1241 = vmatpush1.bf16.msra.mxu0 0
      %1242 = vmatprep.subr.bf16.mxu0 0
      %1243 = vmatpush1.bf16.msra.mxu0 0
      %1244 = vmatprep.subr.bf16.mxu0 0
      %1245 = vmatpush1.bf16.msra.mxu0 0
      %1246 = vmatprep.subr.bf16.mxu0 0
      %1247 = vmatpush1.bf16.msra.mxu0 0
      %1248 = vmatprep.subr.bf16.mxu0 0
      %1249 = vmatpush1.bf16.msra.mxu0 0
      %1250 = vmatprep.subr.bf16.mxu0 0
      %1251 = vmatpush1.bf16.msra.mxu0 0
      %1252 = vmatprep.subr.bf16.mxu0 0
      %1253 = vmatpush1.bf16.msra.mxu0 0
      %1254 = vmatprep.subr.bf16.mxu0 0
      %1255 = vmatpush1.bf16.msra.mxu0 0
      %1256 = vmatprep.mubr.bf16.mxu0 0
      %1257 = vmatmul.mubr.bf16.gmra.mrb[0].mxu0 %v1219
      %v1258 = vpop.f32.mrb[0].mxu0
      %v1259 = vadd.f32 %v1084, %v1258
      %v1260 = vpop.f32.mrb[0].mxu0
      %v1261 = vpop.f32.mrb[0].mxu0
      %v1262 = vadd.f32 %v1087, %v1261
      %v1263 = vpop.f32.mrb[0].mxu0
      %1264 = vmatprep.mubr.bf16.mxu0 0
      %1265 = vmatmul.mubr.bf16.gmra.mrb[0].mxu0 %v1013
      %v1266 = vpop.f32.mrb[0].mxu0
      %v1267 = vadd.f32 %v1092, %v1266
      %v1268 = vpop.f32.mrb[0].mxu0
      %v1269 = vpop.f32.mrb[0].mxu0
      %v1270 = vadd.f32 %v1095, %v1269
      %v1271 = vpop.f32.mrb[0].mxu0
      %1272 = vmatprep.mubr.bf16.mxu0 0
      %1273 = vmatmul.mubr.bf16.gmra.mrb[0].mxu0 %v1015
      %v1274 = vpop.f32.mrb[0].mxu0
      %v1275 = vadd.f32 %v1100, %v1274
      %v1276 = vpop.f32.mrb[0].mxu0
      %v1277 = vpop.f32.mrb[0].mxu0
      %v1278 = vadd.f32 %v1103, %v1277
      %v1279 = vpop.f32.mrb[0].mxu0
      %1280 = vmatprep.mubr.bf16.mxu0 0
      %1281 = vmatmul.mubr.bf16.gmra.mrb[0].mxu0 %v1017
      %v1282 = vpop.f32.mrb[0].mxu0
      %v1283 = vadd.f32 %v1108, %v1282
      %v1284 = vpop.f32.mrb[0].mxu0
      %v1285 = vpop.f32.mrb[0].mxu0
      %v1286 = vadd.f32 %v1111, %v1285
      %v1287 = vpop.f32.mrb[0].mxu0
      %1288 = vmatprep.mubr.bf16.mxu0 0
      %1289 = vmatmul.mubr.bf16.gmra.mrb[0].mxu0 %v1019
      %v1290 = vpop.f32.mrb[0].mxu0
      %v1291 = vadd.f32 %v1116, %v1290
      %v1292 = vpop.f32.mrb[0].mxu0
      %v1293 = vpop.f32.mrb[0].mxu0
      %v1294 = vadd.f32 %v1119, %v1293
      %v1295 = vpop.f32.mrb[0].mxu0
      %1296 = vmatprep.mubr.bf16.mxu0 0
      %1297 = vmatmul.mubr.bf16.gmra.mrb[0].mxu0 %v1021
      %v1298 = vpop.f32.mrb[0].mxu0
      %v1299 = vadd.f32 %v1124, %v1298
      %v1300 = vpop.f32.mrb[0].mxu0
      %v1301 = vpop.f32.mrb[0].mxu0
      %v1302 = vadd.f32 %v1127, %v1301
      %v1303 = vpop.f32.mrb[0].mxu0
      %1304 = vmatprep.mubr.bf16.mxu0 0
      %1305 = vmatmul.mubr.bf16.gmra.mrb[0].mxu0 %v1023
      %v1306 = vpop.f32.mrb[0].mxu0
      %v1307 = vadd.f32 %v1132, %v1306
      %v1308 = vpop.f32.mrb[0].mxu0
      %v1309 = vpop.f32.mrb[0].mxu0
      %v1310 = vadd.f32 %v1135, %v1309
      %v1311 = vpop.f32.mrb[0].mxu0
      %1312 = vmatprep.mubr.bf16.mxu0 0
      %1313 = vmatmul.mubr.bf16.gmra.mrb[0].mxu0 %v1025
      %v1314 = vpop.f32.mrb[0].mxu0
      %v1315 = vadd.f32 %v1140, %v1314
      %v1316 = vpop.f32.mrb[0].mxu0
      %v1317 = vpop.f32.mrb[0].mxu0
      %v1318 = vadd.f32 %v1143, %v1317
      %v1319 = vpop.f32.mrb[0].mxu0
      %1320 = vmatprep.mubr.bf16.mxu0 0
      %1321 = vmatmul.mubr.bf16.gmra.mrb[0].mxu0 %v1027
      %v1322 = vpop.f32.mrb[0].mxu0
      %v1323 = vadd.f32 %v1148, %v1322
      %v1324 = vpop.f32.mrb[0].mxu0
      %v1325 = vpop.f32.mrb[0].mxu0
      %v1326 = vadd.f32 %v1151, %v1325
      %v1327 = vpop.f32.mrb[0].mxu0
      %1328 = vmatprep.mubr.bf16.mxu0 0
      %1329 = vmatmul.mubr.bf16.gmra.mrb[0].mxu0 %v1029
      %v1330 = vpop.f32.mrb[0].mxu0
      %v1331 = vadd.f32 %v1156, %v1330
      %v1332 = vpop.f32.mrb[0].mxu0
      %v1333 = vpop.f32.mrb[0].mxu0
      %v1334 = vadd.f32 %v1159, %v1333
      %v1335 = vpop.f32.mrb[0].mxu0
      %1336 = vmatprep.mubr.bf16.mxu0 0
      %1337 = vmatmul.mubr.bf16.gmra.mrb[0].mxu0 %v1031
      %v1338 = vpop.f32.mrb[0].mxu0
      %v1339 = vadd.f32 %v1164, %v1338
      %v1340 = vpop.f32.mrb[0].mxu0
      %v1341 = vpop.f32.mrb[0].mxu0
      %v1342 = vadd.f32 %v1167, %v1341
      %v1343 = vpop.f32.mrb[0].mxu0
      %1344 = vmatprep.mubr.bf16.mxu0 0
      %1345 = vmatmul.mubr.bf16.gmra.mrb[0].mxu0 %v1033
      %v1346 = vpop.f32.mrb[0].mxu0
      %v1347 = vadd.f32 %v1172, %v1346
      %v1348 = vpop.f32.mrb[0].mxu0
      %v1349 = vpop.f32.mrb[0].mxu0
      %v1350 = vadd.f32 %v1175, %v1349
      %v1351 = vpop.f32.mrb[0].mxu0
      %1352 = vmatprep.mubr.bf16.mxu0 0
      %1353 = vmatmul.mubr.bf16.gmra.mrb[0].mxu0 %v1035
      %v1354 = vpop.f32.mrb[0].mxu0
      %v1355 = vadd.f32 %v1180, %v1354
      %v1356 = vpop.f32.mrb[0].mxu0
      %v1357 = vpop.f32.mrb[0].mxu0
      %v1358 = vadd.f32 %v1183, %v1357
      %v1359 = vpop.f32.mrb[0].mxu0
      %1360 = vmatprep.mubr.bf16.mxu0 0
      %1361 = vmatmul.mubr.bf16.gmra.mrb[0].mxu0 %v1037
      %v1362 = vpop.f32.mrb[0].mxu0
      %v1363 = vadd.f32 %v1188, %v1362
      %v1364 = vpop.f32.mrb[0].mxu0
      %v1365 = vpop.f32.mrb[0].mxu0
      %v1366 = vadd.f32 %v1191, %v1365
      %v1367 = vpop.f32.mrb[0].mxu0
      %1368 = vmatprep.mubr.bf16.mxu0 0
      %1369 = vmatmul.mubr.bf16.gmra.mrb[0].mxu0 %v1039
      %v1370 = vpop.f32.mrb[0].mxu0
      %v1371 = vadd.f32 %v1196, %v1370
      %v1372 = vpop.f32.mrb[0].mxu0
      %v1373 = vpop.f32.mrb[0].mxu0
      %v1374 = vadd.f32 %v1199, %v1373
      %v1375 = vpop.f32.mrb[0].mxu0
      %1376 = vmatprep.mubr.bf16.mxu0 0
      %1377 = vmatmul.mubr.bf16.gmra.mrb[0].mxu0 %v1041
      %v1378 = vpop.f32.mrb[0].mxu0
      %v1379 = vadd.f32 %v1204, %v1378
      %v1380 = vpop.f32.mrb[0].mxu0
      %v1381 = vpop.f32.mrb[0].mxu0
      %v1382 = vadd.f32 %v1207, %v1381
      %v1383 = vpop.f32.mrb[0].mxu0
      %1384 = vdwg.mxu0
      %s1385 = scalar_lea.vmem %s421, 24
      %v1386 = vld [vmem:[%s1385] sm:$0xf]
      %v1387 = vld [vmem:[%s1385 + $0x4] sm:$0xf]
      %v1388 = vld [vmem:[%s1385 + $0x8] sm:$0xf]
      %v1392 = vunpack.c.l.b16 %v1386
      %v1393 = vunpack.c.l.b16 %v1387
      %v1394 = vunpack.c.l.b16 %v1388
      %v1395 = vpack.c.b16 %v1393, %v1392
      %v1396 = vpack.c.b16 %v1394, %v1394
      %v1398 = vsel %vm1012, %v995, 0
      %v1401 = vsel %vm1045, %v1396, 0
      %1403 = vmatprep.subr.bf16.mxu0 0
      %1404 = vmatpush1.bf16.msra.mxu0 %v1395
      %1405 = vmatprep.subr.bf16.mxu0 0
      %1406 = vmatpush1.bf16.msra.mxu0 %v1401
      %1407 = vmatprep.subr.bf16.mxu0 0
      %1408 = vmatpush1.bf16.msra.mxu0 0
      %1409 = vmatprep.subr.bf16.mxu0 0
      %1410 = vmatpush1.bf16.msra.mxu0 0
      %1411 = vmatprep.subr.bf16.mxu0 0
      %1412 = vmatpush1.bf16.msra.mxu0 0
      %1413 = vmatprep.subr.bf16.mxu0 0
      %1414 = vmatpush1.bf16.msra.mxu0 0
      %1415 = vmatprep.subr.bf16.mxu0 0
      %1416 = vmatpush1.bf16.msra.mxu0 0
      %1417 = vmatprep.subr.bf16.mxu0 0
      %1418 = vmatpush1.bf16.msra.mxu0 0
      %1419 = vmatprep.subr.bf16.mxu0 0
      %1420 = vmatpush1.bf16.msra.mxu0 0
      %1421 = vmatprep.subr.bf16.mxu0 0
      %1422 = vmatpush1.bf16.msra.mxu0 0
      %1423 = vmatprep.subr.bf16.mxu0 0
      %1424 = vmatpush1.bf16.msra.mxu0 0
      %1425 = vmatprep.subr.bf16.mxu0 0
      %1426 = vmatpush1.bf16.msra.mxu0 0
      %1427 = vmatprep.subr.bf16.mxu0 0
      %1428 = vmatpush1.bf16.msra.mxu0 0
      %1429 = vmatprep.subr.bf16.mxu0 0
      %1430 = vmatpush1.bf16.msra.mxu0 0
      %1431 = vmatprep.subr.bf16.mxu0 0
      %1432 = vmatpush1.bf16.msra.mxu0 0
      %1433 = vmatprep.subr.bf16.mxu0 0
      %1434 = vmatpush1.bf16.msra.mxu0 0
      %1435 = vmatprep.mubr.bf16.mxu0 0
      %1436 = vmatmul.mubr.bf16.gmra.mrb[0].mxu0 %v1015
      %v1437 = vpop.f32.mrb[0].mxu0
      %v1438 = vadd.f32 0.0, %v1437
      %v1439 = vpop.f32.mrb[0].mxu0
      %v1440 = vpop.f32.mrb[0].mxu0
      %v1441 = vadd.f32 0.0, %v1440
      %v1442 = vpop.f32.mrb[0].mxu0
      %1443 = vmatprep.mubr.bf16.mxu0 0
      %1444 = vmatmul.mubr.bf16.gmra.mrb[0].mxu0 %v1017
      %v1445 = vpop.f32.mrb[0].mxu0
      %v1446 = vadd.f32 0.0, %v1445
      %v1447 = vpop.f32.mrb[0].mxu0
      %v1448 = vpop.f32.mrb[0].mxu0
      %v1449 = vadd.f32 0.0, %v1448
      %v1450 = vpop.f32.mrb[0].mxu0
      %1451 = vmatprep.mubr.bf16.mxu0 0
      %1452 = vmatmul.mubr.bf16.gmra.mrb[0].mxu0 %v1019
      %v1453 = vpop.f32.mrb[0].mxu0
      %v1454 = vadd.f32 0.0, %v1453
      %v1455 = vpop.f32.mrb[0].mxu0
      %v1456 = vpop.f32.mrb[0].mxu0
      %v1457 = vadd.f32 0.0, %v1456
      %v1458 = vpop.f32.mrb[0].mxu0
      %1459 = vmatprep.mubr.bf16.mxu0 0
      %1460 = vmatmul.mubr.bf16.gmra.mrb[0].mxu0 %v1021
      %v1461 = vpop.f32.mrb[0].mxu0
      %v1462 = vadd.f32 0.0, %v1461
      %v1463 = vpop.f32.mrb[0].mxu0
      %v1464 = vpop.f32.mrb[0].mxu0
      %v1465 = vadd.f32 0.0, %v1464
      %v1466 = vpop.f32.mrb[0].mxu0
      %1467 = vmatprep.mubr.bf16.mxu0 0
      %1468 = vmatmul.mubr.bf16.gmra.mrb[0].mxu0 %v1023
      %v1469 = vpop.f32.mrb[0].mxu0
      %v1470 = vadd.f32 0.0, %v1469
      %v1471 = vpop.f32.mrb[0].mxu0
      %v1472 = vpop.f32.mrb[0].mxu0
      %v1473 = vadd.f32 0.0, %v1472
      %v1474 = vpop.f32.mrb[0].mxu0
      %1475 = vmatprep.mubr.bf16.mxu0 0
      %1476 = vmatmul.mubr.bf16.gmra.mrb[0].mxu0 %v1025
      %v1477 = vpop.f32.mrb[0].mxu0
      %v1478 = vadd.f32 0.0, %v1477
      %v1479 = vpop.f32.mrb[0].mxu0
      %v1480 = vpop.f32.mrb[0].mxu0
      %v1481 = vadd.f32 0.0, %v1480
      %v1482 = vpop.f32.mrb[0].mxu0
      %1483 = vmatprep.mubr.bf16.mxu0 0
      %1484 = vmatmul.mubr.bf16.gmra.mrb[0].mxu0 %v1027
      %v1485 = vpop.f32.mrb[0].mxu0
      %v1486 = vadd.f32 0.0, %v1485
      %v1487 = vpop.f32.mrb[0].mxu0
      %v1488 = vpop.f32.mrb[0].mxu0
      %v1489 = vadd.f32 0.0, %v1488
      %v1490 = vpop.f32.mrb[0].mxu0
      %1491 = vmatprep.mubr.bf16.mxu0 0
      %1492 = vmatmul.mubr.bf16.gmra.mrb[0].mxu0 %v1029
      %v1493 = vpop.f32.mrb[0].mxu0
      %v1494 = vadd.f32 0.0, %v1493
      %v1495 = vpop.f32.mrb[0].mxu0
      %v1496 = vpop.f32.mrb[0].mxu0
      %v1497 = vadd.f32 0.0, %v1496
      %v1498 = vpop.f32.mrb[0].mxu0
      %1499 = vmatprep.mubr.bf16.mxu0 0
      %1500 = vmatmul.mubr.bf16.gmra.mrb[0].mxu0 %v1031
      %v1501 = vpop.f32.mrb[0].mxu0
      %v1502 = vadd.f32 0.0, %v1501
      %v1503 = vpop.f32.mrb[0].mxu0
      %v1504 = vpop.f32.mrb[0].mxu0
      %v1505 = vadd.f32 0.0, %v1504
      %v1506 = vpop.f32.mrb[0].mxu0
      %1507 = vmatprep.mubr.bf16.mxu0 0
      %1508 = vmatmul.mubr.bf16.gmra.mrb[0].mxu0 %v1033
      %v1509 = vpop.f32.mrb[0].mxu0
      %v1510 = vadd.f32 0.0, %v1509
      %v1511 = vpop.f32.mrb[0].mxu0
      %v1512 = vpop.f32.mrb[0].mxu0
      %v1513 = vadd.f32 0.0, %v1512
      %v1514 = vpop.f32.mrb[0].mxu0
      %1515 = vmatprep.mubr.bf16.mxu0 0
      %1516 = vmatmul.mubr.bf16.gmra.mrb[0].mxu0 %v1035
      %v1517 = vpop.f32.mrb[0].mxu0
      %v1518 = vadd.f32 0.0, %v1517
      %v1519 = vpop.f32.mrb[0].mxu0
      %v1520 = vpop.f32.mrb[0].mxu0
      %v1521 = vadd.f32 0.0, %v1520
      %v1522 = vpop.f32.mrb[0].mxu0
      %1523 = vmatprep.mubr.bf16.mxu0 0
      %1524 = vmatmul.mubr.bf16.gmra.mrb[0].mxu0 %v1037
      %v1525 = vpop.f32.mrb[0].mxu0
      %v1526 = vadd.f32 0.0, %v1525
      %v1527 = vpop.f32.mrb[0].mxu0
      %v1528 = vpop.f32.mrb[0].mxu0
      %v1529 = vadd.f32 0.0, %v1528
      %v1530 = vpop.f32.mrb[0].mxu0
      %1531 = vmatprep.mubr.bf16.mxu0 0
      %1532 = vmatmul.mubr.bf16.gmra.mrb[0].mxu0 %v1039
      %v1533 = vpop.f32.mrb[0].mxu0
      %v1534 = vadd.f32 0.0, %v1533
      %v1535 = vpop.f32.mrb[0].mxu0
      %v1536 = vpop.f32.mrb[0].mxu0
      %v1537 = vadd.f32 0.0, %v1536
      %v1538 = vpop.f32.mrb[0].mxu0
      %1539 = vmatprep.mubr.bf16.mxu0 0
      %1540 = vmatmul.mubr.bf16.gmra.mrb[0].mxu0 %v1041
      %v1541 = vpop.f32.mrb[0].mxu0
      %v1542 = vadd.f32 0.0, %v1541
      %v1543 = vpop.f32.mrb[0].mxu0
      %v1544 = vpop.f32.mrb[0].mxu0
      %v1545 = vadd.f32 0.0, %v1544
      %v1546 = vpop.f32.mrb[0].mxu0
      %1547 = vmatprep.mubr.bf16.mxu0 0
      %1548 = vmatmul.mubr.bf16.gmra.mrb[0].mxu0 %v1043
      %v1549 = vpop.f32.mrb[0].mxu0
      %v1550 = vadd.f32 0.0, %v1549
      %v1551 = vpop.f32.mrb[0].mxu0
      %v1552 = vpop.f32.mrb[0].mxu0
      %v1553 = vadd.f32 0.0, %v1552
      %v1554 = vpop.f32.mrb[0].mxu0
      %1555 = vmatprep.mubr.bf16.mxu0 0
      %1556 = vmatmul.mubr.bf16.gmra.mrb[0].mxu0 %v1398
      %v1557 = vpop.f32.mrb[0].mxu0
      %v1558 = vadd.f32 0.0, %v1557
      %v1559 = vpop.f32.mrb[0].mxu0
      %v1560 = vpop.f32.mrb[0].mxu0
      %v1561 = vadd.f32 0.0, %v1560
      %v1562 = vpop.f32.mrb[0].mxu0
      %1563 = vdwg.mxu0
      %v1564 = vadd.f32 %v1259, %v1438
      %v1565 = vadd.f32 %v1262, %v1441
      %v1566 = vadd.f32 %v1267, %v1446
      %v1567 = vadd.f32 %v1270, %v1449
      %v1568 = vadd.f32 %v1275, %v1454
      %v1569 = vadd.f32 %v1278, %v1457
      %v1570 = vadd.f32 %v1283, %v1462
      %v1571 = vadd.f32 %v1286, %v1465
      %v1572 = vadd.f32 %v1291, %v1470
      %v1573 = vadd.f32 %v1294, %v1473
      %v1574 = vadd.f32 %v1299, %v1478
      %v1575 = vadd.f32 %v1302, %v1481
      %v1576 = vadd.f32 %v1307, %v1486
      %v1577 = vadd.f32 %v1310, %v1489
      %v1578 = vadd.f32 %v1315, %v1494
      %v1579 = vadd.f32 %v1318, %v1497
      %v1580 = vadd.f32 %v1323, %v1502
      %v1581 = vadd.f32 %v1326, %v1505
      %v1582 = vadd.f32 %v1331, %v1510
      %v1583 = vadd.f32 %v1334, %v1513
      %v1584 = vadd.f32 %v1339, %v1518
      %v1585 = vadd.f32 %v1342, %v1521
      %v1586 = vadd.f32 %v1347, %v1526
      %v1587 = vadd.f32 %v1350, %v1529
      %v1588 = vadd.f32 %v1355, %v1534
      %v1589 = vadd.f32 %v1358, %v1537
      %v1590 = vadd.f32 %v1363, %v1542
      %v1591 = vadd.f32 %v1366, %v1545
      %v1592 = vadd.f32 %v1371, %v1550
      %v1593 = vadd.f32 %v1374, %v1553
      %v1594 = vadd.f32 %v1379, %v1558
      %v1595 = vadd.f32 %v1382, %v1561
      %v1596 = vld [vmem:[%s424] sm:$0x1]
      %v1598 = vlaneseq
      %v1599 = vshrl.u32 %v1598, 7
      %v1600 = vsub.s32 0, %v1599
      %v1601 = vrot.slane %v1596, %v1600
      %v1603 = vadd.f32 %v1564, %v1601
      %v1604 = vadd.f32 %v1565, %v1601
      %v1605 = vadd.f32 %v1566, %v1601
      %v1606 = vadd.f32 %v1567, %v1601
      %v1607 = vadd.f32 %v1568, %v1601
      %v1608 = vadd.f32 %v1569, %v1601
      %v1609 = vadd.f32 %v1570, %v1601
      %v1610 = vadd.f32 %v1571, %v1601
      %v1611 = vadd.f32 %v1572, %v1601
      %v1612 = vadd.f32 %v1573, %v1601
      %v1613 = vadd.f32 %v1574, %v1601
      %v1614 = vadd.f32 %v1575, %v1601
      %v1615 = vadd.f32 %v1576, %v1601
      %v1616 = vadd.f32 %v1577, %v1601
      %v1617 = vadd.f32 %v1578, %v1601
      %v1618 = vadd.f32 %v1579, %v1601
      %v1619 = vadd.f32 %v1580, %v1601
      %v1620 = vadd.f32 %v1581, %v1601
      %v1621 = vadd.f32 %v1582, %v1601
      %v1622 = vadd.f32 %v1583, %v1601
      %v1623 = vadd.f32 %v1584, %v1601
      %v1624 = vadd.f32 %v1585, %v1601
      %v1625 = vadd.f32 %v1586, %v1601
      %v1626 = vadd.f32 %v1587, %v1601
      %v1627 = vadd.f32 %v1588, %v1601
      %v1628 = vadd.f32 %v1589, %v1601
      %v1629 = vadd.f32 %v1590, %v1601
      %v1630 = vadd.f32 %v1591, %v1601
      %v1631 = vadd.f32 %v1592, %v1601
      %v1632 = vadd.f32 %v1593, %v1601
      %v1633 = vadd.f32 %v1594, %v1601
      %v1634 = vadd.f32 %v1595, %v1601
      %v1635 = vmax.f32 %v1603, 0.0
      %v1636 = vmax.f32 %v1604, 0.0
      %v1637 = vmax.f32 %v1605, 0.0
      %v1638 = vmax.f32 %v1606, 0.0
      %v1639 = vmax.f32 %v1607, 0.0
      %v1640 = vmax.f32 %v1608, 0.0
      %v1641 = vmax.f32 %v1609, 0.0
      %v1642 = vmax.f32 %v1610, 0.0
      %v1643 = vmax.f32 %v1611, 0.0
      %v1644 = vmax.f32 %v1612, 0.0
      %v1645 = vmax.f32 %v1613, 0.0
      %v1646 = vmax.f32 %v1614, 0.0
      %v1647 = vmax.f32 %v1615, 0.0
      %v1648 = vmax.f32 %v1616, 0.0
      %v1649 = vmax.f32 %v1617, 0.0
      %v1650 = vmax.f32 %v1618, 0.0
      %v1651 = vmax.f32 %v1619, 0.0
      %v1652 = vmax.f32 %v1620, 0.0
      %v1653 = vmax.f32 %v1621, 0.0
      %v1654 = vmax.f32 %v1622, 0.0
      %v1655 = vmax.f32 %v1623, 0.0
      %v1656 = vmax.f32 %v1624, 0.0
      %v1657 = vmax.f32 %v1625, 0.0
      %v1658 = vmax.f32 %v1626, 0.0
      %v1659 = vmax.f32 %v1627, 0.0
      %v1660 = vmax.f32 %v1628, 0.0
      %v1661 = vmax.f32 %v1629, 0.0
      %v1662 = vmax.f32 %v1630, 0.0
      %v1663 = vmax.f32 %v1631, 0.0
      %v1664 = vmax.f32 %v1632, 0.0
      %v1665 = vmax.f32 %v1633, 0.0
      %v1666 = vmax.f32 %v1634, 0.0
      %v1667 = vpack.c.bf16 %v1636, %v1635
      %v1668 = vpack.c.bf16 %v1638, %v1637
      %v1669 = vpack.c.bf16 %v1640, %v1639
      %v1670 = vpack.c.bf16 %v1642, %v1641
      %v1671 = vpack.c.bf16 %v1644, %v1643
      %v1672 = vpack.c.bf16 %v1646, %v1645
      %v1673 = vpack.c.bf16 %v1648, %v1647
      %v1674 = vpack.c.bf16 %v1650, %v1649
      %v1675 = vpack.c.bf16 %v1652, %v1651
      %v1676 = vpack.c.bf16 %v1654, %v1653
      %v1677 = vpack.c.bf16 %v1656, %v1655
      %v1678 = vpack.c.bf16 %v1658, %v1657
      %v1679 = vpack.c.bf16 %v1660, %v1659
      %v1680 = vpack.c.bf16 %v1662, %v1661
      %v1681 = vpack.c.bf16 %v1664, %v1663
      %v1682 = vpack.c.bf16 %v1666, %v1665
      %v1699 = vunpack.c.l.b16 %v1667
      %v1700 = vunpack.c.h.b16 %v1667
      %v1701 = vunpack.c.l.b16 %v1668
      %v1702 = vunpack.c.h.b16 %v1668
      %v1703 = vunpack.c.l.b16 %v1669
      %v1704 = vunpack.c.h.b16 %v1669
      %v1705 = vunpack.c.l.b16 %v1670
      %v1706 = vunpack.c.h.b16 %v1670
      %v1707 = vunpack.c.l.b16 %v1671
      %v1708 = vunpack.c.h.b16 %v1671
      %v1709 = vunpack.c.l.b16 %v1672
      %v1710 = vunpack.c.h.b16 %v1672
      %v1711 = vunpack.c.l.b16 %v1673
      %v1712 = vunpack.c.h.b16 %v1673
      %v1713 = vunpack.c.l.b16 %v1674
      %v1714 = vunpack.c.h.b16 %v1674
      %v1715 = vunpack.c.l.b16 %v1675
      %v1716 = vunpack.c.h.b16 %v1675
      %v1717 = vunpack.c.l.b16 %v1676
      %v1718 = vunpack.c.h.b16 %v1676
      %v1719 = vunpack.c.l.b16 %v1677
      %v1720 = vunpack.c.h.b16 %v1677
      %v1721 = vunpack.c.l.b16 %v1678
      %v1722 = vunpack.c.h.b16 %v1678
      %v1723 = vunpack.c.l.b16 %v1679
      %v1724 = vunpack.c.h.b16 %v1679
      %v1725 = vunpack.c.l.b16 %v1680
      %v1726 = vunpack.c.h.b16 %v1680
      %v1727 = vunpack.c.l.b16 %v1681
      %v1728 = vunpack.c.h.b16 %v1681
      %v1729 = vunpack.c.l.b16 %v1682
      %v1730 = vunpack.c.h.b16 %v1682
      %v1731 = vpack.c.b16 %v1699, %v1699
      %v1732 = vpack.c.b16 %v1700, %v1700
      %v1733 = vpack.c.b16 %v1701, %v1701
      %v1734 = vpack.c.b16 %v1702, %v1702
      %v1735 = vpack.c.b16 %v1703, %v1703
      %v1736 = vpack.c.b16 %v1704, %v1704
      %v1737 = vpack.c.b16 %v1705, %v1705
      %v1738 = vpack.c.b16 %v1706, %v1706
      %v1739 = vpack.c.b16 %v1707, %v1707
      %v1740 = vpack.c.b16 %v1708, %v1708
      %v1741 = vpack.c.b16 %v1709, %v1709
      %v1742 = vpack.c.b16 %v1710, %v1710
      %v1743 = vpack.c.b16 %v1711, %v1711
      %v1744 = vpack.c.b16 %v1712, %v1712
      %v1745 = vpack.c.b16 %v1713, %v1713
      %v1746 = vpack.c.b16 %v1714, %v1714
      %v1747 = vpack.c.b16 %v1715, %v1715
      %v1748 = vpack.c.b16 %v1716, %v1716
      %v1749 = vpack.c.b16 %v1717, %v1717
      %v1750 = vpack.c.b16 %v1718, %v1718
      %v1751 = vpack.c.b16 %v1719, %v1719
      %v1752 = vpack.c.b16 %v1720, %v1720
      %v1753 = vpack.c.b16 %v1721, %v1721
      %v1754 = vpack.c.b16 %v1722, %v1722
      %v1755 = vpack.c.b16 %v1723, %v1723
      %v1756 = vpack.c.b16 %v1724, %v1724
      %v1757 = vpack.c.b16 %v1725, %v1725
      %v1758 = vpack.c.b16 %v1726, %v1726
      %v1759 = vpack.c.b16 %v1727, %v1727
      %v1760 = vpack.c.b16 %v1728, %v1728
      %v1761 = vpack.c.b16 %v1729, %v1729
      %v1762 = vpack.c.b16 %v1730, %v1730
      %1795 = vst [vmem:[%s437] sm:$0xf] %v1731
      %1796 = vst [vmem:[%s437 + $0x4] sm:$0xf] %v1732
      %1797 = vst [vmem:[%s437 + $0x8] sm:$0xf] %v1733
      %1798 = vst [vmem:[%s437 + $0xc] sm:$0xf] %v1734
      %1799 = vst [vmem:[%s437 + $0x10] sm:$0xf] %v1735
      %1800 = vst [vmem:[%s437 + $0x14] sm:$0xf] %v1736
      %1801 = vst [vmem:[%s437 + $0x18] sm:$0xf] %v1737
      %1802 = vst [vmem:[%s437 + $0x1c] sm:$0xf] %v1738
      %1803 = vst [vmem:[%s437 + $0x20] sm:$0xf] %v1739
      %1804 = vst [vmem:[%s437 + $0x24] sm:$0xf] %v1740
      %1805 = vst [vmem:[%s437 + $0x28] sm:$0xf] %v1741
      %1806 = vst [vmem:[%s437 + $0x2c] sm:$0xf] %v1742
      %1807 = vst [vmem:[%s437 + $0x30] sm:$0xf] %v1743
      %1808 = vst [vmem:[%s437 + $0x34] sm:$0xf] %v1744
      %1809 = vst [vmem:[%s437 + $0x38] sm:$0xf] %v1745
      %1810 = vst [vmem:[%s437 + $0x3c] sm:$0xf] %v1746
      %1811 = vst [vmem:[%s437 + $0x40] sm:$0xf] %v1747
      %1812 = vst [vmem:[%s437 + $0x44] sm:$0xf] %v1748
      %1813 = vst [vmem:[%s437 + $0x48] sm:$0xf] %v1749
      %1814 = vst [vmem:[%s437 + $0x4c] sm:$0xf] %v1750
      %1815 = vst [vmem:[%s437 + $0x50] sm:$0xf] %v1751
      %1816 = vst [vmem:[%s437 + $0x54] sm:$0xf] %v1752
      %1817 = vst [vmem:[%s437 + $0x58] sm:$0xf] %v1753
      %1818 = vst [vmem:[%s437 + $0x5c] sm:$0xf] %v1754
      %1819 = vst [vmem:[%s437 + $0x60] sm:$0xf] %v1755
      %1820 = vst [vmem:[%s437 + $0x64] sm:$0xf] %v1756
      %1821 = vst [vmem:[%s437 + $0x68] sm:$0xf] %v1757
      %1822 = vst [vmem:[%s437 + $0x6c] sm:$0xf] %v1758
      %1823 = vst [vmem:[%s437 + $0x70] sm:$0xf] %v1759
      %1824 = vst [vmem:[%s437 + $0x74] sm:$0xf] %v1760
      %1825 = vst [vmem:[%s437 + $0x78] sm:$0xf] %v1761
      %1826 = vst [vmem:[%s437 + $0x7c] sm:$0xf] %v1762
      %s1827 = smul.u32 16, %s23
      %p1828 = scmp.lt.s32.totalorder %s21, 1
      %s1829 = scalar_select %p1828, %s21, 1
      %p1830 = scmp.lt.s32.totalorder %s1827, 15
      %s1831 = scalar_select %p1830, %s1827, 15
      %p1832 = scmp.lt.s32.totalorder %s22, 0
      %s1833 = scalar_select %p1832, %s22, 0
      %s1834 = smul.addr %s1831, 2
      %s1835 = sadd.s32 %s1833, %s1834
      %s1836 = smul.addr %s1829, 32
      %s1837 = sadd.s32 %s1835, %s1836
      %s1838 = smul.addr %s1837, 4
      %s1839 = scalar_lea.vmem %s5, %s1838
      // Predicated region
      $region41: #{_lambda_.4} parent=39 // pred_check
        %p1840 = pneg %p209
      $region42: #{_lambda_.4} parent=39 // pred_check_branch
        %1842 = sbr.rel (%p1840) target = $region44
      $region43: #{_lambda_.4} parent=39 // pred_region
        %s1843 = smul.u32 16, %s23
      $region44: #{_lambda_.4} parent=39 // pred_fallthru
        _
    $region40: #{_lambda_.4} parent=5 // pred_fallthru
      _
    %p1844 = scmp.le.s32.totalorder 2, %s11
    // Predicated region
    $region45: #{_lambda_.4} parent=5 // pred_check
      %p1845 = pneg %p1844
    $region46: #{_lambda_.4} parent=5 // pred_check_branch
      %1847 = sbr.rel (%p1845) target = $region48
    $region47: #{_lambda_.4} parent=5 // pred_region
      %s1848 = ssub.s32 %s11, 2
      // Predicated region
      $region49: #{_lambda_.4} parent=47 // pred_check
        %p1849 = pneg %p215
      $region50: #{_lambda_.4} parent=47 // pred_check_branch
        %1851 = sbr.rel (%p1849) target = $region52
      $region51: #{_lambda_.4} parent=47 // pred_region
        %s1852 = smul.u32 16, %s26
        %p1853 = scmp.lt.s32.totalorder %s24, 1
        %s1854 = scalar_select %p1853, %s24, 1
        %p1855 = scmp.lt.s32.totalorder %s1852, 15
        %s1856 = scalar_select %p1855, %s1852, 15
        %p1857 = scmp.lt.s32.totalorder %s25, 0
        %s1858 = scalar_select %p1857, %s25, 0
        %s1859 = smul.addr %s1856, 2
        %s1860 = sadd.s32 %s1858, %s1859
        %s1861 = smul.addr %s1854, 32
        %s1862 = sadd.s32 %s1860, %s1861
        %s1863 = smul.addr %s1862, 4
        %s1864 = scalar_lea.vmem %s5, %s1863
      $region52: #{_lambda_.4} parent=47 // pred_fallthru
        _
    $region48: #{_lambda_.4} parent=5 // pred_fallthru
      _
  $region6: #{_lambda_.4} parent=0 // loop_footer
    %s15 = sadd.s32 1, %s11
  $region7: #{_lambda_.4} parent=0 // loop_footer_branch
    %10 = sbr.rel target = $region3
  $region8: #{_lambda_.4} parent=0 // loop_exit
    _

</llo_original>
